<compile_context>
chip_gen: v7x
topology: tpu7x:2x2x1
jax: 0.10.0
libtpu: 0.0.40
codegen_flags: <defaults>
</compile_context>

<pallas_src>
import functools
import math

import numpy as np
import jax
import jax.numpy as jnp
from jax import lax
from jax.experimental import pallas as pl
from jax.experimental.pallas import tpu as pltpu


# ----------------------------------------------------------------------------
# Pallas kernel: one GraphConvolution layer per grid step.
#   step 0        : x_dct = xt @ dct_fold            (frames -> DCT coeffs, padding folded in)
#   every step l  : z = att_l @ (y @ W_l) * scale_l + shift_l   (bias folded into shift)
#   steps 0..L-2  : y <- tanh(z)   (+ GC_Block residual every second hidden layer)
#   step  L-1     : out = (z + x_dct) @ idct_t       (gc7 + DCT-domain residual + IDCT)
# ----------------------------------------------------------------------------
def _gcn_layer_kernel(xt_ref, dctf_ref, idctf_ref, att_ref, w_ref, s_ref, sh_ref,
                      o_ref, y_acc, res_acc, xdct_acc, *, batch):
    f32 = jnp.float32
    DEF = lax.Precision.DEFAULT      # single-pass MXU for the 40 chained GC dots
    HI = lax.Precision.HIGHEST       # keep the tiny framing transforms accurate

    l = pl.program_id(0)
    num_l = pl.num_programs(0)
    is_last = l == num_l - 1
    is_block_start = jnp.logical_and(l % 2 == 1, jnp.logical_not(is_last))
    is_block_end = jnp.logical_and(l % 2 == 0, l > 0)

    # --- first step: DCT into the resident accumulators (overlaps layer-1 weight DMA)
    @pl.when(l == 0)
    def _():
        for b in range(batch):
            xd = jnp.dot(xt_ref[b], dctf_ref[...],
                         preferred_element_type=f32, precision=HI)  # (N, H), cols>=16 zero
            xdct_acc[b] = xd
            y_acc[b] = xd
        res_acc[...] = jnp.zeros_like(res_acc)

    # --- save the GC_Block input for its residual connection
    @pl.when(is_block_start)
    def _():
        res_acc[...] = y_acc[...]

    # --- one GraphConvolution (+ folded BatchNorm/bias affine) per batch element;
    #     statically unrolled so the two independent chains interleave on MXU/VPU/EUP.
    att = att_ref[0]                 # (N, N)
    w = w_ref[0]                     # (H, H)
    s = s_ref[0]                     # (N, H)
    sh = sh_ref[0]                   # (N, H)
    z = []
    for b in range(batch):
        support = jnp.dot(y_acc[b], w, preferred_element_type=f32, precision=DEF)
        zz = jnp.dot(att, support, preferred_element_type=f32, precision=DEF)
        z.append(zz * s + sh)

    # --- hidden layers: tanh activation (plus block residual every second layer)
    @pl.when(jnp.logical_and(jnp.logical_not(is_last), jnp.logical_not(is_block_end)))
    def _():
        for b in range(batch):
            y_acc[b] = jnp.tanh(z[b])

    @pl.when(is_block_end)
    def _():
        for b in range(batch):
            y_acc[b] = jnp.tanh(z[b]) + res_acc[b]

    # --- last layer (gc7): no tanh, add the DCT-domain input, inverse DCT to frames
    @pl.when(is_last)
    def _():
        for b in range(batch):
            o_ref[b] = jnp.dot(z[b] + xdct_acc[b], idctf_ref[...],
                               preferred_element_type=f32, precision=HI)


def fused_gcn_forward(xt, fp):
    """xt: (batch, node_n, frames_padded) -> (batch, node_n, total_frames)."""
    batch, node_n, frames = xt.shape
    num_layers, _, hidden = fp["ws"].shape
    total_frames = fp["idct_t"].shape[1]
    f32 = jnp.float32

    const2 = lambda l: (0, 0)
    const3 = lambda l: (0, 0, 0)
    per_layer = lambda l: (l, 0, 0)

    return pl.pallas_call(
        functools.partial(_gcn_layer_kernel, batch=batch),
        out_shape=jax.ShapeDtypeStruct((batch, node_n, total_frames), f32),
        grid=(num_layers,),
        in_specs=[
            pl.BlockSpec((batch, node_n, frames), const3),      # xt        (resident)
            pl.BlockSpec((frames, hidden), const2),             # dct_fold  (resident)
            pl.BlockSpec((hidden, total_frames), const2),       # idct_t    (resident)
            pl.BlockSpec((1, node_n, node_n), per_layer),       # att_l     (streamed)
            pl.BlockSpec((1, hidden, hidden), per_layer),       # W_l       (streamed)
            pl.BlockSpec((1, node_n, hidden), per_layer),       # scale_l   (streamed)
            pl.BlockSpec((1, node_n, hidden), per_layer),       # shift_l   (streamed)
        ],
        out_specs=pl.BlockSpec((batch, node_n, total_frames), const3),
        scratch_shapes=[
            pltpu.VMEM((batch, node_n, hidden), f32),   # activation accumulator
            pltpu.VMEM((batch, node_n, hidden), f32),   # GC_Block residual
            pltpu.VMEM((batch, node_n, hidden), f32),   # DCT-domain input (final residual)
        ],
        # The layer axis is a strict serial dependency chain.
        # TODO(synk): on v7x (2 TensorCores) a leading "parallel" batch axis (one chain
        # per core) would roughly double throughput; kept single-core for v5e/v6e.
        # TODO(synk): for steady-state inference, reuse resident weights across many
        # inputs per pallas_call (extra grid axis over input chunks) to amortize the DMA.
        compiler_params=pltpu.CompilerParams(dimension_semantics=("arbitrary",)),
    )(xt, fp["dct_fold"], fp["idct_t"], fp["atts"], fp["ws"], fp["ss"], fp["shs"])


# ----------------------------------------------------------------------------
# One-time parameter preparation: stack/pad per-layer params, fold GC bias into the
# (eval-mode) BatchNorm affine, fold the DCT frame padding into a single matrix.
# ----------------------------------------------------------------------------
def prepare_fused_params(params, *, in_frames, total_frames):
    f32 = jnp.float32
    hidden = params["gc1"]["w"].shape[1]
    in_feat = params["gc1"]["w"].shape[0]
    node_n = params["gc1"]["att"].shape[0]
    dct_used = total_frames

    def fold_bias(gc, scale, shift):
        return shift + gc["b"][None, :] * scale

    atts, ws, ss, shs = [], [], [], []

    # layer 0: gc1 (in_feat -> hidden) + bn1 + tanh; weight zero-padded to (H, H)
    g1 = params["gc1"]
    atts.append(g1["att"])
    ws.append(jnp.zeros((hidden, hidden), f32).at[:in_feat, :].set(g1["w"]))
    ss.append(params["bn1_scale"])
    shs.append(fold_bias(g1, params["bn1_scale"], params["bn1_shift"]))

    # layers 1 .. 2*num_stage: GC_Block halves
    for blk in params["gcbs"]:
        for j in ("1", "2"):
            gc = blk["gc" + j]
            sc, sh = blk[f"bn{j}_scale"], blk[f"bn{j}_shift"]
            atts.append(gc["att"])
            ws.append(gc["w"])
            ss.append(sc)
            shs.append(fold_bias(gc, sc, sh))

    # last layer: gc7 (hidden -> in_feat), no bn / tanh; bias goes into shift, scale = 1
    g7 = params["gc7"]
    out_feat = g7["w"].shape[1]
    atts.append(g7["att"])
    ws.append(jnp.zeros((hidden, hidden), f32).at[:, :out_feat].set(g7["w"]))
    ss.append(jnp.ones((node_n, hidden), f32))
    shs.append(jnp.zeros((node_n, hidden), f32)
               .at[:, :out_feat].set(jnp.broadcast_to(g7["b"][None, :],
                                                      (node_n, out_feat))))

    fused = {
        "atts": jnp.stack(atts),   # (L, N, N)
        "ws": jnp.stack(ws),       # (L, H, H)
        "ss": jnp.stack(ss),       # (L, N, H)
        "shs": jnp.stack(shs),     # (L, N, H)
    }

    # DCT applied from the right on (N, frames) rows; the "repeat last input frame up
    # to total_frames" padding is folded in, and the matrix is zero-padded to H columns
    # so the padded feature lanes are exactly zero.  Rows >= in_frames stay zero (they
    # multiply the zero-padded frame columns of xt).
    dct_m = params["dct_m"]
    dct_fold = dct_m[:dct_used, :in_frames].T                          # (F_in, dct_used)
    tail = jnp.sum(dct_m[:dct_used, in_frames:total_frames], axis=1)   # (dct_used,)
    dct_fold = dct_fold.at[in_frames - 1, :].add(tail)
    fused["dct_fold"] = (jnp.zeros((total_frames, hidden), f32)
                         .at[:in_frames, :dct_used].set(dct_fold))

    # IDCT applied from the right on (N, H) rows whose columns >= dct_used are zero.
    idct_t = params["idct_m"][:, :dct_used].T                          # (dct_used, F_total)
    fused["idct_t"] = jnp.zeros((hidden, total_frames), f32).at[:dct_used, :].set(idct_t)
    return fused


# ----------------------------------------------------------------------------
# Forward pass (wrapper: only transpose/reshape/pad glue around the Pallas kernel)
# ----------------------------------------------------------------------------
def gcn_forward(x, fp, *, total_frames, node, dim):
    batch, in_frames = x.shape[0], x.shape[1]
    node_n = node * dim
    xt = jnp.transpose(x.reshape(batch, in_frames, node_n), (0, 2, 1))   # (B, N, F_in)
    xt = jnp.pad(xt, ((0, 0), (0, 0), (0, total_frames - in_frames)))    # zero-pad frames
    y = fused_gcn_forward(xt, fp)                                        # (B, N, F_total)
    return jnp.transpose(y, (0, 2, 1)).reshape(batch, total_frames, node, dim)


# ----------------------------------------------------------------------------
# Pure-JAX reference (HIGHEST precision) mirroring the PyTorch module layer by layer
# ----------------------------------------------------------------------------
def get_dct_matrix(N):
    dct_m = np.eye(N)
    for k in np.arange(N):
        for i in np.arange(N):
            w = np.sqrt(2 / N)
            if k == 0:
                w = np.sqrt(1 / N)
            dct_m[k, i] = w * np.cos(np.pi * (i + 1 / 2) * k / N)
    idct_m = np.linalg.inv(dct_m)
    return dct_m, idct_m


def gcn_reference(x, params, *, in_frames, total_frames, node, dim):
    HI = lax.Precision.HIGHEST
    node_n = node * dim
    dct_used = total_frames
    batch = x.shape[0]

    # DCT_Transform.forward
    xt = jnp.transpose(x, (1, 0, 2, 3)).reshape(in_frames, -1)
    if in_frames < total_frames:
        pad = jnp.tile(xt[in_frames - 1:in_frames], (total_frames - in_frames, 1))
        xt = jnp.concatenate([xt, pad], axis=0)
    x_dct = jnp.matmul(params["dct_m"][:dct_used, :], xt, precision=HI)
    x_dct = jnp.transpose(x_dct).reshape(batch, node_n, dct_used)

    def gc(h, p):
        support = jnp.matmul(h, p["w"], precision=HI)
        return jnp.einsum("nm,bmf->bnf", p["att"], support, precision=HI) + p["b"]

    def bn(h, scale, shift):
        return h * scale[None] + shift[None]

    y = jnp.tanh(bn(gc(x_dct, params["gc1"]), params["bn1_scale"], params["bn1_shift"]))
    for blk in params["gcbs"]:
        y1 = jnp.tanh(bn(gc(y, blk["gc1"]), blk["bn1_scale"], blk["bn1_shift"]))
        y2 = jnp.tanh(bn(gc(y1, blk["gc2"]), blk["bn2_scale"], blk["bn2_shift"]))
        y = y2 + y
    y = gc(y, params["gc7"]) + x_dct

    # IDCT_Transform.forward
    yt = jnp.transpose(y.reshape(-1, dct_used))
    pred = jnp.matmul(params["idct_m"][:, :dct_used], yt, precision=HI)
    pred = pred.reshape(total_frames, batch, node, dim)
    return jnp.transpose(pred, (1, 0, 2, 3))


# ----------------------------------------------------------------------------
# Deterministic parameter init (mirrors the PyTorch module's shapes / reset_parameters)
# ----------------------------------------------------------------------------
def init_gc(key, fin, fout, node_n, mul=1.0):
    stdv = 1.0 / math.sqrt(fout)
    k1, k2, k3 = jax.random.split(key, 3)
    w = jax.random.uniform(k1, (fin, fout), jnp.float32, -stdv, stdv) * mul
    att = jax.random.uniform(k2, (node_n, node_n), jnp.float32, -stdv, stdv) * mul
    b = jax.random.uniform(k3, (fout,), jnp.float32, -stdv, stdv) * mul
    return {"w": w, "att": att, "b": b}


def init_bn(key, node_n, f, eps=1e-5):
    # eval-mode BN folded into affine: scale = gamma/sqrt(var+eps), shift = beta - mean*scale
    k1, k2 = jax.random.split(key)
    gamma = jax.random.uniform(k1, (node_n * f,), jnp.float32, 0.5, 1.5)
    beta = jax.random.uniform(k2, (node_n * f,), jnp.float32, -0.1, 0.1)
    mean = jnp.zeros((node_n * f,), jnp.float32)
    var = jnp.ones((node_n * f,), jnp.float32)
    scale = gamma / jnp.sqrt(var + eps)
    shift = beta - mean * scale
    return scale.reshape(node_n, f), shift.reshape(node_n, f)


if __name__ == "__main__":
    # config: input_seq_len=10, output_seq_len=6 -> total_frames = 16 = input_feature
    in_frames, out_frames = 10, 6
    total_frames = in_frames + out_frames          # 16 (== input_feature of gc1)
    input_feature = 16
    hidden = 32                                    # motion_hidden_dim
    num_stage = 9
    node, dim = 23, 3
    node_n = node * dim                            # 69
    batch = 2

    dct_m_np, idct_m_np = get_dct_matrix(total_frames)

    key = jax.random.PRNGKey(0)
    keys = jax.random.split(key, 4 + 4 * num_stage + 1)
    ki = iter(keys)

    params = {
        "dct_m": jnp.asarray(dct_m_np, jnp.float32),
        "idct_m": jnp.asarray(idct_m_np, jnp.float32),
        "gc1": init_gc(next(ki), input_feature, hidden, node_n),
        "gc7": init_gc(next(ki), hidden, input_feature, node_n, mul=0.1),
    }
    params["bn1_scale"], params["bn1_shift"] = init_bn(next(ki), node_n, hidden)

    gcbs = []
    for _ in range(num_stage):
        blk = {
            "gc1": init_gc(next(ki), hidden, hidden, node_n),
            "gc2": init_gc(next(ki), hidden, hidden, node_n),
        }
        blk["bn1_scale"], blk["bn1_shift"] = init_bn(next(ki), node_n, hidden)
        blk["bn2_scale"], blk["bn2_shift"] = init_bn(next(ki), node_n, hidden)
        gcbs.append(blk)
    params["gcbs"] = gcbs

    x = jax.random.normal(next(ki), (batch, in_frames, node, dim), jnp.float32)

    # One-time stacking / padding / bias- and DCT-folding of the parameters.
    fused = prepare_fused_params(params, in_frames=in_frames, total_frames=total_frames)

    # TODO(synk): nn.Dropout is stochastic; implemented as eval-mode identity.
    # TODO(synk): BatchNorm1d uses running stats (eval mode) folded into an affine.
    forward = jax.jit(functools.partial(gcn_forward, total_frames=total_frames,
                                        node=node, dim=dim))

    out = jax.block_until_ready(forward(x, fused))

    ref = gcn_reference(x, params, in_frames=in_frames, total_frames=total_frames,
                        node=node, dim=dim)

    assert out.shape == (batch, total_frames, node, dim), out.shape
    assert bool(jnp.all(jnp.isfinite(out)))
    max_err = float(jnp.max(jnp.abs(out - ref)))
    assert max_err < 2e-2, f"mismatch vs reference: {max_err}"
    print("KERNEL_OK")
</pallas_src>

<mosaic_0001>
module attributes {stable_mosaic.version = 11 : i64} {
  func.func @_gcn_layer_kernel(%arg0: i32, %arg1: memref<2x69x16xf32, #tpu.memory_space<vmem>>, %arg2: memref<16x32xf32, #tpu.memory_space<vmem>>, %arg3: memref<32x16xf32, #tpu.memory_space<vmem>>, %arg4: memref<1x69x69xf32, #tpu.memory_space<vmem>>, %arg5: memref<1x32x32xf32, #tpu.memory_space<vmem>>, %arg6: memref<1x69x32xf32, #tpu.memory_space<vmem>>, %arg7: memref<1x69x32xf32, #tpu.memory_space<vmem>>, %arg8: memref<2x69x16xf32, #tpu.memory_space<vmem>>, %arg9: memref<2x69x32xf32, #tpu.memory_space<vmem>>, %arg10: memref<2x69x32xf32, #tpu.memory_space<vmem>>, %arg11: memref<2x69x32xf32, #tpu.memory_space<vmem>>) attributes {dimension_semantics = [#tpu.dimension_semantics<arbitrary>], iteration_bounds = array<i64: 20>, scalar_prefetch = 0 : i64, scratch_operands = 3 : i64, tpu.core_type = #tpu.core_type<tc>, window_params = [{pipeline_mode = #tpu.pipeline_mode<synchronous>, transform_indices = @transform_0, window_bounds = array<i64: 2, 69, 16>}, {pipeline_mode = #tpu.pipeline_mode<synchronous>, transform_indices = @transform_1, window_bounds = array<i64: 16, 32>}, {pipeline_mode = #tpu.pipeline_mode<synchronous>, transform_indices = @transform_2, window_bounds = array<i64: 32, 16>}, {transform_indices = @transform_3, window_bounds = array<i64: 1, 69, 69>}, {transform_indices = @transform_4, window_bounds = array<i64: 1, 32, 32>}, {transform_indices = @transform_5, window_bounds = array<i64: 1, 69, 32>}, {transform_indices = @transform_6, window_bounds = array<i64: 1, 69, 32>}, {pipeline_mode = #tpu.pipeline_mode<synchronous>, transform_indices = @transform_7, window_bounds = array<i64: 2, 69, 16>}]} {
    %c19_i32 = arith.constant 19 : i32
    %0 = arith.cmpi eq, %arg0, %c19_i32 : i32
    %c2_i32 = arith.constant 2 : i32
    %c0_i32 = arith.constant 0 : i32
    %1 = arith.cmpi eq, %c2_i32, %c0_i32 : i32
    %c1_i32 = arith.constant 1 : i32
    %2 = arith.select %1, %c1_i32, %c2_i32 : i32
    %3 = arith.remsi %arg0, %2 : i32
    %c0_i32_0 = arith.constant 0 : i32
    %4 = arith.cmpi ne, %3, %c0_i32_0 : i32
    %c0_i32_1 = arith.constant 0 : i32
    %5 = arith.cmpi slt, %3, %c0_i32_1 : i32
    %c0_i32_2 = arith.constant 0 : i32
    %6 = arith.cmpi slt, %2, %c0_i32_2 : i32
    %7 = arith.xori %5, %6 : i1
    %8 = arith.andi %7, %4 : i1
    %9 = arith.addi %3, %2 : i32
    %10 = arith.select %8, %9, %3 : i32
    %c1_i32_3 = arith.constant 1 : i32
    %11 = arith.cmpi eq, %10, %c1_i32_3 : i32
    %true = arith.constant true
    %12 = arith.xori %0, %true : i1
    %13 = arith.andi %11, %12 : i1
    %c2_i32_4 = arith.constant 2 : i32
    %c0_i32_5 = arith.constant 0 : i32
    %14 = arith.cmpi eq, %c2_i32_4, %c0_i32_5 : i32
    %c1_i32_6 = arith.constant 1 : i32
    %15 = arith.select %14, %c1_i32_6, %c2_i32_4 : i32
    %16 = arith.remsi %arg0, %15 : i32
    %c0_i32_7 = arith.constant 0 : i32
    %17 = arith.cmpi ne, %16, %c0_i32_7 : i32
    %c0_i32_8 = arith.constant 0 : i32
    %18 = arith.cmpi slt, %16, %c0_i32_8 : i32
    %c0_i32_9 = arith.constant 0 : i32
    %19 = arith.cmpi slt, %15, %c0_i32_9 : i32
    %20 = arith.xori %18, %19 : i1
    %21 = arith.andi %20, %17 : i1
    %22 = arith.addi %16, %15 : i32
    %23 = arith.select %21, %22, %16 : i32
    %c0_i32_10 = arith.constant 0 : i32
    %24 = arith.cmpi eq, %23, %c0_i32_10 : i32
    %c0_i32_11 = arith.constant 0 : i32
    %25 = arith.cmpi sgt, %arg0, %c0_i32_11 : i32
    %26 = arith.andi %24, %25 : i1
    %c0_i32_12 = arith.constant 0 : i32
    %27 = arith.cmpi eq, %arg0, %c0_i32_12 : i32
    %28 = arith.extui %27 : i1 to i32
    %c0_i32_13 = arith.constant 0 : i32
    %29 = arith.cmpi ne, %28, %c0_i32_13 : i32
    scf.if %29 {
      %c0_39 = arith.constant 0 : index
      %c0_40 = arith.constant 0 : index
      %c0_41 = arith.constant 0 : index
      %61 = vector.load %arg1[%c0_39, %c0_40, %c0_41] : memref<2x69x16xf32, #tpu.memory_space<vmem>>, vector<1x69x16xf32>
      %62 = vector.shape_cast %61 : vector<1x69x16xf32> to vector<69x16xf32>
      %c0_42 = arith.constant 0 : index
      %c0_43 = arith.constant 0 : index
      %63 = vector.load %arg2[%c0_42, %c0_43] : memref<16x32xf32, #tpu.memory_space<vmem>>, vector<16x32xf32>
      %cst_44 = arith.constant dense<0.000000e+00> : vector<69x32xf32>
      %64 = tpu.matmul %62, %63, %cst_44 {dimension_numbers = #tpu.dot_dimension_numbers<[1], [0], [0], [1], [0, 0, 1, 1], [], []>, precision = #tpu.contract_precision<fp32>} : vector<69x16xf32>, vector<16x32xf32>, vector<69x32xf32> -> vector<69x32xf32>
      %c0_45 = arith.constant 0 : index
      %c0_46 = arith.constant 0 : index
      %c0_47 = arith.constant 0 : index
      %65 = vector.load %arg11[%c0_45, %c0_46, %c0_47] : memref<2x69x32xf32, #tpu.memory_space<vmem>>, vector<1x69x32xf32>
      %66 = vector.shape_cast %65 : vector<1x69x32xf32> to vector<69x32xf32>
      %67 = vector.shape_cast %64 : vector<69x32xf32> to vector<1x69x32xf32>
      tpu.vector_store %arg11[%c0_45, %c0_46, %c0_47], %67 {strides = array<i32>} : memref<2x69x32xf32, #tpu.memory_space<vmem>>, vector<1x69x32xf32>,
      %c0_48 = arith.constant 0 : index
      %c0_49 = arith.constant 0 : index
      %c0_50 = arith.constant 0 : index
      %68 = vector.load %arg9[%c0_48, %c0_49, %c0_50] : memref<2x69x32xf32, #tpu.memory_space<vmem>>, vector<1x69x32xf32>
      %69 = vector.shape_cast %68 : vector<1x69x32xf32> to vector<69x32xf32>
      %70 = vector.shape_cast %64 : vector<69x32xf32> to vector<1x69x32xf32>
      tpu.vector_store %arg9[%c0_48, %c0_49, %c0_50], %70 {strides = array<i32>} : memref<2x69x32xf32, #tpu.memory_space<vmem>>, vector<1x69x32xf32>,
      %c1_51 = arith.constant 1 : index
      %c0_52 = arith.constant 0 : index
      %c0_53 = arith.constant 0 : index
      %71 = vector.load %arg1[%c1_51, %c0_52, %c0_53] : memref<2x69x16xf32, #tpu.memory_space<vmem>>, vector<1x69x16xf32>
      %72 = vector.shape_cast %71 : vector<1x69x16xf32> to vector<69x16xf32>
      %c0_54 = arith.constant 0 : index
      %c0_55 = arith.constant 0 : index
      %73 = vector.load %arg2[%c0_54, %c0_55] : memref<16x32xf32, #tpu.memory_space<vmem>>, vector<16x32xf32>
      %cst_56 = arith.constant dense<0.000000e+00> : vector<69x32xf32>
      %74 = tpu.matmul %72, %73, %cst_56 {dimension_numbers = #tpu.dot_dimension_numbers<[1], [0], [0], [1], [0, 0, 1, 1], [], []>, precision = #tpu.contract_precision<fp32>} : vector<69x16xf32>, vector<16x32xf32>, vector<69x32xf32> -> vector<69x32xf32>
      %c1_57 = arith.constant 1 : index
      %c0_58 = arith.constant 0 : index
      %c0_59 = arith.constant 0 : index
      %75 = vector.load %arg11[%c1_57, %c0_58, %c0_59] : memref<2x69x32xf32, #tpu.memory_space<vmem>>, vector<1x69x32xf32>
      %76 = vector.shape_cast %75 : vector<1x69x32xf32> to vector<69x32xf32>
      %77 = vector.shape_cast %74 : vector<69x32xf32> to vector<1x69x32xf32>
      tpu.vector_store %arg11[%c1_57, %c0_58, %c0_59], %77 {strides = array<i32>} : memref<2x69x32xf32, #tpu.memory_space<vmem>>, vector<1x69x32xf32>,
      %c1_60 = arith.constant 1 : index
      %c0_61 = arith.constant 0 : index
      %c0_62 = arith.constant 0 : index
      %78 = vector.load %arg9[%c1_60, %c0_61, %c0_62] : memref<2x69x32xf32, #tpu.memory_space<vmem>>, vector<1x69x32xf32>
      %79 = vector.shape_cast %78 : vector<1x69x32xf32> to vector<69x32xf32>
      %80 = vector.shape_cast %74 : vector<69x32xf32> to vector<1x69x32xf32>
      tpu.vector_store %arg9[%c1_60, %c0_61, %c0_62], %80 {strides = array<i32>} : memref<2x69x32xf32, #tpu.memory_space<vmem>>, vector<1x69x32xf32>,
      %cst_63 = arith.constant 0.000000e+00 : f32
      %81 = vector.broadcast %cst_63 : f32 to vector<2x69x32xf32>
      %c0_64 = arith.constant 0 : index
      %c0_65 = arith.constant 0 : index
      %c0_66 = arith.constant 0 : index
      %82 = vector.load %arg10[%c0_64, %c0_65, %c0_66] : memref<2x69x32xf32, #tpu.memory_space<vmem>>, vector<2x69x32xf32>
      tpu.vector_store %arg10[%c0_64, %c0_65, %c0_66], %81 {strides = array<i32>} : memref<2x69x32xf32, #tpu.memory_space<vmem>>, vector<2x69x32xf32>,
    } else {
    }
    %30 = arith.extui %13 : i1 to i32
    %c0_i32_14 = arith.constant 0 : i32
    %31 = arith.cmpi ne, %30, %c0_i32_14 : i32
    scf.if %31 {
      %c0_39 = arith.constant 0 : index
      %c0_40 = arith.constant 0 : index
      %c0_41 = arith.constant 0 : index
      %61 = vector.load %arg9[%c0_39, %c0_40, %c0_41] : memref<2x69x32xf32, #tpu.memory_space<vmem>>, vector<2x69x32xf32>
      %c0_42 = arith.constant 0 : index
      %c0_43 = arith.constant 0 : index
      %c0_44 = arith.constant 0 : index
      %62 = vector.load %arg10[%c0_42, %c0_43, %c0_44] : memref<2x69x32xf32, #tpu.memory_space<vmem>>, vector<2x69x32xf32>
      tpu.vector_store %arg10[%c0_42, %c0_43, %c0_44], %61 {strides = array<i32>} : memref<2x69x32xf32, #tpu.memory_space<vmem>>, vector<2x69x32xf32>,
    } else {
    }
    %c0 = arith.constant 0 : index
    %c0_15 = arith.constant 0 : index
    %c0_16 = arith.constant 0 : index
    %32 = vector.load %arg4[%c0, %c0_15, %c0_16] : memref<1x69x69xf32, #tpu.memory_space<vmem>>, vector<1x69x69xf32>
    %33 = vector.shape_cast %32 : vector<1x69x69xf32> to vector<69x69xf32>
    %c0_17 = arith.constant 0 : index
    %c0_18 = arith.constant 0 : index
    %c0_19 = arith.constant 0 : index
    %34 = vector.load %arg5[%c0_17, %c0_18, %c0_19] : memref<1x32x32xf32, #tpu.memory_space<vmem>>, vector<1x32x32xf32>
    %35 = vector.shape_cast %34 : vector<1x32x32xf32> to vector<32x32xf32>
    %c0_20 = arith.constant 0 : index
    %c0_21 = arith.constant 0 : index
    %c0_22 = arith.constant 0 : index
    %36 = vector.load %arg6[%c0_20, %c0_21, %c0_22] : memref<1x69x32xf32, #tpu.memory_space<vmem>>, vector<1x69x32xf32>
    %37 = vector.shape_cast %36 : vector<1x69x32xf32> to vector<69x32xf32>
    %c0_23 = arith.constant 0 : index
    %c0_24 = arith.constant 0 : index
    %c0_25 = arith.constant 0 : index
    %38 = vector.load %arg7[%c0_23, %c0_24, %c0_25] : memref<1x69x32xf32, #tpu.memory_space<vmem>>, vector<1x69x32xf32>
    %39 = vector.shape_cast %38 : vector<1x69x32xf32> to vector<69x32xf32>
    %c0_26 = arith.constant 0 : index
    %c0_27 = arith.constant 0 : index
    %c0_28 = arith.constant 0 : index
    %40 = vector.load %arg9[%c0_26, %c0_27, %c0_28] : memref<2x69x32xf32, #tpu.memory_space<vmem>>, vector<1x69x32xf32>
    %41 = vector.shape_cast %40 : vector<1x69x32xf32> to vector<69x32xf32>
    %cst = arith.constant dense<0.000000e+00> : vector<69x32xf32>
    %42 = tpu.matmul %41, %35, %cst {dimension_numbers = #tpu.dot_dimension_numbers<[1], [0], [0], [1], [0, 0, 1, 1], [], []>} : vector<69x32xf32>, vector<32x32xf32>, vector<69x32xf32> -> vector<69x32xf32>
    %cst_29 = arith.constant dense<0.000000e+00> : vector<69x32xf32>
    %43 = tpu.matmul %33, %42, %cst_29 {dimension_numbers = #tpu.dot_dimension_numbers<[1], [0], [0], [1], [0, 0, 1, 1], [], []>} : vector<69x69xf32>, vector<69x32xf32>, vector<69x32xf32> -> vector<69x32xf32>
    %44 = arith.mulf %43, %37 : vector<69x32xf32>
    %45 = arith.addf %44, %39 : vector<69x32xf32>
    %c1 = arith.constant 1 : index
    %c0_30 = arith.constant 0 : index
    %c0_31 = arith.constant 0 : index
    %46 = vector.load %arg9[%c1, %c0_30, %c0_31] : memref<2x69x32xf32, #tpu.memory_space<vmem>>, vector<1x69x32xf32>
    %47 = vector.shape_cast %46 : vector<1x69x32xf32> to vector<69x32xf32>
    %cst_32 = arith.constant dense<0.000000e+00> : vector<69x32xf32>
    %48 = tpu.matmul %47, %35, %cst_32 {dimension_numbers = #tpu.dot_dimension_numbers<[1], [0], [0], [1], [0, 0, 1, 1], [], []>} : vector<69x32xf32>, vector<32x32xf32>, vector<69x32xf32> -> vector<69x32xf32>
    %cst_33 = arith.constant dense<0.000000e+00> : vector<69x32xf32>
    %49 = tpu.matmul %33, %48, %cst_33 {dimension_numbers = #tpu.dot_dimension_numbers<[1], [0], [0], [1], [0, 0, 1, 1], [], []>} : vector<69x69xf32>, vector<69x32xf32>, vector<69x32xf32> -> vector<69x32xf32>
    %50 = arith.mulf %49, %37 : vector<69x32xf32>
    %51 = arith.addf %50, %39 : vector<69x32xf32>
    %true_34 = arith.constant true
    %52 = arith.xori %0, %true_34 : i1
    %true_35 = arith.constant true
    %53 = arith.xori %26, %true_35 : i1
    %54 = arith.andi %52, %53 : i1
    %55 = arith.extui %54 : i1 to i32
    %c0_i32_36 = arith.constant 0 : i32
    %56 = arith.cmpi ne, %55, %c0_i32_36 : i32
    scf.if %56 {
      %61 = math.tanh %45 : vector<69x32xf32>
      %c0_39 = arith.constant 0 : index
      %c0_40 = arith.constant 0 : index
      %c0_41 = arith.constant 0 : index
      %62 = vector.load %arg9[%c0_39, %c0_40, %c0_41] : memref<2x69x32xf32, #tpu.memory_space<vmem>>, vector<1x69x32xf32>
      %63 = vector.shape_cast %62 : vector<1x69x32xf32> to vector<69x32xf32>
      %64 = vector.shape_cast %61 : vector<69x32xf32> to vector<1x69x32xf32>
      tpu.vector_store %arg9[%c0_39, %c0_40, %c0_41], %64 {strides = array<i32>} : memref<2x69x32xf32, #tpu.memory_space<vmem>>, vector<1x69x32xf32>,
      %65 = math.tanh %51 : vector<69x32xf32>
      %c1_42 = arith.constant 1 : index
      %c0_43 = arith.constant 0 : index
      %c0_44 = arith.constant 0 : index
      %66 = vector.load %arg9[%c1_42, %c0_43, %c0_44] : memref<2x69x32xf32, #tpu.memory_space<vmem>>, vector<1x69x32xf32>
      %67 = vector.shape_cast %66 : vector<1x69x32xf32> to vector<69x32xf32>
      %68 = vector.shape_cast %65 : vector<69x32xf32> to vector<1x69x32xf32>
      tpu.vector_store %arg9[%c1_42, %c0_43, %c0_44], %68 {strides = array<i32>} : memref<2x69x32xf32, #tpu.memory_space<vmem>>, vector<1x69x32xf32>,
    } else {
    }
    %57 = arith.extui %26 : i1 to i32
    %c0_i32_37 = arith.constant 0 : i32
    %58 = arith.cmpi ne, %57, %c0_i32_37 : i32
    scf.if %58 {
      %61 = math.tanh %45 : vector<69x32xf32>
      %c0_39 = arith.constant 0 : index
      %c0_40 = arith.constant 0 : index
      %c0_41 = arith.constant 0 : index
      %62 = vector.load %arg10[%c0_39, %c0_40, %c0_41] : memref<2x69x32xf32, #tpu.memory_space<vmem>>, vector<1x69x32xf32>
      %63 = vector.shape_cast %62 : vector<1x69x32xf32> to vector<69x32xf32>
      %64 = arith.addf %61, %63 : vector<69x32xf32>
      %c0_42 = arith.constant 0 : index
      %c0_43 = arith.constant 0 : index
      %c0_44 = arith.constant 0 : index
      %65 = vector.load %arg9[%c0_42, %c0_43, %c0_44] : memref<2x69x32xf32, #tpu.memory_space<vmem>>, vector<1x69x32xf32>
      %66 = vector.shape_cast %65 : vector<1x69x32xf32> to vector<69x32xf32>
      %67 = vector.shape_cast %64 : vector<69x32xf32> to vector<1x69x32xf32>
      tpu.vector_store %arg9[%c0_42, %c0_43, %c0_44], %67 {strides = array<i32>} : memref<2x69x32xf32, #tpu.memory_space<vmem>>, vector<1x69x32xf32>,
      %68 = math.tanh %51 : vector<69x32xf32>
      %c1_45 = arith.constant 1 : index
      %c0_46 = arith.constant 0 : index
      %c0_47 = arith.constant 0 : index
      %69 = vector.load %arg10[%c1_45, %c0_46, %c0_47] : memref<2x69x32xf32, #tpu.memory_space<vmem>>, vector<1x69x32xf32>
      %70 = vector.shape_cast %69 : vector<1x69x32xf32> to vector<69x32xf32>
      %71 = arith.addf %68, %70 : vector<69x32xf32>
      %c1_48 = arith.constant 1 : index
      %c0_49 = arith.constant 0 : index
      %c0_50 = arith.constant 0 : index
      %72 = vector.load %arg9[%c1_48, %c0_49, %c0_50] : memref<2x69x32xf32, #tpu.memory_space<vmem>>, vector<1x69x32xf32>
      %73 = vector.shape_cast %72 : vector<1x69x32xf32> to vector<69x32xf32>
      %74 = vector.shape_cast %71 : vector<69x32xf32> to vector<1x69x32xf32>
      tpu.vector_store %arg9[%c1_48, %c0_49, %c0_50], %74 {strides = array<i32>} : memref<2x69x32xf32, #tpu.memory_space<vmem>>, vector<1x69x32xf32>,
    } else {
    }
    %59 = arith.extui %0 : i1 to i32
    %c0_i32_38 = arith.constant 0 : i32
    %60 = arith.cmpi ne, %59, %c0_i32_38 : i32
    scf.if %60 {
      %c0_39 = arith.constant 0 : index
      %c0_40 = arith.constant 0 : index
      %c0_41 = arith.constant 0 : index
      %61 = vector.load %arg11[%c0_39, %c0_40, %c0_41] : memref<2x69x32xf32, #tpu.memory_space<vmem>>, vector<1x69x32xf32>
      %62 = vector.shape_cast %61 : vector<1x69x32xf32> to vector<69x32xf32>
      %63 = arith.addf %45, %62 : vector<69x32xf32>
      %c0_42 = arith.constant 0 : index
      %c0_43 = arith.constant 0 : index
      %64 = vector.load %arg3[%c0_42, %c0_43] : memref<32x16xf32, #tpu.memory_space<vmem>>, vector<32x16xf32>
      %cst_44 = arith.constant dense<0.000000e+00> : vector<69x16xf32>
      %65 = tpu.matmul %63, %64, %cst_44 {dimension_numbers = #tpu.dot_dimension_numbers<[1], [0], [0], [1], [0, 0, 1, 1], [], []>, precision = #tpu.contract_precision<fp32>} : vector<69x32xf32>, vector<32x16xf32>, vector<69x16xf32> -> vector<69x16xf32>
      %c0_45 = arith.constant 0 : index
      %c0_46 = arith.constant 0 : index
      %c0_47 = arith.constant 0 : index
      %66 = vector.load %arg8[%c0_45, %c0_46, %c0_47] : memref<2x69x16xf32, #tpu.memory_space<vmem>>, vector<1x69x16xf32>
      %67 = vector.shape_cast %66 : vector<1x69x16xf32> to vector<69x16xf32>
      %68 = vector.shape_cast %65 : vector<69x16xf32> to vector<1x69x16xf32>
      tpu.vector_store %arg8[%c0_45, %c0_46, %c0_47], %68 {strides = array<i32>} : memref<2x69x16xf32, #tpu.memory_space<vmem>>, vector<1x69x16xf32>,
      %c1_48 = arith.constant 1 : index
      %c0_49 = arith.constant 0 : index
      %c0_50 = arith.constant 0 : index
      %69 = vector.load %arg11[%c1_48, %c0_49, %c0_50] : memref<2x69x32xf32, #tpu.memory_space<vmem>>, vector<1x69x32xf32>
      %70 = vector.shape_cast %69 : vector<1x69x32xf32> to vector<69x32xf32>
      %71 = arith.addf %51, %70 : vector<69x32xf32>
      %c0_51 = arith.constant 0 : index
      %c0_52 = arith.constant 0 : index
      %72 = vector.load %arg3[%c0_51, %c0_52] : memref<32x16xf32, #tpu.memory_space<vmem>>, vector<32x16xf32>
      %cst_53 = arith.constant dense<0.000000e+00> : vector<69x16xf32>
      %73 = tpu.matmul %71, %72, %cst_53 {dimension_numbers = #tpu.dot_dimension_numbers<[1], [0], [0], [1], [0, 0, 1, 1], [], []>, precision = #tpu.contract_precision<fp32>} : vector<69x32xf32>, vector<32x16xf32>, vector<69x16xf32> -> vector<69x16xf32>
      %c1_54 = arith.constant 1 : index
      %c0_55 = arith.constant 0 : index
      %c0_56 = arith.constant 0 : index
      %74 = vector.load %arg8[%c1_54, %c0_55, %c0_56] : memref<2x69x16xf32, #tpu.memory_space<vmem>>, vector<1x69x16xf32>
      %75 = vector.shape_cast %74 : vector<1x69x16xf32> to vector<69x16xf32>
      %76 = vector.shape_cast %73 : vector<69x16xf32> to vector<1x69x16xf32>
      tpu.vector_store %arg8[%c1_54, %c0_55, %c0_56], %76 {strides = array<i32>} : memref<2x69x16xf32, #tpu.memory_space<vmem>>, vector<1x69x16xf32>,
    } else {
    }
    return
  }
  func.func @transform_0(%arg0: i32) -> (i32, i32, i32) {
    %c0_i32 = arith.constant 0 : i32
    %c0_i32_0 = arith.constant 0 : i32
    %c0_i32_1 = arith.constant 0 : i32
    %c0_i32_2 = arith.constant 0 : i32
    return %c0_i32, %c0_i32_0, %c0_i32_1 : i32, i32, i32
  }
  func.func @transform_1(%arg0: i32) -> (i32, i32) {
    %c0_i32 = arith.constant 0 : i32
    %c0_i32_0 = arith.constant 0 : i32
    %c0_i32_1 = arith.constant 0 : i32
    return %c0_i32, %c0_i32_0 : i32, i32
  }
  func.func @transform_2(%arg0: i32) -> (i32, i32) {
    %c0_i32 = arith.constant 0 : i32
    %c0_i32_0 = arith.constant 0 : i32
    %c0_i32_1 = arith.constant 0 : i32
    return %c0_i32, %c0_i32_0 : i32, i32
  }
  func.func @transform_3(%arg0: i32) -> (i32, i32, i32) {
    %c0_i32 = arith.constant 0 : i32
    %c0_i32_0 = arith.constant 0 : i32
    %c0_i32_1 = arith.constant 0 : i32
    return %arg0, %c0_i32, %c0_i32_0 : i32, i32, i32
  }
  func.func @transform_4(%arg0: i32) -> (i32, i32, i32) {
    %c0_i32 = arith.constant 0 : i32
    %c0_i32_0 = arith.constant 0 : i32
    %c0_i32_1 = arith.constant 0 : i32
    return %arg0, %c0_i32, %c0_i32_0 : i32, i32, i32
  }
  func.func @transform_5(%arg0: i32) -> (i32, i32, i32) {
    %c0_i32 = arith.constant 0 : i32
    %c0_i32_0 = arith.constant 0 : i32
    %c0_i32_1 = arith.constant 0 : i32
    return %arg0, %c0_i32, %c0_i32_0 : i32, i32, i32
  }
  func.func @transform_6(%arg0: i32) -> (i32, i32, i32) {
    %c0_i32 = arith.constant 0 : i32
    %c0_i32_0 = arith.constant 0 : i32
    %c0_i32_1 = arith.constant 0 : i32
    return %arg0, %c0_i32, %c0_i32_0 : i32, i32, i32
  }
  func.func @transform_7(%arg0: i32) -> (i32, i32, i32) {
    %c0_i32 = arith.constant 0 : i32
    %c0_i32_0 = arith.constant 0 : i32
    %c0_i32_1 = arith.constant 0 : i32
    %c0_i32_2 = arith.constant 0 : i32
    return %c0_i32, %c0_i32_0, %c0_i32_1 : i32, i32, i32
  }
}

</mosaic_0001>

<llo_original>
// kernel: gcn_forward.1
$region0: #{gcn_forward.1}
  #allocation0 [shape = 'u32[]', space=smem, size = 0x4, offset = 0x4, fixed_abs, tag = 'smem constant byte address 0x4 - core index']
  #allocation1 [shape = 'u32[144,128]{1,0:T(1,128)}', space=vmem, size = 0x12000, scoped, tag = 'internal scratch']
  #allocation2 [shape = 'f32[2,69,32]{2,1,0:T(8,128)}', space=vmem, size = 0x12000, scoped, tag = 'scratch operand']
  #allocation3 [shape = 'f32[2,69,32]{2,1,0:T(8,128)}', space=vmem, size = 0x12000, scoped, tag = 'scratch operand']
  #allocation4 [shape = 'f32[2,69,32]{2,1,0:T(8,128)}', space=vmem, size = 0x12000, scoped, tag = 'scratch operand']
  %s0 = inlined_call_operand.vmem [shape: f32[2,69,16], index: 0, kind: input, shape index: {}]
  %s1 = inlined_call_operand.vmem [shape: f32[16,32], index: 1, kind: input, shape index: {}]
  %s2 = inlined_call_operand.vmem [shape: f32[32,16], index: 2, kind: input, shape index: {}]
  %s3 = inlined_call_operand.vmem [shape: f32[20,69,69], index: 3, kind: input, shape index: {}]
  %s4 = inlined_call_operand.vmem [shape: f32[20,32,32], index: 4, kind: input, shape index: {}]
  %s5 = inlined_call_operand.vmem [shape: f32[20,69,32], index: 5, kind: input, shape index: {}]
  %s6 = inlined_call_operand.vmem [shape: f32[20,69,32], index: 6, kind: input, shape index: {}]
  %s7 = inlined_call_operand.vmem [shape: f32[2,69,16], index: 7, kind: output, shape index: {}]
  %s8 = sld [smem:[#allocation0]]
  $region81: #{gcn_forward.1} parent=0
    _
  %s10 = ssub.s32 1, %s8
  %s11 = scalar_select 0, %s10, %s8
  loop: start=0, step=1, limit=22
  $region2: #{gcn_forward.1} parent=0 // loop_pre_header
    _
  $region3: #{gcn_forward.1} parent=0 // loop_header
    %s13 = sphi 0, %s17
    %p14 = scmp.ge.s32.totalorder %s13, 22
    %s21 = sphi 0, %s21
    %s23 = sphi 0, %s21
    %s24 = sphi 0, %s23
    %s38 = sphi 0, %s24
    %s42 = sphi 0, %s42
    %s44 = sphi 0, %s42
    %s45 = sphi 0, %s44
    %s59 = sphi 0, %s45
    %s63 = sphi 0, %s63
    %s65 = sphi 0, %s63
    %s66 = sphi 0, %s65
    %s80 = sphi 0, %s66
    %s86 = sphi 0, %s88
    %s89 = sphi 0, %s86
    %s90 = sphi 0, %s89
    %s106 = sphi 0, %s90
    %s112 = sphi 0, %s114
    %s115 = sphi 0, %s112
    %s116 = sphi 0, %s115
    %s132 = sphi 0, %s116
    %s138 = sphi 0, %s140
    %s141 = sphi 0, %s138
    %s142 = sphi 0, %s141
    %s158 = sphi 0, %s142
    %s164 = sphi 0, %s166
    %s167 = sphi 0, %s164
    %s168 = sphi 0, %s167
    %s184 = sphi 0, %s168
    %s188 = sphi 0, %s188
    %s190 = sphi 0, %s188
    %s191 = sphi 0, %s190
    %s205 = sphi 0, %s191
  $region4: #{gcn_forward.1} parent=0 // loop_header_branch
    %16 = sbr.rel (%p14) target = $region8
  $region5: #{gcn_forward.1} parent=0 // loop_body
    %s18 = ssub.s32 %s13, 1
    %s19 = ssub.s32 %s13, 2
    %s20 = sadd.s32 %s13, 1
    %s22 = sadd.s32 %s21, 1
    %p25 = scmp.eq.s32.totalorder %s13, 19
    %p26 = scmp.ne.s32.totalorder %s21, %s23
    %p27 = scmp.eq.s32.totalorder %s13, 0
    %p28 = por %p26, %p27
    %p29 = scmp.ne.s32.totalorder %s21, %s23
    %p30 = scmp.eq.s32.totalorder %s18, 19
    %p31 = por %p29, %p30
    %p32 = scmp.ne.s32.totalorder %s23, %s24
    %p33 = scmp.eq.s32.totalorder %s18, 0
    %p34 = por %p32, %p33
    %p35 = scmp.ne.s32.totalorder %s23, %s24
    %p36 = scmp.eq.s32.totalorder %s19, 19
    %p37 = por %p35, %p36
    %p39 = scmp.ne.s32.totalorder %s24, %s38
    %p40 = scmp.eq.s32.totalorder %s19, 0
    %p41 = por %p39, %p40
    %s43 = sadd.s32 %s42, 1
    %p46 = scmp.eq.s32.totalorder %s13, 19
    %p47 = scmp.ne.s32.totalorder %s42, %s44
    %p48 = scmp.eq.s32.totalorder %s13, 0
    %p49 = por %p47, %p48
    %p50 = scmp.ne.s32.totalorder %s42, %s44
    %p51 = scmp.eq.s32.totalorder %s18, 19
    %p52 = por %p50, %p51
    %p53 = scmp.ne.s32.totalorder %s44, %s45
    %p54 = scmp.eq.s32.totalorder %s18, 0
    %p55 = por %p53, %p54
    %p56 = scmp.ne.s32.totalorder %s44, %s45
    %p57 = scmp.eq.s32.totalorder %s19, 19
    %p58 = por %p56, %p57
    %p60 = scmp.ne.s32.totalorder %s45, %s59
    %p61 = scmp.eq.s32.totalorder %s19, 0
    %p62 = por %p60, %p61
    %s64 = sadd.s32 %s63, 1
    %p67 = scmp.eq.s32.totalorder %s13, 19
    %p68 = scmp.ne.s32.totalorder %s63, %s65
    %p69 = scmp.eq.s32.totalorder %s13, 0
    %p70 = por %p68, %p69
    %p71 = scmp.ne.s32.totalorder %s63, %s65
    %p72 = scmp.eq.s32.totalorder %s18, 19
    %p73 = por %p71, %p72
    %p74 = scmp.ne.s32.totalorder %s65, %s66
    %p75 = scmp.eq.s32.totalorder %s18, 0
    %p76 = por %p74, %p75
    %p77 = scmp.ne.s32.totalorder %s65, %s66
    %p78 = scmp.eq.s32.totalorder %s19, 19
    %p79 = por %p77, %p78
    %p81 = scmp.ne.s32.totalorder %s66, %s80
    %p82 = scmp.eq.s32.totalorder %s19, 0
    %p83 = por %p81, %p82
    %s84 = ssub.s32 %s13, %s20
    %p85 = scmp.eq.s32.totalorder %s84, 0
    %s87 = sadd.s32 %s86, 1
    %s88 = scalar_select %p85, %s86, %s87
    %p91 = pneg %p85
    %p92 = scmp.eq.s32.totalorder %s13, 19
    %p93 = por %p91, %p92
    %p94 = scmp.ne.s32.totalorder %s86, %s89
    %p95 = scmp.eq.s32.totalorder %s13, 0
    %p96 = por %p94, %p95
    %p97 = scmp.ne.s32.totalorder %s86, %s89
    %p98 = scmp.eq.s32.totalorder %s18, 19
    %p99 = por %p97, %p98
    %p100 = scmp.ne.s32.totalorder %s89, %s90
    %p101 = scmp.eq.s32.totalorder %s18, 0
    %p102 = por %p100, %p101
    %p103 = scmp.ne.s32.totalorder %s89, %s90
    %p104 = scmp.eq.s32.totalorder %s19, 19
    %p105 = por %p103, %p104
    %p107 = scmp.ne.s32.totalorder %s90, %s106
    %p108 = scmp.eq.s32.totalorder %s19, 0
    %p109 = por %p107, %p108
    %s110 = ssub.s32 %s13, %s20
    %p111 = scmp.eq.s32.totalorder %s110, 0
    %s113 = sadd.s32 %s112, 1
    %s114 = scalar_select %p111, %s112, %s113
    %p117 = pneg %p111
    %p118 = scmp.eq.s32.totalorder %s13, 19
    %p119 = por %p117, %p118
    %p120 = scmp.ne.s32.totalorder %s112, %s115
    %p121 = scmp.eq.s32.totalorder %s13, 0
    %p122 = por %p120, %p121
    %p123 = scmp.ne.s32.totalorder %s112, %s115
    %p124 = scmp.eq.s32.totalorder %s18, 19
    %p125 = por %p123, %p124
    %p126 = scmp.ne.s32.totalorder %s115, %s116
    %p127 = scmp.eq.s32.totalorder %s18, 0
    %p128 = por %p126, %p127
    %p129 = scmp.ne.s32.totalorder %s115, %s116
    %p130 = scmp.eq.s32.totalorder %s19, 19
    %p131 = por %p129, %p130
    %p133 = scmp.ne.s32.totalorder %s116, %s132
    %p134 = scmp.eq.s32.totalorder %s19, 0
    %p135 = por %p133, %p134
    %s136 = ssub.s32 %s13, %s20
    %p137 = scmp.eq.s32.totalorder %s136, 0
    %s139 = sadd.s32 %s138, 1
    %s140 = scalar_select %p137, %s138, %s139
    %p143 = pneg %p137
    %p144 = scmp.eq.s32.totalorder %s13, 19
    %p145 = por %p143, %p144
    %p146 = scmp.ne.s32.totalorder %s138, %s141
    %p147 = scmp.eq.s32.totalorder %s13, 0
    %p148 = por %p146, %p147
    %p149 = scmp.ne.s32.totalorder %s138, %s141
    %p150 = scmp.eq.s32.totalorder %s18, 19
    %p151 = por %p149, %p150
    %p152 = scmp.ne.s32.totalorder %s141, %s142
    %p153 = scmp.eq.s32.totalorder %s18, 0
    %p154 = por %p152, %p153
    %p155 = scmp.ne.s32.totalorder %s141, %s142
    %p156 = scmp.eq.s32.totalorder %s19, 19
    %p157 = por %p155, %p156
    %p159 = scmp.ne.s32.totalorder %s142, %s158
    %p160 = scmp.eq.s32.totalorder %s19, 0
    %p161 = por %p159, %p160
    %s162 = ssub.s32 %s13, %s20
    %p163 = scmp.eq.s32.totalorder %s162, 0
    %s165 = sadd.s32 %s164, 1
    %s166 = scalar_select %p163, %s164, %s165
    %p169 = pneg %p163
    %p170 = scmp.eq.s32.totalorder %s13, 19
    %p171 = por %p169, %p170
    %p172 = scmp.ne.s32.totalorder %s164, %s167
    %p173 = scmp.eq.s32.totalorder %s13, 0
    %p174 = por %p172, %p173
    %p175 = scmp.ne.s32.totalorder %s164, %s167
    %p176 = scmp.eq.s32.totalorder %s18, 19
    %p177 = por %p175, %p176
    %p178 = scmp.ne.s32.totalorder %s167, %s168
    %p179 = scmp.eq.s32.totalorder %s18, 0
    %p180 = por %p178, %p179
    %p181 = scmp.ne.s32.totalorder %s167, %s168
    %p182 = scmp.eq.s32.totalorder %s19, 19
    %p183 = por %p181, %p182
    %p185 = scmp.ne.s32.totalorder %s168, %s184
    %p186 = scmp.eq.s32.totalorder %s19, 0
    %p187 = por %p185, %p186
    %s189 = sadd.s32 %s188, 1
    %p192 = scmp.eq.s32.totalorder %s13, 19
    %p193 = scmp.ne.s32.totalorder %s188, %s190
    %p194 = scmp.eq.s32.totalorder %s13, 0
    %p195 = por %p193, %p194
    %p196 = scmp.ne.s32.totalorder %s188, %s190
    %p197 = scmp.eq.s32.totalorder %s18, 19
    %p198 = por %p196, %p197
    %p199 = scmp.ne.s32.totalorder %s190, %s191
    %p200 = scmp.eq.s32.totalorder %s18, 0
    %p201 = por %p199, %p200
    %p202 = scmp.ne.s32.totalorder %s190, %s191
    %p203 = scmp.eq.s32.totalorder %s19, 19
    %p204 = por %p202, %p203
    %p206 = scmp.ne.s32.totalorder %s191, %s205
    %p207 = scmp.eq.s32.totalorder %s19, 0
    %p208 = por %p206, %p207
    %p209 = scmp.le.s32.totalorder 1, %s13
    %p210 = scmp.lt.s32.totalorder %s13, 21
    %p211 = pnand %p209, %p210
    %p212 = pneg %p211
    // Predicated region
    $region9: #{gcn_forward.1} parent=5 // pred_check
      _
    $region10: #{gcn_forward.1} parent=5 // pred_check_branch
      %214 = sbr.rel (%p211) target = $region12
    $region11: #{gcn_forward.1} parent=5 // pred_region
      %s215 = ssub.s32 %s13, 1
      // Predicated region
      $region13: #{gcn_forward.1} parent=11 // pred_check
        %p216 = pneg %p34
      $region14: #{gcn_forward.1} parent=11 // pred_check_branch
        %218 = sbr.rel (%p216) target = $region16
      $region15: #{gcn_forward.1} parent=11 // pred_region
        _
      $region16: #{gcn_forward.1} parent=11 // pred_fallthru
        _
      // Predicated region
      $region17: #{gcn_forward.1} parent=11 // pred_check
        %p219 = pneg %p55
      $region18: #{gcn_forward.1} parent=11 // pred_check_branch
        %221 = sbr.rel (%p219) target = $region20
      $region19: #{gcn_forward.1} parent=11 // pred_region
        _
      $region20: #{gcn_forward.1} parent=11 // pred_fallthru
        _
      // Predicated region
      $region21: #{gcn_forward.1} parent=11 // pred_check
        %p222 = pneg %p76
      $region22: #{gcn_forward.1} parent=11 // pred_check_branch
        %224 = sbr.rel (%p222) target = $region24
      $region23: #{gcn_forward.1} parent=11 // pred_region
        _
      $region24: #{gcn_forward.1} parent=11 // pred_fallthru
        _
    $region12: #{gcn_forward.1} parent=5 // pred_fallthru
      _
    %p225 = scmp.lt.s32.totalorder %s13, 20
    // Predicated region
    $region25: #{gcn_forward.1} parent=5 // pred_check
      %p226 = pneg %p225
    $region26: #{gcn_forward.1} parent=5 // pred_check_branch
      %228 = sbr.rel (%p226) target = $region28
    $region27: #{gcn_forward.1} parent=5 // pred_region
      // Predicated region
      $region29: #{gcn_forward.1} parent=27 // pred_check
        %p229 = pneg %p96
      $region30: #{gcn_forward.1} parent=27 // pred_check_branch
        %231 = sbr.rel (%p229) target = $region32
      $region31: #{gcn_forward.1} parent=27 // pred_region
        %p232 = scmp.lt.s32.totalorder %s13, 19
        %s233 = scalar_select %p232, %s13, 19
        %s234 = smul.addr %s233, 9
        %s235 = smul.addr %s234, 8
        %s236 = scalar_lea.vmem %s3, %s235
      $region32: #{gcn_forward.1} parent=27 // pred_fallthru
        _
      // Predicated region
      $region33: #{gcn_forward.1} parent=27 // pred_check
        %p237 = pneg %p122
      $region34: #{gcn_forward.1} parent=27 // pred_check_branch
        %239 = sbr.rel (%p237) target = $region36
      $region35: #{gcn_forward.1} parent=27 // pred_region
        %p240 = scmp.lt.s32.totalorder %s13, 19
        %s241 = scalar_select %p240, %s13, 19
        %s242 = smul.addr %s241, 4
        %s243 = smul.addr %s242, 8
        %s244 = scalar_lea.vmem %s4, %s243
      $region36: #{gcn_forward.1} parent=27 // pred_fallthru
        _
      // Predicated region
      $region37: #{gcn_forward.1} parent=27 // pred_check
        %p245 = pneg %p148
      $region38: #{gcn_forward.1} parent=27 // pred_check_branch
        %247 = sbr.rel (%p245) target = $region40
      $region39: #{gcn_forward.1} parent=27 // pred_region
        %p248 = scmp.lt.s32.totalorder %s13, 19
        %s249 = scalar_select %p248, %s13, 19
        %s250 = smul.addr %s249, 9
        %s251 = smul.addr %s250, 8
        %s252 = scalar_lea.vmem %s5, %s251
      $region40: #{gcn_forward.1} parent=27 // pred_fallthru
        _
      // Predicated region
      $region41: #{gcn_forward.1} parent=27 // pred_check
        %p253 = pneg %p174
      $region42: #{gcn_forward.1} parent=27 // pred_check_branch
        %255 = sbr.rel (%p253) target = $region44
      $region43: #{gcn_forward.1} parent=27 // pred_region
        %p256 = scmp.lt.s32.totalorder %s13, 19
        %s257 = scalar_select %p256, %s13, 19
        %s258 = smul.addr %s257, 9
        %s259 = smul.addr %s258, 8
        %s260 = scalar_lea.vmem %s6, %s259
      $region44: #{gcn_forward.1} parent=27 // pred_fallthru
        _
    $region28: #{gcn_forward.1} parent=5 // pred_fallthru
      _
    %p261 = scmp.le.s32.totalorder 1, %s13
    %p262 = scmp.lt.s32.totalorder %s13, 21
    %p263 = pnand %p261, %p262
    %p264 = pneg %p263
    // Predicated region
    $region45: #{gcn_forward.1} parent=5 // pred_check
      _
    $region46: #{gcn_forward.1} parent=5 // pred_check_branch
      %266 = sbr.rel (%p263) target = $region48
    $region47: #{gcn_forward.1} parent=5 // pred_region
      %s267 = ssub.s32 %s13, 1
      %p268 = pneg %p34
      %p269 = pneg %p31
      %p270 = pneg %p55
      %p271 = pneg %p52
      %p272 = pneg %p76
      %p273 = pneg %p73
      %p274 = scmp.lt.s32.totalorder %s18, 19
      %s275 = scalar_select %p274, %s18, 19
      %s276 = smul.addr %s275, 9
      %s277 = smul.addr %s276, 8
      %s278 = scalar_lea.vmem %s3, %s277
      %p279 = pneg %p102
      %p280 = pneg %p99
      %p281 = scmp.lt.s32.totalorder %s18, 19
      %s282 = scalar_select %p281, %s18, 19
      %s283 = smul.addr %s282, 4
      %s284 = smul.addr %s283, 8
      %s285 = scalar_lea.vmem %s4, %s284
      %p286 = pneg %p128
      %p287 = pneg %p125
      %p288 = scmp.lt.s32.totalorder %s18, 19
      %s289 = scalar_select %p288, %s18, 19
      %s290 = smul.addr %s289, 9
      %s291 = smul.addr %s290, 8
      %s292 = scalar_lea.vmem %s5, %s291
      %p293 = pneg %p154
      %p294 = pneg %p151
      %p295 = scmp.lt.s32.totalorder %s18, 19
      %s296 = scalar_select %p295, %s18, 19
      %s297 = smul.addr %s296, 9
      %s298 = smul.addr %s297, 8
      %s299 = scalar_lea.vmem %s6, %s298
      %p300 = pneg %p180
      %p301 = pneg %p177
      %p302 = pneg %p201
      %p303 = pneg %p198
      %p304 = scmp.lt.s32.totalorder %s18, 19
      %s305 = scalar_select %p304, %s18, 19
      %s306 = smul.addr %s305, 9
      %s307 = smul.addr %s306, 8
      %s308 = scalar_lea.vmem %s3, %s307
      %p309 = scmp.lt.s32.totalorder %s18, 19
      %s310 = scalar_select %p309, %s18, 19
      %s311 = smul.addr %s310, 4
      %s312 = smul.addr %s311, 8
      %s313 = scalar_lea.vmem %s4, %s312
      %p314 = scmp.lt.s32.totalorder %s18, 19
      %s315 = scalar_select %p314, %s18, 19
      %s316 = smul.addr %s315, 9
      %s317 = smul.addr %s316, 8
      %s318 = scalar_lea.vmem %s5, %s317
      %p319 = scmp.lt.s32.totalorder %s18, 19
      %s320 = scalar_select %p319, %s18, 19
      %s321 = smul.addr %s320, 9
      %s322 = smul.addr %s321, 8
      %s323 = scalar_lea.vmem %s6, %s322
      %p324 = scmp.eq.s32.totalorder %s18, 19
      %p325 = scmp.lt.s32.totalorder %s18, 0
      %s326 = ssub.s32 0, %s18
      %s327 = scalar_select %p325, %s326, %s18
      %s328 = sand.u32 %s327, 1
      %s329 = ssub.s32 0, %s328
      %s330 = scalar_select %p325, %s329, %s328
      %p331 = scmp.ne.s32.totalorder %s330, 0
      %p332 = scmp.lt.s32.totalorder %s330, 0
      %p333 = pnand %p332, %p331
      %p334 = pneg %p333
      %s335 = sadd.s32 %s330, 2
      %s336 = scalar_select %p334, %s335, %s330
      %p337 = scmp.eq.s32.totalorder %s336, 1
      %p338 = scmp.ne.s32.totalorder %s18, 19
      %p339 = pnand %p337, %p338
      %p340 = pneg %p339
      %p341 = scmp.eq.s32.totalorder %s336, 0
      %p342 = scmp.gt.s32.totalorder %s18, 0
      %p343 = pnand %p341, %p342
      %p344 = pneg %p343
      %p345 = scmp.eq.s32.totalorder %s18, 0
      // Predicated region
      $region49: #{gcn_forward.1} parent=47 // pred_check
        %p346 = pneg %p345
      $region50: #{gcn_forward.1} parent=47 // pred_check_branch
        %348 = sbr.rel (%p346) target = $region52
      $region51: #{gcn_forward.1} parent=47 // pred_region
        %v349 = vld [vmem:[%s0] sm:$0xff]
        %v350 = vld [vmem:[%s0 + $0x8] sm:$0xff]
        %v351 = vld [vmem:[%s0 + $0x10] sm:$0xff]
        %v352 = vld [vmem:[%s0 + $0x18] sm:$0xff]
        %v353 = vld [vmem:[%s0 + $0x20] sm:$0xff]
        %v354 = vld [vmem:[%s0 + $0x28] sm:$0xff]
        %v355 = vld [vmem:[%s0 + $0x30] sm:$0xff]
        %v356 = vld [vmem:[%s0 + $0x38] sm:$0xff]
        %v357 = vld [vmem:[%s0 + $0x40] sm:$0x1f]
        %v358 = vld [vmem:[%s1] sm:$0xff]
        %v359 = vld [vmem:[%s1 + $0x8] sm:$0xff]
        %vm360 = vcmask 130048
        %v362 = vsel %vm360, %v349, 0
        %v365 = vsel %vm360, %v350, 0
        %v368 = vsel %vm360, %v351, 0
        %v371 = vsel %vm360, %v352, 0
        %v374 = vsel %vm360, %v353, 0
        %v377 = vsel %vm360, %v354, 0
        %v380 = vsel %vm360, %v355, 0
        %v383 = vsel %vm360, %v356, 0
        %v386 = vsel %vm360, %v357, 0
        %388 = vmatprep.subr.mxu0 0.0
        %v389 = vand.u32 %v358, 4294901760
        %390 = vmatpush1.msra.mxu0 %v389
        %391 = vmatprep.subr.mxu0 0.0
        %v392 = vand.u32 %v359, 4294901760
        %393 = vmatpush1.msra.mxu0 %v392
        %394 = vmatprep.subr.mxu0 0.0
        %395 = vmatpush1.msra.mxu0 0.0
        %396 = vmatprep.subr.mxu0 0.0
        %397 = vmatpush1.msra.mxu0 0.0
        %398 = vmatprep.subr.mxu0 0.0
        %399 = vmatpush1.msra.mxu0 0.0
        %400 = vmatprep.subr.mxu0 0.0
        %401 = vmatpush1.msra.mxu0 0.0
        %402 = vmatprep.subr.mxu0 0.0
        %403 = vmatpush1.msra.mxu0 0.0
        %404 = vmatprep.subr.mxu0 0.0
        %405 = vmatpush1.msra.mxu0 0.0
        %406 = vmatprep.subr.mxu0 0.0
        %407 = vmatpush1.msra.mxu0 0.0
        %408 = vmatprep.subr.mxu0 0.0
        %409 = vmatpush1.msra.mxu0 0.0
        %410 = vmatprep.subr.mxu0 0.0
        %411 = vmatpush1.msra.mxu0 0.0
        %412 = vmatprep.subr.mxu0 0.0
        %413 = vmatpush1.msra.mxu0 0.0
        %414 = vmatprep.subr.mxu0 0.0
        %415 = vmatpush1.msra.mxu0 0.0
        %416 = vmatprep.subr.mxu0 0.0
        %417 = vmatpush1.msra.mxu0 0.0
        %418 = vmatprep.subr.mxu0 0.0
        %419 = vmatpush1.msra.mxu0 0.0
        %420 = vmatprep.subr.mxu0 0.0
        %421 = vmatpush1.msra.mxu0 0.0
        %422 = vmatprep.subr.mxu0 0.0
        %423 = vmatpush1.msra.mxu0 0.0
        %424 = vmatprep.subr.mxu0 0.0
        %425 = vmatpush1.msra.mxu0 0.0
        %426 = vmatprep.subr.mxu0 0.0
        %427 = vmatpush1.msra.mxu0 0.0
        %428 = vmatprep.subr.mxu0 0.0
        %429 = vmatpush1.msra.mxu0 0.0
        %430 = vmatprep.subr.mxu0 0.0
        %431 = vmatpush1.msra.mxu0 0.0
        %432 = vmatprep.subr.mxu0 0.0
        %433 = vmatpush1.msra.mxu0 0.0
        %434 = vmatprep.subr.mxu0 0.0
        %435 = vmatpush1.msra.mxu0 0.0
        %436 = vmatprep.subr.mxu0 0.0
        %437 = vmatpush1.msra.mxu0 0.0
        %438 = vmatprep.subr.mxu0 0.0
        %439 = vmatpush1.msra.mxu0 0.0
        %440 = vmatprep.subr.mxu0 0.0
        %441 = vmatpush1.msra.mxu0 0.0
        %442 = vmatprep.subr.mxu0 0.0
        %443 = vmatpush1.msra.mxu0 0.0
        %444 = vmatprep.subr.mxu0 0.0
        %445 = vmatpush1.msra.mxu0 0.0
        %446 = vmatprep.subr.mxu0 0.0
        %447 = vmatpush1.msra.mxu0 0.0
        %448 = vmatprep.subr.mxu0 0.0
        %449 = vmatpush1.msra.mxu0 0.0
        %450 = vmatprep.subr.mxu0 0.0
        %451 = vmatpush1.msra.mxu0 0.0
        %452 = vmatprep.subr.mxu0 0.0
        %453 = vmatpush1.msra.mxu0 0.0
        %454 = vmatprep.mubr.f32.mxu0 0.0
        %v455 = vand.u32 %v362, 4294901760
        %v456 = vsub.f32 %v362, %v455
        %v457 = vand.u32 %v456, 4294901760
        %v458 = vsub.f32 %v456, %v457
        %v459 = vand.u32 %v458, 4294901760
        %460 = vmatmul.mubr.f32.gmra.mrb[0].mxu0 %v459
        %v461 = vpop.f32.mrb[0].mxu0
        %v462 = vadd.f32 0.0, %v461
        %v463 = vpop.f32.mrb[0].mxu0
        %464 = vmatprep.mubr.f32.mxu0 0.0
        %v465 = vand.u32 %v365, 4294901760
        %v466 = vsub.f32 %v365, %v465
        %v467 = vand.u32 %v466, 4294901760
        %v468 = vsub.f32 %v466, %v467
        %v469 = vand.u32 %v468, 4294901760
        %470 = vmatmul.mubr.f32.gmra.mrb[0].mxu0 %v469
        %v471 = vpop.f32.mrb[0].mxu0
        %v472 = vadd.f32 0.0, %v471
        %v473 = vpop.f32.mrb[0].mxu0
        %474 = vmatprep.mubr.f32.mxu0 0.0
        %v475 = vand.u32 %v368, 4294901760
        %v476 = vsub.f32 %v368, %v475
        %v477 = vand.u32 %v476, 4294901760
        %v478 = vsub.f32 %v476, %v477
        %v479 = vand.u32 %v478, 4294901760
        %480 = vmatmul.mubr.f32.gmra.mrb[0].mxu0 %v479
        %v481 = vpop.f32.mrb[0].mxu0
        %v482 = vadd.f32 0.0, %v481
        %v483 = vpop.f32.mrb[0].mxu0
        %484 = vmatprep.mubr.f32.mxu0 0.0
        %v485 = vand.u32 %v371, 4294901760
        %v486 = vsub.f32 %v371, %v485
        %v487 = vand.u32 %v486, 4294901760
        %v488 = vsub.f32 %v486, %v487
        %v489 = vand.u32 %v488, 4294901760
        %490 = vmatmul.mubr.f32.gmra.mrb[0].mxu0 %v489
        %v491 = vpop.f32.mrb[0].mxu0
        %v492 = vadd.f32 0.0, %v491
        %v493 = vpop.f32.mrb[0].mxu0
        %494 = vmatprep.mubr.f32.mxu0 0.0
        %v495 = vand.u32 %v374, 4294901760
        %v496 = vsub.f32 %v374, %v495
        %v497 = vand.u32 %v496, 4294901760
        %v498 = vsub.f32 %v496, %v497
        %v499 = vand.u32 %v498, 4294901760
        %500 = vmatmul.mubr.f32.gmra.mrb[0].mxu0 %v499
        %v501 = vpop.f32.mrb[0].mxu0
        %v502 = vadd.f32 0.0, %v501
        %v503 = vpop.f32.mrb[0].mxu0
        %504 = vmatprep.mubr.f32.mxu0 0.0
        %v505 = vand.u32 %v377, 4294901760
        %v506 = vsub.f32 %v377, %v505
        %v507 = vand.u32 %v506, 4294901760
        %v508 = vsub.f32 %v506, %v507
        %v509 = vand.u32 %v508, 4294901760
        %510 = vmatmul.mubr.f32.gmra.mrb[0].mxu0 %v509
        %v511 = vpop.f32.mrb[0].mxu0
        %v512 = vadd.f32 0.0, %v511
        %v513 = vpop.f32.mrb[0].mxu0
        %514 = vmatprep.mubr.f32.mxu0 0.0
        %v515 = vand.u32 %v380, 4294901760
        %v516 = vsub.f32 %v380, %v515
        %v517 = vand.u32 %v516, 4294901760
        %v518 = vsub.f32 %v516, %v517
        %v519 = vand.u32 %v518, 4294901760
        %520 = vmatmul.mubr.f32.gmra.mrb[0].mxu0 %v519
        %v521 = vpop.f32.mrb[0].mxu0
        %v522 = vadd.f32 0.0, %v521
        %v523 = vpop.f32.mrb[0].mxu0
        %524 = vmatprep.mubr.f32.mxu0 0.0
        %v525 = vand.u32 %v383, 4294901760
        %v526 = vsub.f32 %v383, %v525
        %v527 = vand.u32 %v526, 4294901760
        %v528 = vsub.f32 %v526, %v527
        %v529 = vand.u32 %v528, 4294901760
        %530 = vmatmul.mubr.f32.gmra.mrb[0].mxu0 %v529
        %v531 = vpop.f32.mrb[0].mxu0
        %v532 = vadd.f32 0.0, %v531
        %v533 = vpop.f32.mrb[0].mxu0
        %534 = vmatprep.mubr.f32.mxu0 0.0
        %v535 = vand.u32 %v386, 4294901760
        %v536 = vsub.f32 %v386, %v535
        %v537 = vand.u32 %v536, 4294901760
        %v538 = vsub.f32 %v536, %v537
        %v539 = vand.u32 %v538, 4294901760
        %540 = vmatmul.mubr.f32.gmra.mrb[0].mxu0 %v539
        %v541 = vpop.f32.mrb[0].mxu0
        %v542 = vadd.f32 0.0, %v541
        %v543 = vpop.f32.mrb[0].mxu0
        %544 = vdwg.mxu0
        %545 = vmatprep.subr.mxu0 0.0
        %v546 = vand.u32 %v358, 4294901760
        %v547 = vsub.f32 %v358, %v546
        %v548 = vand.u32 %v547, 4294901760
        %v549 = vsub.f32 %v547, %v548
        %v550 = vand.u32 %v549, 4294901760
        %551 = vmatpush1.msra.mxu0 %v550
        %552 = vmatprep.subr.mxu0 0.0
        %v553 = vand.u32 %v359, 4294901760
        %v554 = vsub.f32 %v359, %v553
        %v555 = vand.u32 %v554, 4294901760
        %v556 = vsub.f32 %v554, %v555
        %v557 = vand.u32 %v556, 4294901760
        %558 = vmatpush1.msra.mxu0 %v557
        %559 = vmatprep.subr.mxu0 0.0
        %560 = vmatpush1.msra.mxu0 0.0
        %561 = vmatprep.subr.mxu0 0.0
        %562 = vmatpush1.msra.mxu0 0.0
        %563 = vmatprep.subr.mxu0 0.0
        %564 = vmatpush1.msra.mxu0 0.0
        %565 = vmatprep.subr.mxu0 0.0
        %566 = vmatpush1.msra.mxu0 0.0
        %567 = vmatprep.subr.mxu0 0.0
        %568 = vmatpush1.msra.mxu0 0.0
        %569 = vmatprep.subr.mxu0 0.0
        %570 = vmatpush1.msra.mxu0 0.0
        %571 = vmatprep.subr.mxu0 0.0
        %572 = vmatpush1.msra.mxu0 0.0
        %573 = vmatprep.subr.mxu0 0.0
        %574 = vmatpush1.msra.mxu0 0.0
        %575 = vmatprep.subr.mxu0 0.0
        %576 = vmatpush1.msra.mxu0 0.0
        %577 = vmatprep.subr.mxu0 0.0
        %578 = vmatpush1.msra.mxu0 0.0
        %579 = vmatprep.subr.mxu0 0.0
        %580 = vmatpush1.msra.mxu0 0.0
        %581 = vmatprep.subr.mxu0 0.0
        %582 = vmatpush1.msra.mxu0 0.0
        %583 = vmatprep.subr.mxu0 0.0
        %584 = vmatpush1.msra.mxu0 0.0
        %585 = vmatprep.subr.mxu0 0.0
        %586 = vmatpush1.msra.mxu0 0.0
        %587 = vmatprep.subr.mxu0 0.0
        %588 = vmatpush1.msra.mxu0 0.0
        %589 = vmatprep.subr.mxu0 0.0
        %590 = vmatpush1.msra.mxu0 0.0
        %591 = vmatprep.subr.mxu0 0.0
        %592 = vmatpush1.msra.mxu0 0.0
        %593 = vmatprep.subr.mxu0 0.0
        %594 = vmatpush1.msra.mxu0 0.0
        %595 = vmatprep.subr.mxu0 0.0
        %596 = vmatpush1.msra.mxu0 0.0
        %597 = vmatprep.subr.mxu0 0.0
        %598 = vmatpush1.msra.mxu0 0.0
        %599 = vmatprep.subr.mxu0 0.0
        %600 = vmatpush1.msra.mxu0 0.0
        %601 = vmatprep.subr.mxu0 0.0
        %602 = vmatpush1.msra.mxu0 0.0
        %603 = vmatprep.subr.mxu0 0.0
        %604 = vmatpush1.msra.mxu0 0.0
        %605 = vmatprep.subr.mxu0 0.0
        %606 = vmatpush1.msra.mxu0 0.0
        %607 = vmatprep.subr.mxu0 0.0
        %608 = vmatpush1.msra.mxu0 0.0
        %609 = vmatprep.subr.mxu0 0.0
        %610 = vmatpush1.msra.mxu0 0.0
        %611 = vmatprep.subr.mxu0 0.0
        %612 = vmatpush1.msra.mxu0 0.0
        %613 = vmatprep.subr.mxu0 0.0
        %614 = vmatpush1.msra.mxu0 0.0
        %615 = vmatprep.subr.mxu0 0.0
        %616 = vmatpush1.msra.mxu0 0.0
        %617 = vmatprep.subr.mxu0 0.0
        %618 = vmatpush1.msra.mxu0 0.0
        %619 = vmatprep.mubr.f32.mxu0 0.0
        %v620 = vand.u32 %v362, 4294901760
        %621 = vmatmul.mubr.f32.gmra.mrb[0].mxu0 %v620
        %v622 = vpop.f32.mrb[0].mxu0
        %v623 = vadd.f32 %v462, %v622
        %v624 = vpop.f32.mrb[0].mxu0
        %625 = vmatprep.mubr.f32.mxu0 0.0
        %v626 = vand.u32 %v365, 4294901760
        %627 = vmatmul.mubr.f32.gmra.mrb[0].mxu0 %v626
        %v628 = vpop.f32.mrb[0].mxu0
        %v629 = vadd.f32 %v472, %v628
        %v630 = vpop.f32.mrb[0].mxu0
        %631 = vmatprep.mubr.f32.mxu0 0.0
        %v632 = vand.u32 %v368, 4294901760
        %633 = vmatmul.mubr.f32.gmra.mrb[0].mxu0 %v632
        %v634 = vpop.f32.mrb[0].mxu0
        %v635 = vadd.f32 %v482, %v634
        %v636 = vpop.f32.mrb[0].mxu0
        %637 = vmatprep.mubr.f32.mxu0 0.0
        %v638 = vand.u32 %v371, 4294901760
        %639 = vmatmul.mubr.f32.gmra.mrb[0].mxu0 %v638
        %v640 = vpop.f32.mrb[0].mxu0
        %v641 = vadd.f32 %v492, %v640
        %v642 = vpop.f32.mrb[0].mxu0
        %643 = vmatprep.mubr.f32.mxu0 0.0
        %v644 = vand.u32 %v374, 4294901760
        %645 = vmatmul.mubr.f32.gmra.mrb[0].mxu0 %v644
        %v646 = vpop.f32.mrb[0].mxu0
        %v647 = vadd.f32 %v502, %v646
        %v648 = vpop.f32.mrb[0].mxu0
        %649 = vmatprep.mubr.f32.mxu0 0.0
        %v650 = vand.u32 %v377, 4294901760
        %651 = vmatmul.mubr.f32.gmra.mrb[0].mxu0 %v650
        %v652 = vpop.f32.mrb[0].mxu0
        %v653 = vadd.f32 %v512, %v652
        %v654 = vpop.f32.mrb[0].mxu0
        %655 = vmatprep.mubr.f32.mxu0 0.0
        %v656 = vand.u32 %v380, 4294901760
        %657 = vmatmul.mubr.f32.gmra.mrb[0].mxu0 %v656
        %v658 = vpop.f32.mrb[0].mxu0
        %v659 = vadd.f32 %v522, %v658
        %v660 = vpop.f32.mrb[0].mxu0
        %661 = vmatprep.mubr.f32.mxu0 0.0
        %v662 = vand.u32 %v383, 4294901760
        %663 = vmatmul.mubr.f32.gmra.mrb[0].mxu0 %v662
        %v664 = vpop.f32.mrb[0].mxu0
        %v665 = vadd.f32 %v532, %v664
        %v666 = vpop.f32.mrb[0].mxu0
        %667 = vmatprep.mubr.f32.mxu0 0.0
        %v668 = vand.u32 %v386, 4294901760
        %669 = vmatmul.mubr.f32.gmra.mrb[0].mxu0 %v668
        %v670 = vpop.f32.mrb[0].mxu0
        %v671 = vadd.f32 %v542, %v670
        %v672 = vpop.f32.mrb[0].mxu0
        %673 = vdwg.mxu0
        %674 = vmatprep.subr.mxu0 0.0
        %v675 = vand.u32 %v358, 4294901760
        %v676 = vsub.f32 %v358, %v675
        %677 = vmatpush1.msra.mxu0 %v676
        %678 = vmatprep.subr.mxu0 0.0
        %v679 = vand.u32 %v359, 4294901760
        %v680 = vsub.f32 %v359, %v679
        %681 = vmatpush1.msra.mxu0 %v680
        %682 = vmatprep.subr.mxu0 0.0
        %683 = vmatpush1.msra.mxu0 0.0
        %684 = vmatprep.subr.mxu0 0.0
        %685 = vmatpush1.msra.mxu0 0.0
        %686 = vmatprep.subr.mxu0 0.0
        %687 = vmatpush1.msra.mxu0 0.0
        %688 = vmatprep.subr.mxu0 0.0
        %689 = vmatpush1.msra.mxu0 0.0
        %690 = vmatprep.subr.mxu0 0.0
        %691 = vmatpush1.msra.mxu0 0.0
        %692 = vmatprep.subr.mxu0 0.0
        %693 = vmatpush1.msra.mxu0 0.0
        %694 = vmatprep.subr.mxu0 0.0
        %695 = vmatpush1.msra.mxu0 0.0
        %696 = vmatprep.subr.mxu0 0.0
        %697 = vmatpush1.msra.mxu0 0.0
        %698 = vmatprep.subr.mxu0 0.0
        %699 = vmatpush1.msra.mxu0 0.0
        %700 = vmatprep.subr.mxu0 0.0
        %701 = vmatpush1.msra.mxu0 0.0
        %702 = vmatprep.subr.mxu0 0.0
        %703 = vmatpush1.msra.mxu0 0.0
        %704 = vmatprep.subr.mxu0 0.0
        %705 = vmatpush1.msra.mxu0 0.0
        %706 = vmatprep.subr.mxu0 0.0
        %707 = vmatpush1.msra.mxu0 0.0
        %708 = vmatprep.subr.mxu0 0.0
        %709 = vmatpush1.msra.mxu0 0.0
        %710 = vmatprep.subr.mxu0 0.0
        %711 = vmatpush1.msra.mxu0 0.0
        %712 = vmatprep.subr.mxu0 0.0
        %713 = vmatpush1.msra.mxu0 0.0
        %714 = vmatprep.subr.mxu0 0.0
        %715 = vmatpush1.msra.mxu0 0.0
        %716 = vmatprep.subr.mxu0 0.0
        %717 = vmatpush1.msra.mxu0 0.0
        %718 = vmatprep.subr.mxu0 0.0
        %719 = vmatpush1.msra.mxu0 0.0
        %720 = vmatprep.subr.mxu0 0.0
        %721 = vmatpush1.msra.mxu0 0.0
        %722 = vmatprep.subr.mxu0 0.0
        %723 = vmatpush1.msra.mxu0 0.0
        %724 = vmatprep.subr.mxu0 0.0
        %725 = vmatpush1.msra.mxu0 0.0
        %726 = vmatprep.subr.mxu0 0.0
        %727 = vmatpush1.msra.mxu0 0.0
        %728 = vmatprep.subr.mxu0 0.0
        %729 = vmatpush1.msra.mxu0 0.0
        %730 = vmatprep.subr.mxu0 0.0
        %731 = vmatpush1.msra.mxu0 0.0
        %732 = vmatprep.subr.mxu0 0.0
        %733 = vmatpush1.msra.mxu0 0.0
        %734 = vmatprep.subr.mxu0 0.0
        %735 = vmatpush1.msra.mxu0 0.0
        %736 = vmatprep.subr.mxu0 0.0
        %737 = vmatpush1.msra.mxu0 0.0
        %738 = vmatprep.subr.mxu0 0.0
        %739 = vmatpush1.msra.mxu0 0.0
        %740 = vmatprep.subr.mxu0 0.0
        %741 = vmatpush1.msra.mxu0 0.0
        %742 = vmatprep.mubr.f32.mxu0 0.0
        %v743 = vand.u32 %v362, 4294901760
        %v744 = vsub.f32 %v362, %v743
        %745 = vmatmul.mubr.f32.gmra.mrb[0].mxu0 %v744
        %v746 = vpop.f32.mrb[0].mxu0
        %v747 = vadd.f32 %v623, %v746
        %v748 = vpop.f32.mrb[0].mxu0
        %749 = vmatprep.mubr.f32.mxu0 0.0
        %v750 = vand.u32 %v365, 4294901760
        %v751 = vsub.f32 %v365, %v750
        %752 = vmatmul.mubr.f32.gmra.mrb[0].mxu0 %v751
        %v753 = vpop.f32.mrb[0].mxu0
        %v754 = vadd.f32 %v629, %v753
        %v755 = vpop.f32.mrb[0].mxu0
        %756 = vmatprep.mubr.f32.mxu0 0.0
        %v757 = vand.u32 %v368, 4294901760
        %v758 = vsub.f32 %v368, %v757
        %759 = vmatmul.mubr.f32.gmra.mrb[0].mxu0 %v758
        %v760 = vpop.f32.mrb[0].mxu0
        %v761 = vadd.f32 %v635, %v760
        %v762 = vpop.f32.mrb[0].mxu0
        %763 = vmatprep.mubr.f32.mxu0 0.0
        %v764 = vand.u32 %v371, 4294901760
        %v765 = vsub.f32 %v371, %v764
        %766 = vmatmul.mubr.f32.gmra.mrb[0].mxu0 %v765
        %v767 = vpop.f32.mrb[0].mxu0
        %v768 = vadd.f32 %v641, %v767
        %v769 = vpop.f32.mrb[0].mxu0
        %770 = vmatprep.mubr.f32.mxu0 0.0
        %v771 = vand.u32 %v374, 4294901760
        %v772 = vsub.f32 %v374, %v771
        %773 = vmatmul.mubr.f32.gmra.mrb[0].mxu0 %v772
        %v774 = vpop.f32.mrb[0].mxu0
        %v775 = vadd.f32 %v647, %v774
        %v776 = vpop.f32.mrb[0].mxu0
        %777 = vmatprep.mubr.f32.mxu0 0.0
        %v778 = vand.u32 %v377, 4294901760
        %v779 = vsub.f32 %v377, %v778
        %780 = vmatmul.mubr.f32.gmra.mrb[0].mxu0 %v779
        %v781 = vpop.f32.mrb[0].mxu0
        %v782 = vadd.f32 %v653, %v781
        %v783 = vpop.f32.mrb[0].mxu0
        %784 = vmatprep.mubr.f32.mxu0 0.0
        %v785 = vand.u32 %v380, 4294901760
        %v786 = vsub.f32 %v380, %v785
        %787 = vmatmul.mubr.f32.gmra.mrb[0].mxu0 %v786
        %v788 = vpop.f32.mrb[0].mxu0
        %v789 = vadd.f32 %v659, %v788
        %v790 = vpop.f32.mrb[0].mxu0
        %791 = vmatprep.mubr.f32.mxu0 0.0
        %v792 = vand.u32 %v383, 4294901760
        %v793 = vsub.f32 %v383, %v792
        %794 = vmatmul.mubr.f32.gmra.mrb[0].mxu0 %v793
        %v795 = vpop.f32.mrb[0].mxu0
        %v796 = vadd.f32 %v665, %v795
        %v797 = vpop.f32.mrb[0].mxu0
        %798 = vmatprep.mubr.f32.mxu0 0.0
        %v799 = vand.u32 %v386, 4294901760
        %v800 = vsub.f32 %v386, %v799
        %801 = vmatmul.mubr.f32.gmra.mrb[0].mxu0 %v800
        %v802 = vpop.f32.mrb[0].mxu0
        %v803 = vadd.f32 %v671, %v802
        %v804 = vpop.f32.mrb[0].mxu0
        %805 = vdwg.mxu0
        %806 = vmatprep.subr.mxu0 0.0
        %v807 = vand.u32 %v358, 4294901760
        %808 = vmatpush1.msra.mxu0 %v807
        %809 = vmatprep.subr.mxu0 0.0
        %v810 = vand.u32 %v359, 4294901760
        %811 = vmatpush1.msra.mxu0 %v810
        %812 = vmatprep.subr.mxu0 0.0
        %813 = vmatpush1.msra.mxu0 0.0
        %814 = vmatprep.subr.mxu0 0.0
        %815 = vmatpush1.msra.mxu0 0.0
        %816 = vmatprep.subr.mxu0 0.0
        %817 = vmatpush1.msra.mxu0 0.0
        %818 = vmatprep.subr.mxu0 0.0
        %819 = vmatpush1.msra.mxu0 0.0
        %820 = vmatprep.subr.mxu0 0.0
        %821 = vmatpush1.msra.mxu0 0.0
        %822 = vmatprep.subr.mxu0 0.0
        %823 = vmatpush1.msra.mxu0 0.0
        %824 = vmatprep.subr.mxu0 0.0
        %825 = vmatpush1.msra.mxu0 0.0
        %826 = vmatprep.subr.mxu0 0.0
        %827 = vmatpush1.msra.mxu0 0.0
        %828 = vmatprep.subr.mxu0 0.0
        %829 = vmatpush1.msra.mxu0 0.0
        %830 = vmatprep.subr.mxu0 0.0
        %831 = vmatpush1.msra.mxu0 0.0
        %832 = vmatprep.subr.mxu0 0.0
        %833 = vmatpush1.msra.mxu0 0.0
        %834 = vmatprep.subr.mxu0 0.0
        %835 = vmatpush1.msra.mxu0 0.0
        %836 = vmatprep.subr.mxu0 0.0
        %837 = vmatpush1.msra.mxu0 0.0
        %838 = vmatprep.subr.mxu0 0.0
        %839 = vmatpush1.msra.mxu0 0.0
        %840 = vmatprep.subr.mxu0 0.0
        %841 = vmatpush1.msra.mxu0 0.0
        %842 = vmatprep.subr.mxu0 0.0
        %843 = vmatpush1.msra.mxu0 0.0
        %844 = vmatprep.subr.mxu0 0.0
        %845 = vmatpush1.msra.mxu0 0.0
        %846 = vmatprep.subr.mxu0 0.0
        %847 = vmatpush1.msra.mxu0 0.0
        %848 = vmatprep.subr.mxu0 0.0
        %849 = vmatpush1.msra.mxu0 0.0
        %850 = vmatprep.subr.mxu0 0.0
        %851 = vmatpush1.msra.mxu0 0.0
        %852 = vmatprep.subr.mxu0 0.0
        %853 = vmatpush1.msra.mxu0 0.0
        %854 = vmatprep.subr.mxu0 0.0
        %855 = vmatpush1.msra.mxu0 0.0
        %856 = vmatprep.subr.mxu0 0.0
        %857 = vmatpush1.msra.mxu0 0.0
        %858 = vmatprep.subr.mxu0 0.0
        %859 = vmatpush1.msra.mxu0 0.0
        %860 = vmatprep.subr.mxu0 0.0
        %861 = vmatpush1.msra.mxu0 0.0
        %862 = vmatprep.subr.mxu0 0.0
        %863 = vmatpush1.msra.mxu0 0.0
        %864 = vmatprep.subr.mxu0 0.0
        %865 = vmatpush1.msra.mxu0 0.0
        %866 = vmatprep.subr.mxu0 0.0
        %867 = vmatpush1.msra.mxu0 0.0
        %868 = vmatprep.subr.mxu0 0.0
        %869 = vmatpush1.msra.mxu0 0.0
        %870 = vmatprep.subr.mxu0 0.0
        %871 = vmatpush1.msra.mxu0 0.0
        %872 = vmatprep.mubr.f32.mxu0 0.0
        %v873 = vand.u32 %v362, 4294901760
        %v874 = vsub.f32 %v362, %v873
        %v875 = vand.u32 %v874, 4294901760
        %876 = vmatmul.mubr.f32.gmra.mrb[0].mxu0 %v875
        %v877 = vpop.f32.mrb[0].mxu0
        %v878 = vadd.f32 %v747, %v877
        %v879 = vpop.f32.mrb[0].mxu0
        %880 = vmatprep.mubr.f32.mxu0 0.0
        %v881 = vand.u32 %v365, 4294901760
        %v882 = vsub.f32 %v365, %v881
        %v883 = vand.u32 %v882, 4294901760
        %884 = vmatmul.mubr.f32.gmra.mrb[0].mxu0 %v883
        %v885 = vpop.f32.mrb[0].mxu0
        %v886 = vadd.f32 %v754, %v885
        %v887 = vpop.f32.mrb[0].mxu0
        %888 = vmatprep.mubr.f32.mxu0 0.0
        %v889 = vand.u32 %v368, 4294901760
        %v890 = vsub.f32 %v368, %v889
        %v891 = vand.u32 %v890, 4294901760
        %892 = vmatmul.mubr.f32.gmra.mrb[0].mxu0 %v891
        %v893 = vpop.f32.mrb[0].mxu0
        %v894 = vadd.f32 %v761, %v893
        %v895 = vpop.f32.mrb[0].mxu0
        %896 = vmatprep.mubr.f32.mxu0 0.0
        %v897 = vand.u32 %v371, 4294901760
        %v898 = vsub.f32 %v371, %v897
        %v899 = vand.u32 %v898, 4294901760
        %900 = vmatmul.mubr.f32.gmra.mrb[0].mxu0 %v899
        %v901 = vpop.f32.mrb[0].mxu0
        %v902 = vadd.f32 %v768, %v901
        %v903 = vpop.f32.mrb[0].mxu0
        %904 = vmatprep.mubr.f32.mxu0 0.0
        %v905 = vand.u32 %v374, 4294901760
        %v906 = vsub.f32 %v374, %v905
        %v907 = vand.u32 %v906, 4294901760
        %908 = vmatmul.mubr.f32.gmra.mrb[0].mxu0 %v907
        %v909 = vpop.f32.mrb[0].mxu0
        %v910 = vadd.f32 %v775, %v909
        %v911 = vpop.f32.mrb[0].mxu0
        %912 = vmatprep.mubr.f32.mxu0 0.0
        %v913 = vand.u32 %v377, 4294901760
        %v914 = vsub.f32 %v377, %v913
        %v915 = vand.u32 %v914, 4294901760
        %916 = vmatmul.mubr.f32.gmra.mrb[0].mxu0 %v915
        %v917 = vpop.f32.mrb[0].mxu0
        %v918 = vadd.f32 %v782, %v917
        %v919 = vpop.f32.mrb[0].mxu0
        %920 = vmatprep.mubr.f32.mxu0 0.0
        %v921 = vand.u32 %v380, 4294901760
        %v922 = vsub.f32 %v380, %v921
        %v923 = vand.u32 %v922, 4294901760
        %924 = vmatmul.mubr.f32.gmra.mrb[0].mxu0 %v923
        %v925 = vpop.f32.mrb[0].mxu0
        %v926 = vadd.f32 %v789, %v925
        %v927 = vpop.f32.mrb[0].mxu0
        %928 = vmatprep.mubr.f32.mxu0 0.0
        %v929 = vand.u32 %v383, 4294901760
        %v930 = vsub.f32 %v383, %v929
        %v931 = vand.u32 %v930, 4294901760
        %932 = vmatmul.mubr.f32.gmra.mrb[0].mxu0 %v931
        %v933 = vpop.f32.mrb[0].mxu0
        %v934 = vadd.f32 %v796, %v933
        %v935 = vpop.f32.mrb[0].mxu0
        %936 = vmatprep.mubr.f32.mxu0 0.0
        %v937 = vand.u32 %v386, 4294901760
        %v938 = vsub.f32 %v386, %v937
        %v939 = vand.u32 %v938, 4294901760
        %940 = vmatmul.mubr.f32.gmra.mrb[0].mxu0 %v939
        %v941 = vpop.f32.mrb[0].mxu0
        %v942 = vadd.f32 %v803, %v941
        %v943 = vpop.f32.mrb[0].mxu0
        %944 = vdwg.mxu0
        %945 = vmatprep.subr.mxu0 0.0
        %v946 = vand.u32 %v358, 4294901760
        %v947 = vsub.f32 %v358, %v946
        %v948 = vand.u32 %v947, 4294901760
        %949 = vmatpush1.msra.mxu0 %v948
        %950 = vmatprep.subr.mxu0 0.0
        %v951 = vand.u32 %v359, 4294901760
        %v952 = vsub.f32 %v359, %v951
        %v953 = vand.u32 %v952, 4294901760
        %954 = vmatpush1.msra.mxu0 %v953
        %955 = vmatprep.subr.mxu0 0.0
        %956 = vmatpush1.msra.mxu0 0.0
        %957 = vmatprep.subr.mxu0 0.0
        %958 = vmatpush1.msra.mxu0 0.0
        %959 = vmatprep.subr.mxu0 0.0
        %960 = vmatpush1.msra.mxu0 0.0
        %961 = vmatprep.subr.mxu0 0.0
        %962 = vmatpush1.msra.mxu0 0.0
        %963 = vmatprep.subr.mxu0 0.0
        %964 = vmatpush1.msra.mxu0 0.0
        %965 = vmatprep.subr.mxu0 0.0
        %966 = vmatpush1.msra.mxu0 0.0
        %967 = vmatprep.subr.mxu0 0.0
        %968 = vmatpush1.msra.mxu0 0.0
        %969 = vmatprep.subr.mxu0 0.0
        %970 = vmatpush1.msra.mxu0 0.0
        %971 = vmatprep.subr.mxu0 0.0
        %972 = vmatpush1.msra.mxu0 0.0
        %973 = vmatprep.subr.mxu0 0.0
        %974 = vmatpush1.msra.mxu0 0.0
        %975 = vmatprep.subr.mxu0 0.0
        %976 = vmatpush1.msra.mxu0 0.0
        %977 = vmatprep.subr.mxu0 0.0
        %978 = vmatpush1.msra.mxu0 0.0
        %979 = vmatprep.subr.mxu0 0.0
        %980 = vmatpush1.msra.mxu0 0.0
        %981 = vmatprep.subr.mxu0 0.0
        %982 = vmatpush1.msra.mxu0 0.0
        %983 = vmatprep.subr.mxu0 0.0
        %984 = vmatpush1.msra.mxu0 0.0
        %985 = vmatprep.subr.mxu0 0.0
        %986 = vmatpush1.msra.mxu0 0.0
        %987 = vmatprep.subr.mxu0 0.0
        %988 = vmatpush1.msra.mxu0 0.0
        %989 = vmatprep.subr.mxu0 0.0
        %990 = vmatpush1.msra.mxu0 0.0
        %991 = vmatprep.subr.mxu0 0.0
        %992 = vmatpush1.msra.mxu0 0.0
        %993 = vmatprep.subr.mxu0 0.0
        %994 = vmatpush1.msra.mxu0 0.0
        %995 = vmatprep.subr.mxu0 0.0
        %996 = vmatpush1.msra.mxu0 0.0
        %997 = vmatprep.subr.mxu0 0.0
        %998 = vmatpush1.msra.mxu0 0.0
        %999 = vmatprep.subr.mxu0 0.0
        %1000 = vmatpush1.msra.mxu0 0.0
        %1001 = vmatprep.subr.mxu0 0.0
        %1002 = vmatpush1.msra.mxu0 0.0
        %1003 = vmatprep.subr.mxu0 0.0
        %1004 = vmatpush1.msra.mxu0 0.0
        %1005 = vmatprep.subr.mxu0 0.0
        %1006 = vmatpush1.msra.mxu0 0.0
        %1007 = vmatprep.subr.mxu0 0.0
        %1008 = vmatpush1.msra.mxu0 0.0
        %1009 = vmatprep.subr.mxu0 0.0
        %1010 = vmatpush1.msra.mxu0 0.0
        %1011 = vmatprep.subr.mxu0 0.0
        %1012 = vmatpush1.msra.mxu0 0.0
        %1013 = vmatprep.subr.mxu0 0.0
        %1014 = vmatpush1.msra.mxu0 0.0
        %1015 = vmatprep.mubr.f32.mxu0 0.0
        %v1016 = vand.u32 %v362, 4294901760
        %1017 = vmatmul.mubr.f32.gmra.mrb[0].mxu0 %v1016
        %v1018 = vpop.f32.mrb[0].mxu0
        %v1019 = vadd.f32 %v878, %v1018
        %v1020 = vpop.f32.mrb[0].mxu0
        %1021 = vmatprep.mubr.f32.mxu0 0.0
        %v1022 = vand.u32 %v365, 4294901760
        %1023 = vmatmul.mubr.f32.gmra.mrb[0].mxu0 %v1022
        %v1024 = vpop.f32.mrb[0].mxu0
        %v1025 = vadd.f32 %v886, %v1024
        %v1026 = vpop.f32.mrb[0].mxu0
        %1027 = vmatprep.mubr.f32.mxu0 0.0
        %v1028 = vand.u32 %v368, 4294901760
        %1029 = vmatmul.mubr.f32.gmra.mrb[0].mxu0 %v1028
        %v1030 = vpop.f32.mrb[0].mxu0
        %v1031 = vadd.f32 %v894, %v1030
        %v1032 = vpop.f32.mrb[0].mxu0
        %1033 = vmatprep.mubr.f32.mxu0 0.0
        %v1034 = vand.u32 %v371, 4294901760
        %1035 = vmatmul.mubr.f32.gmra.mrb[0].mxu0 %v1034
        %v1036 = vpop.f32.mrb[0].mxu0
        %v1037 = vadd.f32 %v902, %v1036
        %v1038 = vpop.f32.mrb[0].mxu0
        %1039 = vmatprep.mubr.f32.mxu0 0.0
        %v1040 = vand.u32 %v374, 4294901760
        %1041 = vmatmul.mubr.f32.gmra.mrb[0].mxu0 %v1040
        %v1042 = vpop.f32.mrb[0].mxu0
        %v1043 = vadd.f32 %v910, %v1042
        %v1044 = vpop.f32.mrb[0].mxu0
        %1045 = vmatprep.mubr.f32.mxu0 0.0
        %v1046 = vand.u32 %v377, 4294901760
        %1047 = vmatmul.mubr.f32.gmra.mrb[0].mxu0 %v1046
        %v1048 = vpop.f32.mrb[0].mxu0
        %v1049 = vadd.f32 %v918, %v1048
        %v1050 = vpop.f32.mrb[0].mxu0
        %1051 = vmatprep.mubr.f32.mxu0 0.0
        %v1052 = vand.u32 %v380, 4294901760
        %1053 = vmatmul.mubr.f32.gmra.mrb[0].mxu0 %v1052
        %v1054 = vpop.f32.mrb[0].mxu0
        %v1055 = vadd.f32 %v926, %v1054
        %v1056 = vpop.f32.mrb[0].mxu0
        %1057 = vmatprep.mubr.f32.mxu0 0.0
        %v1058 = vand.u32 %v383, 4294901760
        %1059 = vmatmul.mubr.f32.gmra.mrb[0].mxu0 %v1058
        %v1060 = vpop.f32.mrb[0].mxu0
        %v1061 = vadd.f32 %v934, %v1060
        %v1062 = vpop.f32.mrb[0].mxu0
        %1063 = vmatprep.mubr.f32.mxu0 0.0
        %v1064 = vand.u32 %v386, 4294901760
        %1065 = vmatmul.mubr.f32.gmra.mrb[0].mxu0 %v1064
        %v1066 = vpop.f32.mrb[0].mxu0
        %v1067 = vadd.f32 %v942, %v1066
        %v1068 = vpop.f32.mrb[0].mxu0
        %1069 = vdwg.mxu0
        %1070 = vmatprep.subr.mxu0 0.0
        %v1071 = vand.u32 %v358, 4294901760
        %1072 = vmatpush1.msra.mxu0 %v1071
        %1073 = vmatprep.subr.mxu0 0.0
        %v1074 = vand.u32 %v359, 4294901760
        %1075 = vmatpush1.msra.mxu0 %v1074
        %1076 = vmatprep.subr.mxu0 0.0
        %1077 = vmatpush1.msra.mxu0 0.0
        %1078 = vmatprep.subr.mxu0 0.0
        %1079 = vmatpush1.msra.mxu0 0.0
        %1080 = vmatprep.subr.mxu0 0.0
        %1081 = vmatpush1.msra.mxu0 0.0
        %1082 = vmatprep.subr.mxu0 0.0
        %1083 = vmatpush1.msra.mxu0 0.0
        %1084 = vmatprep.subr.mxu0 0.0
        %1085 = vmatpush1.msra.mxu0 0.0
        %1086 = vmatprep.subr.mxu0 0.0
        %1087 = vmatpush1.msra.mxu0 0.0
        %1088 = vmatprep.subr.mxu0 0.0
        %1089 = vmatpush1.msra.mxu0 0.0
        %1090 = vmatprep.subr.mxu0 0.0
        %1091 = vmatpush1.msra.mxu0 0.0
        %1092 = vmatprep.subr.mxu0 0.0
        %1093 = vmatpush1.msra.mxu0 0.0
        %1094 = vmatprep.subr.mxu0 0.0
        %1095 = vmatpush1.msra.mxu0 0.0
        %1096 = vmatprep.subr.mxu0 0.0
        %1097 = vmatpush1.msra.mxu0 0.0
        %1098 = vmatprep.subr.mxu0 0.0
        %1099 = vmatpush1.msra.mxu0 0.0
        %1100 = vmatprep.subr.mxu0 0.0
        %1101 = vmatpush1.msra.mxu0 0.0
        %1102 = vmatprep.subr.mxu0 0.0
        %1103 = vmatpush1.msra.mxu0 0.0
        %1104 = vmatprep.subr.mxu0 0.0
        %1105 = vmatpush1.msra.mxu0 0.0
        %1106 = vmatprep.subr.mxu0 0.0
        %1107 = vmatpush1.msra.mxu0 0.0
        %1108 = vmatprep.subr.mxu0 0.0
        %1109 = vmatpush1.msra.mxu0 0.0
        %1110 = vmatprep.subr.mxu0 0.0
        %1111 = vmatpush1.msra.mxu0 0.0
        %1112 = vmatprep.subr.mxu0 0.0
        %1113 = vmatpush1.msra.mxu0 0.0
        %1114 = vmatprep.subr.mxu0 0.0
        %1115 = vmatpush1.msra.mxu0 0.0
        %1116 = vmatprep.subr.mxu0 0.0
        %1117 = vmatpush1.msra.mxu0 0.0
        %1118 = vmatprep.subr.mxu0 0.0
        %1119 = vmatpush1.msra.mxu0 0.0
        %1120 = vmatprep.subr.mxu0 0.0
        %1121 = vmatpush1.msra.mxu0 0.0
        %1122 = vmatprep.subr.mxu0 0.0
        %1123 = vmatpush1.msra.mxu0 0.0
        %1124 = vmatprep.subr.mxu0 0.0
        %1125 = vmatpush1.msra.mxu0 0.0
        %1126 = vmatprep.subr.mxu0 0.0
        %1127 = vmatpush1.msra.mxu0 0.0
        %1128 = vmatprep.subr.mxu0 0.0
        %1129 = vmatpush1.msra.mxu0 0.0
        %1130 = vmatprep.subr.mxu0 0.0
        %1131 = vmatpush1.msra.mxu0 0.0
        %1132 = vmatprep.subr.mxu0 0.0
        %1133 = vmatpush1.msra.mxu0 0.0
        %1134 = vmatprep.subr.mxu0 0.0
        %1135 = vmatpush1.msra.mxu0 0.0
        %1136 = vmatprep.mubr.f32.mxu0 0.0
        %v1137 = vand.u32 %v362, 4294901760
        %1138 = vmatmul.mubr.f32.gmra.mrb[0].mxu0 %v1137
        %v1139 = vpop.f32.mrb[0].mxu0
        %v1140 = vadd.f32 %v1019, %v1139
        %v1141 = vpop.f32.mrb[0].mxu0
        %1142 = vmatprep.mubr.f32.mxu0 0.0
        %v1143 = vand.u32 %v365, 4294901760
        %1144 = vmatmul.mubr.f32.gmra.mrb[0].mxu0 %v1143
        %v1145 = vpop.f32.mrb[0].mxu0
        %v1146 = vadd.f32 %v1025, %v1145
        %v1147 = vpop.f32.mrb[0].mxu0
        %1148 = vmatprep.mubr.f32.mxu0 0.0
        %v1149 = vand.u32 %v368, 4294901760
        %1150 = vmatmul.mubr.f32.gmra.mrb[0].mxu0 %v1149
        %v1151 = vpop.f32.mrb[0].mxu0
        %v1152 = vadd.f32 %v1031, %v1151
        %v1153 = vpop.f32.mrb[0].mxu0
        %1154 = vmatprep.mubr.f32.mxu0 0.0
        %v1155 = vand.u32 %v371, 4294901760
        %1156 = vmatmul.mubr.f32.gmra.mrb[0].mxu0 %v1155
        %v1157 = vpop.f32.mrb[0].mxu0
        %v1158 = vadd.f32 %v1037, %v1157
        %v1159 = vpop.f32.mrb[0].mxu0
        %1160 = vmatprep.mubr.f32.mxu0 0.0
        %v1161 = vand.u32 %v374, 4294901760
        %1162 = vmatmul.mubr.f32.gmra.mrb[0].mxu0 %v1161
        %v1163 = vpop.f32.mrb[0].mxu0
        %v1164 = vadd.f32 %v1043, %v1163
        %v1165 = vpop.f32.mrb[0].mxu0
        %1166 = vmatprep.mubr.f32.mxu0 0.0
        %v1167 = vand.u32 %v377, 4294901760
        %1168 = vmatmul.mubr.f32.gmra.mrb[0].mxu0 %v1167
        %v1169 = vpop.f32.mrb[0].mxu0
        %v1170 = vadd.f32 %v1049, %v1169
        %v1171 = vpop.f32.mrb[0].mxu0
        %1172 = vmatprep.mubr.f32.mxu0 0.0
        %v1173 = vand.u32 %v380, 4294901760
        %1174 = vmatmul.mubr.f32.gmra.mrb[0].mxu0 %v1173
        %v1175 = vpop.f32.mrb[0].mxu0
        %v1176 = vadd.f32 %v1055, %v1175
        %v1177 = vpop.f32.mrb[0].mxu0
        %1178 = vmatprep.mubr.f32.mxu0 0.0
        %v1179 = vand.u32 %v383, 4294901760
        %1180 = vmatmul.mubr.f32.gmra.mrb[0].mxu0 %v1179
        %v1181 = vpop.f32.mrb[0].mxu0
        %v1182 = vadd.f32 %v1061, %v1181
        %v1183 = vpop.f32.mrb[0].mxu0
        %1184 = vmatprep.mubr.f32.mxu0 0.0
        %v1185 = vand.u32 %v386, 4294901760
        %1186 = vmatmul.mubr.f32.gmra.mrb[0].mxu0 %v1185
        %v1187 = vpop.f32.mrb[0].mxu0
        %v1188 = vadd.f32 %v1067, %v1187
        %v1189 = vpop.f32.mrb[0].mxu0
        %1190 = vdwg.mxu0
        %vm1191 = vcmask 261120
        %1192 = vst.msk [vmem:[#allocation4] sm:$0xff] %vm1191, %v1140
        %1193 = vst.msk [vmem:[#allocation4 + $0x8] sm:$0xff] %vm1191, %v1146
        %1194 = vst.msk [vmem:[#allocation4 + $0x10] sm:$0xff] %vm1191, %v1152
        %1195 = vst.msk [vmem:[#allocation4 + $0x18] sm:$0xff] %vm1191, %v1158
        %1196 = vst.msk [vmem:[#allocation4 + $0x20] sm:$0xff] %vm1191, %v1164
        %1197 = vst.msk [vmem:[#allocation4 + $0x28] sm:$0xff] %vm1191, %v1170
        %1198 = vst.msk [vmem:[#allocation4 + $0x30] sm:$0xff] %vm1191, %v1176
        %1199 = vst.msk [vmem:[#allocation4 + $0x38] sm:$0xff] %vm1191, %v1182
        %vm1200 = vcmask 258048
        %1201 = vst.msk [vmem:[#allocation4 + $0x40] sm:$0x1f] %vm1200, %v1188
        %1202 = vst.msk [vmem:[#allocation2] sm:$0xff] %vm1191, %v1140
        %1203 = vst.msk [vmem:[#allocation2 + $0x8] sm:$0xff] %vm1191, %v1146
        %1204 = vst.msk [vmem:[#allocation2 + $0x10] sm:$0xff] %vm1191, %v1152
        %1205 = vst.msk [vmem:[#allocation2 + $0x18] sm:$0xff] %vm1191, %v1158
        %1206 = vst.msk [vmem:[#allocation2 + $0x20] sm:$0xff] %vm1191, %v1164
        %1207 = vst.msk [vmem:[#allocation2 + $0x28] sm:$0xff] %vm1191, %v1170
        %1208 = vst.msk [vmem:[#allocation2 + $0x30] sm:$0xff] %vm1191, %v1176
        %1209 = vst.msk [vmem:[#allocation2 + $0x38] sm:$0xff] %vm1191, %v1182
        %1210 = vst.msk [vmem:[#allocation2 + $0x40] sm:$0x1f] %vm1200, %v1188
        %s1211 = scalar_lea.vmem %s0, 72
        %v1212 = vld [vmem:[%s1211] sm:$0xff]
        %v1213 = vld [vmem:[%s1211 + $0x8] sm:$0xff]
        %v1214 = vld [vmem:[%s1211 + $0x10] sm:$0xff]
        %v1215 = vld [vmem:[%s1211 + $0x18] sm:$0xff]
        %v1216 = vld [vmem:[%s1211 + $0x20] sm:$0xff]
        %v1217 = vld [vmem:[%s1211 + $0x28] sm:$0xff]
        %v1218 = vld [vmem:[%s1211 + $0x30] sm:$0xff]
        %v1219 = vld [vmem:[%s1211 + $0x38] sm:$0xff]
        %v1220 = vld [vmem:[%s1211 + $0x40] sm:$0x1f]
        %v1221 = vld [vmem:[%s1] sm:$0xff]
        %v1222 = vld [vmem:[%s1 + $0x8] sm:$0xff]
        %v1224 = vsel %vm360, %v1212, 0
        %v1227 = vsel %vm360, %v1213, 0
        %v1230 = vsel %vm360, %v1214, 0
        %v1233 = vsel %vm360, %v1215, 0
        %v1236 = vsel %vm360, %v1216, 0
        %v1239 = vsel %vm360, %v1217, 0
        %v1242 = vsel %vm360, %v1218, 0
        %v1245 = vsel %vm360, %v1219, 0
        %v1248 = vsel %vm360, %v1220, 0
        %1250 = vmatprep.subr.mxu0 0.0
        %v1251 = vand.u32 %v1221, 4294901760
        %1252 = vmatpush1.msra.mxu0 %v1251
        %1253 = vmatprep.subr.mxu0 0.0
        %v1254 = vand.u32 %v1222, 4294901760
        %1255 = vmatpush1.msra.mxu0 %v1254
        %1256 = vmatprep.subr.mxu0 0.0
        %1257 = vmatpush1.msra.mxu0 0.0
        %1258 = vmatprep.subr.mxu0 0.0
        %1259 = vmatpush1.msra.mxu0 0.0
        %1260 = vmatprep.subr.mxu0 0.0
        %1261 = vmatpush1.msra.mxu0 0.0
        %1262 = vmatprep.subr.mxu0 0.0
        %1263 = vmatpush1.msra.mxu0 0.0
        %1264 = vmatprep.subr.mxu0 0.0
        %1265 = vmatpush1.msra.mxu0 0.0
        %1266 = vmatprep.subr.mxu0 0.0
        %1267 = vmatpush1.msra.mxu0 0.0
        %1268 = vmatprep.subr.mxu0 0.0
        %1269 = vmatpush1.msra.mxu0 0.0
        %1270 = vmatprep.subr.mxu0 0.0
        %1271 = vmatpush1.msra.mxu0 0.0
        %1272 = vmatprep.subr.mxu0 0.0
        %1273 = vmatpush1.msra.mxu0 0.0
        %1274 = vmatprep.subr.mxu0 0.0
        %1275 = vmatpush1.msra.mxu0 0.0
        %1276 = vmatprep.subr.mxu0 0.0
        %1277 = vmatpush1.msra.mxu0 0.0
        %1278 = vmatprep.subr.mxu0 0.0
        %1279 = vmatpush1.msra.mxu0 0.0
        %1280 = vmatprep.subr.mxu0 0.0
        %1281 = vmatpush1.msra.mxu0 0.0
        %1282 = vmatprep.subr.mxu0 0.0
        %1283 = vmatpush1.msra.mxu0 0.0
        %1284 = vmatprep.subr.mxu0 0.0
        %1285 = vmatpush1.msra.mxu0 0.0
        %1286 = vmatprep.subr.mxu0 0.0
        %1287 = vmatpush1.msra.mxu0 0.0
        %1288 = vmatprep.subr.mxu0 0.0
        %1289 = vmatpush1.msra.mxu0 0.0
        %1290 = vmatprep.subr.mxu0 0.0
        %1291 = vmatpush1.msra.mxu0 0.0
        %1292 = vmatprep.subr.mxu0 0.0
        %1293 = vmatpush1.msra.mxu0 0.0
        %1294 = vmatprep.subr.mxu0 0.0
        %1295 = vmatpush1.msra.mxu0 0.0
        %1296 = vmatprep.subr.mxu0 0.0
        %1297 = vmatpush1.msra.mxu0 0.0
        %1298 = vmatprep.subr.mxu0 0.0
        %1299 = vmatpush1.msra.mxu0 0.0
        %1300 = vmatprep.subr.mxu0 0.0
        %1301 = vmatpush1.msra.mxu0 0.0
        %1302 = vmatprep.subr.mxu0 0.0
        %1303 = vmatpush1.msra.mxu0 0.0
        %1304 = vmatprep.subr.mxu0 0.0
        %1305 = vmatpush1.msra.mxu0 0.0
        %1306 = vmatprep.subr.mxu0 0.0
        %1307 = vmatpush1.msra.mxu0 0.0
        %1308 = vmatprep.subr.mxu0 0.0
        %1309 = vmatpush1.msra.mxu0 0.0
        %1310 = vmatprep.subr.mxu0 0.0
        %1311 = vmatpush1.msra.mxu0 0.0
        %1312 = vmatprep.subr.mxu0 0.0
        %1313 = vmatpush1.msra.mxu0 0.0
        %1314 = vmatprep.subr.mxu0 0.0
        %1315 = vmatpush1.msra.mxu0 0.0
        %1316 = vmatprep.mubr.f32.mxu0 0.0
        %v1317 = vand.u32 %v1224, 4294901760
        %v1318 = vsub.f32 %v1224, %v1317
        %v1319 = vand.u32 %v1318, 4294901760
        %v1320 = vsub.f32 %v1318, %v1319
        %v1321 = vand.u32 %v1320, 4294901760
        %1322 = vmatmul.mubr.f32.gmra.mrb[0].mxu0 %v1321
        %v1323 = vpop.f32.mrb[0].mxu0
        %v1324 = vadd.f32 0.0, %v1323
        %v1325 = vpop.f32.mrb[0].mxu0
        %1326 = vmatprep.mubr.f32.mxu0 0.0
        %v1327 = vand.u32 %v1227, 4294901760
        %v1328 = vsub.f32 %v1227, %v1327
        %v1329 = vand.u32 %v1328, 4294901760
        %v1330 = vsub.f32 %v1328, %v1329
        %v1331 = vand.u32 %v1330, 4294901760
        %1332 = vmatmul.mubr.f32.gmra.mrb[0].mxu0 %v1331
        %v1333 = vpop.f32.mrb[0].mxu0
        %v1334 = vadd.f32 0.0, %v1333
        %v1335 = vpop.f32.mrb[0].mxu0
        %1336 = vmatprep.mubr.f32.mxu0 0.0
        %v1337 = vand.u32 %v1230, 4294901760
        %v1338 = vsub.f32 %v1230, %v1337
        %v1339 = vand.u32 %v1338, 4294901760
        %v1340 = vsub.f32 %v1338, %v1339
        %v1341 = vand.u32 %v1340, 4294901760
        %1342 = vmatmul.mubr.f32.gmra.mrb[0].mxu0 %v1341
        %v1343 = vpop.f32.mrb[0].mxu0
        %v1344 = vadd.f32 0.0, %v1343
        %v1345 = vpop.f32.mrb[0].mxu0
        %1346 = vmatprep.mubr.f32.mxu0 0.0
        %v1347 = vand.u32 %v1233, 4294901760
        %v1348 = vsub.f32 %v1233, %v1347
        %v1349 = vand.u32 %v1348, 4294901760
        %v1350 = vsub.f32 %v1348, %v1349
        %v1351 = vand.u32 %v1350, 4294901760
        %1352 = vmatmul.mubr.f32.gmra.mrb[0].mxu0 %v1351
        %v1353 = vpop.f32.mrb[0].mxu0
        %v1354 = vadd.f32 0.0, %v1353
        %v1355 = vpop.f32.mrb[0].mxu0
        %1356 = vmatprep.mubr.f32.mxu0 0.0
        %v1357 = vand.u32 %v1236, 4294901760
        %v1358 = vsub.f32 %v1236, %v1357
        %v1359 = vand.u32 %v1358, 4294901760
        %v1360 = vsub.f32 %v1358, %v1359
        %v1361 = vand.u32 %v1360, 4294901760
        %1362 = vmatmul.mubr.f32.gmra.mrb[0].mxu0 %v1361
        %v1363 = vpop.f32.mrb[0].mxu0
        %v1364 = vadd.f32 0.0, %v1363
        %v1365 = vpop.f32.mrb[0].mxu0
        %1366 = vmatprep.mubr.f32.mxu0 0.0
        %v1367 = vand.u32 %v1239, 4294901760
        %v1368 = vsub.f32 %v1239, %v1367
        %v1369 = vand.u32 %v1368, 4294901760
        %v1370 = vsub.f32 %v1368, %v1369
        %v1371 = vand.u32 %v1370, 4294901760
        %1372 = vmatmul.mubr.f32.gmra.mrb[0].mxu0 %v1371
        %v1373 = vpop.f32.mrb[0].mxu0
        %v1374 = vadd.f32 0.0, %v1373
        %v1375 = vpop.f32.mrb[0].mxu0
        %1376 = vmatprep.mubr.f32.mxu0 0.0
        %v1377 = vand.u32 %v1242, 4294901760
        %v1378 = vsub.f32 %v1242, %v1377
        %v1379 = vand.u32 %v1378, 4294901760
        %v1380 = vsub.f32 %v1378, %v1379
        %v1381 = vand.u32 %v1380, 4294901760
        %1382 = vmatmul.mubr.f32.gmra.mrb[0].mxu0 %v1381
        %v1383 = vpop.f32.mrb[0].mxu0
        %v1384 = vadd.f32 0.0, %v1383
        %v1385 = vpop.f32.mrb[0].mxu0
        %1386 = vmatprep.mubr.f32.mxu0 0.0
        %v1387 = vand.u32 %v1245, 4294901760
        %v1388 = vsub.f32 %v1245, %v1387
        %v1389 = vand.u32 %v1388, 4294901760
        %v1390 = vsub.f32 %v1388, %v1389
        %v1391 = vand.u32 %v1390, 4294901760
        %1392 = vmatmul.mubr.f32.gmra.mrb[0].mxu0 %v1391
        %v1393 = vpop.f32.mrb[0].mxu0
        %v1394 = vadd.f32 0.0, %v1393
        %v1395 = vpop.f32.mrb[0].mxu0
        %1396 = vmatprep.mubr.f32.mxu0 0.0
        %v1397 = vand.u32 %v1248, 4294901760
        %v1398 = vsub.f32 %v1248, %v1397
        %v1399 = vand.u32 %v1398, 4294901760
        %v1400 = vsub.f32 %v1398, %v1399
        %v1401 = vand.u32 %v1400, 4294901760
        %1402 = vmatmul.mubr.f32.gmra.mrb[0].mxu0 %v1401
        %v1403 = vpop.f32.mrb[0].mxu0
        %v1404 = vadd.f32 0.0, %v1403
        %v1405 = vpop.f32.mrb[0].mxu0
        %1406 = vdwg.mxu0
        %1407 = vmatprep.subr.mxu0 0.0
        %v1408 = vand.u32 %v1221, 4294901760
        %v1409 = vsub.f32 %v1221, %v1408
        %v1410 = vand.u32 %v1409, 4294901760
        %v1411 = vsub.f32 %v1409, %v1410
        %v1412 = vand.u32 %v1411, 4294901760
        %1413 = vmatpush1.msra.mxu0 %v1412
        %1414 = vmatprep.subr.mxu0 0.0
        %v1415 = vand.u32 %v1222, 4294901760
        %v1416 = vsub.f32 %v1222, %v1415
        %v1417 = vand.u32 %v1416, 4294901760
        %v1418 = vsub.f32 %v1416, %v1417
        %v1419 = vand.u32 %v1418, 4294901760
        %1420 = vmatpush1.msra.mxu0 %v1419
        %1421 = vmatprep.subr.mxu0 0.0
        %1422 = vmatpush1.msra.mxu0 0.0
        %1423 = vmatprep.subr.mxu0 0.0
        %1424 = vmatpush1.msra.mxu0 0.0
        %1425 = vmatprep.subr.mxu0 0.0
        %1426 = vmatpush1.msra.mxu0 0.0
        %1427 = vmatprep.subr.mxu0 0.0
        %1428 = vmatpush1.msra.mxu0 0.0
        %1429 = vmatprep.subr.mxu0 0.0
        %1430 = vmatpush1.msra.mxu0 0.0
        %1431 = vmatprep.subr.mxu0 0.0
        %1432 = vmatpush1.msra.mxu0 0.0
        %1433 = vmatprep.subr.mxu0 0.0
        %1434 = vmatpush1.msra.mxu0 0.0
        %1435 = vmatprep.subr.mxu0 0.0
        %1436 = vmatpush1.msra.mxu0 0.0
        %1437 = vmatprep.subr.mxu0 0.0
        %1438 = vmatpush1.msra.mxu0 0.0
        %1439 = vmatprep.subr.mxu0 0.0
        %1440 = vmatpush1.msra.mxu0 0.0
        %1441 = vmatprep.subr.mxu0 0.0
        %1442 = vmatpush1.msra.mxu0 0.0
        %1443 = vmatprep.subr.mxu0 0.0
        %1444 = vmatpush1.msra.mxu0 0.0
        %1445 = vmatprep.subr.mxu0 0.0
        %1446 = vmatpush1.msra.mxu0 0.0
        %1447 = vmatprep.subr.mxu0 0.0
        %1448 = vmatpush1.msra.mxu0 0.0
        %1449 = vmatprep.subr.mxu0 0.0
        %1450 = vmatpush1.msra.mxu0 0.0
        %1451 = vmatprep.subr.mxu0 0.0
        %1452 = vmatpush1.msra.mxu0 0.0
        %1453 = vmatprep.subr.mxu0 0.0
        %1454 = vmatpush1.msra.mxu0 0.0
        %1455 = vmatprep.subr.mxu0 0.0
        %1456 = vmatpush1.msra.mxu0 0.0
        %1457 = vmatprep.subr.mxu0 0.0
        %1458 = vmatpush1.msra.mxu0 0.0
        %1459 = vmatprep.subr.mxu0 0.0
        %1460 = vmatpush1.msra.mxu0 0.0
        %1461 = vmatprep.subr.mxu0 0.0
        %1462 = vmatpush1.msra.mxu0 0.0
        %1463 = vmatprep.subr.mxu0 0.0
        %1464 = vmatpush1.msra.mxu0 0.0
        %1465 = vmatprep.subr.mxu0 0.0
        %1466 = vmatpush1.msra.mxu0 0.0
        %1467 = vmatprep.subr.mxu0 0.0
        %1468 = vmatpush1.msra.mxu0 0.0
        %1469 = vmatprep.subr.mxu0 0.0
        %1470 = vmatpush1.msra.mxu0 0.0
        %1471 = vmatprep.subr.mxu0 0.0
        %1472 = vmatpush1.msra.mxu0 0.0
        %1473 = vmatprep.subr.mxu0 0.0
        %1474 = vmatpush1.msra.mxu0 0.0
        %1475 = vmatprep.subr.mxu0 0.0
        %1476 = vmatpush1.msra.mxu0 0.0
        %1477 = vmatprep.subr.mxu0 0.0
        %1478 = vmatpush1.msra.mxu0 0.0
        %1479 = vmatprep.subr.mxu0 0.0
        %1480 = vmatpush1.msra.mxu0 0.0
        %1481 = vmatprep.mubr.f32.mxu0 0.0
        %v1482 = vand.u32 %v1224, 4294901760
        %1483 = vmatmul.mubr.f32.gmra.mrb[0].mxu0 %v1482
        %v1484 = vpop.f32.mrb[0].mxu0
        %v1485 = vadd.f32 %v1324, %v1484
        %v1486 = vpop.f32.mrb[0].mxu0
        %1487 = vmatprep.mubr.f32.mxu0 0.0
        %v1488 = vand.u32 %v1227, 4294901760
        %1489 = vmatmul.mubr.f32.gmra.mrb[0].mxu0 %v1488
        %v1490 = vpop.f32.mrb[0].mxu0
        %v1491 = vadd.f32 %v1334, %v1490
        %v1492 = vpop.f32.mrb[0].mxu0
        %1493 = vmatprep.mubr.f32.mxu0 0.0
        %v1494 = vand.u32 %v1230, 4294901760
        %1495 = vmatmul.mubr.f32.gmra.mrb[0].mxu0 %v1494
        %v1496 = vpop.f32.mrb[0].mxu0
        %v1497 = vadd.f32 %v1344, %v1496
        %v1498 = vpop.f32.mrb[0].mxu0
        %1499 = vmatprep.mubr.f32.mxu0 0.0
        %v1500 = vand.u32 %v1233, 4294901760
        %1501 = vmatmul.mubr.f32.gmra.mrb[0].mxu0 %v1500
        %v1502 = vpop.f32.mrb[0].mxu0
        %v1503 = vadd.f32 %v1354, %v1502
        %v1504 = vpop.f32.mrb[0].mxu0
        %1505 = vmatprep.mubr.f32.mxu0 0.0
        %v1506 = vand.u32 %v1236, 4294901760
        %1507 = vmatmul.mubr.f32.gmra.mrb[0].mxu0 %v1506
        %v1508 = vpop.f32.mrb[0].mxu0
        %v1509 = vadd.f32 %v1364, %v1508
        %v1510 = vpop.f32.mrb[0].mxu0
        %1511 = vmatprep.mubr.f32.mxu0 0.0
        %v1512 = vand.u32 %v1239, 4294901760
        %1513 = vmatmul.mubr.f32.gmra.mrb[0].mxu0 %v1512
        %v1514 = vpop.f32.mrb[0].mxu0
        %v1515 = vadd.f32 %v1374, %v1514
        %v1516 = vpop.f32.mrb[0].mxu0
        %1517 = vmatprep.mubr.f32.mxu0 0.0
        %v1518 = vand.u32 %v1242, 4294901760
        %1519 = vmatmul.mubr.f32.gmra.mrb[0].mxu0 %v1518
        %v1520 = vpop.f32.mrb[0].mxu0
        %v1521 = vadd.f32 %v1384, %v1520
        %v1522 = vpop.f32.mrb[0].mxu0
        %1523 = vmatprep.mubr.f32.mxu0 0.0
        %v1524 = vand.u32 %v1245, 4294901760
        %1525 = vmatmul.mubr.f32.gmra.mrb[0].mxu0 %v1524
        %v1526 = vpop.f32.mrb[0].mxu0
        %v1527 = vadd.f32 %v1394, %v1526
        %v1528 = vpop.f32.mrb[0].mxu0
        %1529 = vmatprep.mubr.f32.mxu0 0.0
        %v1530 = vand.u32 %v1248, 4294901760
        %1531 = vmatmul.mubr.f32.gmra.mrb[0].mxu0 %v1530
        %v1532 = vpop.f32.mrb[0].mxu0
        %v1533 = vadd.f32 %v1404, %v1532
        %v1534 = vpop.f32.mrb[0].mxu0
        %1535 = vdwg.mxu0
        %1536 = vmatprep.subr.mxu0 0.0
        %v1537 = vand.u32 %v1221, 4294901760
        %v1538 = vsub.f32 %v1221, %v1537
        %1539 = vmatpush1.msra.mxu0 %v1538
        %1540 = vmatprep.subr.mxu0 0.0
        %v1541 = vand.u32 %v1222, 4294901760
        %v1542 = vsub.f32 %v1222, %v1541
        %1543 = vmatpush1.msra.mxu0 %v1542
        %1544 = vmatprep.subr.mxu0 0.0
        %1545 = vmatpush1.msra.mxu0 0.0
        %1546 = vmatprep.subr.mxu0 0.0
        %1547 = vmatpush1.msra.mxu0 0.0
        %1548 = vmatprep.subr.mxu0 0.0
        %1549 = vmatpush1.msra.mxu0 0.0
        %1550 = vmatprep.subr.mxu0 0.0
        %1551 = vmatpush1.msra.mxu0 0.0
        %1552 = vmatprep.subr.mxu0 0.0
        %1553 = vmatpush1.msra.mxu0 0.0
        %1554 = vmatprep.subr.mxu0 0.0
        %1555 = vmatpush1.msra.mxu0 0.0
        %1556 = vmatprep.subr.mxu0 0.0
        %1557 = vmatpush1.msra.mxu0 0.0
        %1558 = vmatprep.subr.mxu0 0.0
        %1559 = vmatpush1.msra.mxu0 0.0
        %1560 = vmatprep.subr.mxu0 0.0
        %1561 = vmatpush1.msra.mxu0 0.0
        %1562 = vmatprep.subr.mxu0 0.0
        %1563 = vmatpush1.msra.mxu0 0.0
        %1564 = vmatprep.subr.mxu0 0.0
        %1565 = vmatpush1.msra.mxu0 0.0
        %1566 = vmatprep.subr.mxu0 0.0
        %1567 = vmatpush1.msra.mxu0 0.0
        %1568 = vmatprep.subr.mxu0 0.0
        %1569 = vmatpush1.msra.mxu0 0.0
        %1570 = vmatprep.subr.mxu0 0.0
        %1571 = vmatpush1.msra.mxu0 0.0
        %1572 = vmatprep.subr.mxu0 0.0
        %1573 = vmatpush1.msra.mxu0 0.0
        %1574 = vmatprep.subr.mxu0 0.0
        %1575 = vmatpush1.msra.mxu0 0.0
        %1576 = vmatprep.subr.mxu0 0.0
        %1577 = vmatpush1.msra.mxu0 0.0
        %1578 = vmatprep.subr.mxu0 0.0
        %1579 = vmatpush1.msra.mxu0 0.0
        %1580 = vmatprep.subr.mxu0 0.0
        %1581 = vmatpush1.msra.mxu0 0.0
        %1582 = vmatprep.subr.mxu0 0.0
        %1583 = vmatpush1.msra.mxu0 0.0
        %1584 = vmatprep.subr.mxu0 0.0
        %1585 = vmatpush1.msra.mxu0 0.0
        %1586 = vmatprep.subr.mxu0 0.0
        %1587 = vmatpush1.msra.mxu0 0.0
        %1588 = vmatprep.subr.mxu0 0.0
        %1589 = vmatpush1.msra.mxu0 0.0
        %1590 = vmatprep.subr.mxu0 0.0
        %1591 = vmatpush1.msra.mxu0 0.0
        %1592 = vmatprep.subr.mxu0 0.0
        %1593 = vmatpush1.msra.mxu0 0.0
        %1594 = vmatprep.subr.mxu0 0.0
        %1595 = vmatpush1.msra.mxu0 0.0
        %1596 = vmatprep.subr.mxu0 0.0
        %1597 = vmatpush1.msra.mxu0 0.0
        %1598 = vmatprep.subr.mxu0 0.0
        %1599 = vmatpush1.msra.mxu0 0.0
        %1600 = vmatprep.subr.mxu0 0.0
        %1601 = vmatpush1.msra.mxu0 0.0
        %1602 = vmatprep.subr.mxu0 0.0
        %1603 = vmatpush1.msra.mxu0 0.0
        %1604 = vmatprep.mubr.f32.mxu0 0.0
        %v1605 = vand.u32 %v1224, 4294901760
        %v1606 = vsub.f32 %v1224, %v1605
        %1607 = vmatmul.mubr.f32.gmra.mrb[0].mxu0 %v1606
        %v1608 = vpop.f32.mrb[0].mxu0
        %v1609 = vadd.f32 %v1485, %v1608
        %v1610 = vpop.f32.mrb[0].mxu0
        %1611 = vmatprep.mubr.f32.mxu0 0.0
        %v1612 = vand.u32 %v1227, 4294901760
        %v1613 = vsub.f32 %v1227, %v1612
        %1614 = vmatmul.mubr.f32.gmra.mrb[0].mxu0 %v1613
        %v1615 = vpop.f32.mrb[0].mxu0
        %v1616 = vadd.f32 %v1491, %v1615
        %v1617 = vpop.f32.mrb[0].mxu0
        %1618 = vmatprep.mubr.f32.mxu0 0.0
        %v1619 = vand.u32 %v1230, 4294901760
        %v1620 = vsub.f32 %v1230, %v1619
        %1621 = vmatmul.mubr.f32.gmra.mrb[0].mxu0 %v1620
        %v1622 = vpop.f32.mrb[0].mxu0
        %v1623 = vadd.f32 %v1497, %v1622
        %v1624 = vpop.f32.mrb[0].mxu0
        %1625 = vmatprep.mubr.f32.mxu0 0.0
        %v1626 = vand.u32 %v1233, 4294901760
        %v1627 = vsub.f32 %v1233, %v1626
        %1628 = vmatmul.mubr.f32.gmra.mrb[0].mxu0 %v1627
        %v1629 = vpop.f32.mrb[0].mxu0
        %v1630 = vadd.f32 %v1503, %v1629
        %v1631 = vpop.f32.mrb[0].mxu0
        %1632 = vmatprep.mubr.f32.mxu0 0.0
        %v1633 = vand.u32 %v1236, 4294901760
        %v1634 = vsub.f32 %v1236, %v1633
        %1635 = vmatmul.mubr.f32.gmra.mrb[0].mxu0 %v1634
        %v1636 = vpop.f32.mrb[0].mxu0
        %v1637 = vadd.f32 %v1509, %v1636
        %v1638 = vpop.f32.mrb[0].mxu0
        %1639 = vmatprep.mubr.f32.mxu0 0.0
        %v1640 = vand.u32 %v1239, 4294901760
        %v1641 = vsub.f32 %v1239, %v1640
        %1642 = vmatmul.mubr.f32.gmra.mrb[0].mxu0 %v1641
        %v1643 = vpop.f32.mrb[0].mxu0
        %v1644 = vadd.f32 %v1515, %v1643
        %v1645 = vpop.f32.mrb[0].mxu0
        %1646 = vmatprep.mubr.f32.mxu0 0.0
        %v1647 = vand.u32 %v1242, 4294901760
        %v1648 = vsub.f32 %v1242, %v1647
        %1649 = vmatmul.mubr.f32.gmra.mrb[0].mxu0 %v1648
        %v1650 = vpop.f32.mrb[0].mxu0
        %v1651 = vadd.f32 %v1521, %v1650
        %v1652 = vpop.f32.mrb[0].mxu0
        %1653 = vmatprep.mubr.f32.mxu0 0.0
        %v1654 = vand.u32 %v1245, 4294901760
        %v1655 = vsub.f32 %v1245, %v1654
        %1656 = vmatmul.mubr.f32.gmra.mrb[0].mxu0 %v1655
        %v1657 = vpop.f32.mrb[0].mxu0
        %v1658 = vadd.f32 %v1527, %v1657
        %v1659 = vpop.f32.mrb[0].mxu0
        %1660 = vmatprep.mubr.f32.mxu0 0.0
        %v1661 = vand.u32 %v1248, 4294901760
        %v1662 = vsub.f32 %v1248, %v1661
        %1663 = vmatmul.mubr.f32.gmra.mrb[0].mxu0 %v1662
        %v1664 = vpop.f32.mrb[0].mxu0
        %v1665 = vadd.f32 %v1533, %v1664
        %v1666 = vpop.f32.mrb[0].mxu0
        %1667 = vdwg.mxu0
        %1668 = vmatprep.subr.mxu0 0.0
        %v1669 = vand.u32 %v1221, 4294901760
        %1670 = vmatpush1.msra.mxu0 %v1669
        %1671 = vmatprep.subr.mxu0 0.0
        %v1672 = vand.u32 %v1222, 4294901760
        %1673 = vmatpush1.msra.mxu0 %v1672
        %1674 = vmatprep.subr.mxu0 0.0
        %1675 = vmatpush1.msra.mxu0 0.0
        %1676 = vmatprep.subr.mxu0 0.0
        %1677 = vmatpush1.msra.mxu0 0.0
        %1678 = vmatprep.subr.mxu0 0.0
        %1679 = vmatpush1.msra.mxu0 0.0
        %1680 = vmatprep.subr.mxu0 0.0
        %1681 = vmatpush1.msra.mxu0 0.0
        %1682 = vmatprep.subr.mxu0 0.0
        %1683 = vmatpush1.msra.mxu0 0.0
        %1684 = vmatprep.subr.mxu0 0.0
        %1685 = vmatpush1.msra.mxu0 0.0
        %1686 = vmatprep.subr.mxu0 0.0
        %1687 = vmatpush1.msra.mxu0 0.0
        %1688 = vmatprep.subr.mxu0 0.0
        %1689 = vmatpush1.msra.mxu0 0.0
        %1690 = vmatprep.subr.mxu0 0.0
        %1691 = vmatpush1.msra.mxu0 0.0
        %1692 = vmatprep.subr.mxu0 0.0
        %1693 = vmatpush1.msra.mxu0 0.0
        %1694 = vmatprep.subr.mxu0 0.0
        %1695 = vmatpush1.msra.mxu0 0.0
        %1696 = vmatprep.subr.mxu0 0.0
        %1697 = vmatpush1.msra.mxu0 0.0
        %1698 = vmatprep.subr.mxu0 0.0
        %1699 = vmatpush1.msra.mxu0 0.0
        %1700 = vmatprep.subr.mxu0 0.0
        %1701 = vmatpush1.msra.mxu0 0.0
        %1702 = vmatprep.subr.mxu0 0.0
        %1703 = vmatpush1.msra.mxu0 0.0
        %1704 = vmatprep.subr.mxu0 0.0
        %1705 = vmatpush1.msra.mxu0 0.0
        %1706 = vmatprep.subr.mxu0 0.0
        %1707 = vmatpush1.msra.mxu0 0.0
        %1708 = vmatprep.subr.mxu0 0.0
        %1709 = vmatpush1.msra.mxu0 0.0
        %1710 = vmatprep.subr.mxu0 0.0
        %1711 = vmatpush1.msra.mxu0 0.0
        %1712 = vmatprep.subr.mxu0 0.0
        %1713 = vmatpush1.msra.mxu0 0.0
        %1714 = vmatprep.subr.mxu0 0.0
        %1715 = vmatpush1.msra.mxu0 0.0
        %1716 = vmatprep.subr.mxu0 0.0
        %1717 = vmatpush1.msra.mxu0 0.0
        %1718 = vmatprep.subr.mxu0 0.0
        %1719 = vmatpush1.msra.mxu0 0.0
        %1720 = vmatprep.subr.mxu0 0.0
        %1721 = vmatpush1.msra.mxu0 0.0
        %1722 = vmatprep.subr.mxu0 0.0
        %1723 = vmatpush1.msra.mxu0 0.0
        %1724 = vmatprep.subr.mxu0 0.0
        %1725 = vmatpush1.msra.mxu0 0.0
        %1726 = vmatprep.subr.mxu0 0.0
        %1727 = vmatpush1.msra.mxu0 0.0
        %1728 = vmatprep.subr.mxu0 0.0
        %1729 = vmatpush1.msra.mxu0 0.0
        %1730 = vmatprep.subr.mxu0 0.0
        %1731 = vmatpush1.msra.mxu0 0.0
        %1732 = vmatprep.subr.mxu0 0.0
        %1733 = vmatpush1.msra.mxu0 0.0
        %1734 = vmatprep.mubr.f32.mxu0 0.0
        %v1735 = vand.u32 %v1224, 4294901760
        %v1736 = vsub.f32 %v1224, %v1735
        %v1737 = vand.u32 %v1736, 4294901760
        %1738 = vmatmul.mubr.f32.gmra.mrb[0].mxu0 %v1737
        %v1739 = vpop.f32.mrb[0].mxu0
        %v1740 = vadd.f32 %v1609, %v1739
        %v1741 = vpop.f32.mrb[0].mxu0
        %1742 = vmatprep.mubr.f32.mxu0 0.0
        %v1743 = vand.u32 %v1227, 4294901760
        %v1744 = vsub.f32 %v1227, %v1743
        %v1745 = vand.u32 %v1744, 4294901760
        %1746 = vmatmul.mubr.f32.gmra.mrb[0].mxu0 %v1745
        %v1747 = vpop.f32.mrb[0].mxu0
        %v1748 = vadd.f32 %v1616, %v1747
        %v1749 = vpop.f32.mrb[0].mxu0
        %1750 = vmatprep.mubr.f32.mxu0 0.0
        %v1751 = vand.u32 %v1230, 4294901760
        %v1752 = vsub.f32 %v1230, %v1751
        %v1753 = vand.u32 %v1752, 4294901760
        %1754 = vmatmul.mubr.f32.gmra.mrb[0].mxu0 %v1753
        %v1755 = vpop.f32.mrb[0].mxu0
        %v1756 = vadd.f32 %v1623, %v1755
        %v1757 = vpop.f32.mrb[0].mxu0
        %1758 = vmatprep.mubr.f32.mxu0 0.0
        %v1759 = vand.u32 %v1233, 4294901760
        %v1760 = vsub.f32 %v1233, %v1759
        %v1761 = vand.u32 %v1760, 4294901760
        %1762 = vmatmul.mubr.f32.gmra.mrb[0].mxu0 %v1761
        %v1763 = vpop.f32.mrb[0].mxu0
        %v1764 = vadd.f32 %v1630, %v1763
        %v1765 = vpop.f32.mrb[0].mxu0
        %1766 = vmatprep.mubr.f32.mxu0 0.0
        %v1767 = vand.u32 %v1236, 4294901760
        %v1768 = vsub.f32 %v1236, %v1767
        %v1769 = vand.u32 %v1768, 4294901760
        %1770 = vmatmul.mubr.f32.gmra.mrb[0].mxu0 %v1769
        %v1771 = vpop.f32.mrb[0].mxu0
        %v1772 = vadd.f32 %v1637, %v1771
        %v1773 = vpop.f32.mrb[0].mxu0
        %1774 = vmatprep.mubr.f32.mxu0 0.0
        %v1775 = vand.u32 %v1239, 4294901760
        %v1776 = vsub.f32 %v1239, %v1775
        %v1777 = vand.u32 %v1776, 4294901760
        %1778 = vmatmul.mubr.f32.gmra.mrb[0].mxu0 %v1777
        %v1779 = vpop.f32.mrb[0].mxu0
        %v1780 = vadd.f32 %v1644, %v1779
        %v1781 = vpop.f32.mrb[0].mxu0
        %1782 = vmatprep.mubr.f32.mxu0 0.0
        %v1783 = vand.u32 %v1242, 4294901760
        %v1784 = vsub.f32 %v1242, %v1783
        %v1785 = vand.u32 %v1784, 4294901760
        %1786 = vmatmul.mubr.f32.gmra.mrb[0].mxu0 %v1785
        %v1787 = vpop.f32.mrb[0].mxu0
        %v1788 = vadd.f32 %v1651, %v1787
        %v1789 = vpop.f32.mrb[0].mxu0
        %1790 = vmatprep.mubr.f32.mxu0 0.0
        %v1791 = vand.u32 %v1245, 4294901760
        %v1792 = vsub.f32 %v1245, %v1791
        %v1793 = vand.u32 %v1792, 4294901760
        %1794 = vmatmul.mubr.f32.gmra.mrb[0].mxu0 %v1793
        %v1795 = vpop.f32.mrb[0].mxu0
        %v1796 = vadd.f32 %v1658, %v1795
        %v1797 = vpop.f32.mrb[0].mxu0
        %1798 = vmatprep.mubr.f32.mxu0 0.0
        %v1799 = vand.u32 %v1248, 4294901760
        %v1800 = vsub.f32 %v1248, %v1799
        %v1801 = vand.u32 %v1800, 4294901760
        %1802 = vmatmul.mubr.f32.gmra.mrb[0].mxu0 %v1801
        %v1803 = vpop.f32.mrb[0].mxu0
        %v1804 = vadd.f32 %v1665, %v1803
        %v1805 = vpop.f32.mrb[0].mxu0
        %1806 = vdwg.mxu0
        %1807 = vmatprep.subr.mxu0 0.0
        %v1808 = vand.u32 %v1221, 4294901760
        %v1809 = vsub.f32 %v1221, %v1808
        %v1810 = vand.u32 %v1809, 4294901760
        %1811 = vmatpush1.msra.mxu0 %v1810
        %1812 = vmatprep.subr.mxu0 0.0
        %v1813 = vand.u32 %v1222, 4294901760
        %v1814 = vsub.f32 %v1222, %v1813
        %v1815 = vand.u32 %v1814, 4294901760
        %1816 = vmatpush1.msra.mxu0 %v1815
        %1817 = vmatprep.subr.mxu0 0.0
        %1818 = vmatpush1.msra.mxu0 0.0
        %1819 = vmatprep.subr.mxu0 0.0
        %1820 = vmatpush1.msra.mxu0 0.0
        %1821 = vmatprep.subr.mxu0 0.0
        %1822 = vmatpush1.msra.mxu0 0.0
        %1823 = vmatprep.subr.mxu0 0.0
        %1824 = vmatpush1.msra.mxu0 0.0
        %1825 = vmatprep.subr.mxu0 0.0
        %1826 = vmatpush1.msra.mxu0 0.0
        %1827 = vmatprep.subr.mxu0 0.0
        %1828 = vmatpush1.msra.mxu0 0.0
        %1829 = vmatprep.subr.mxu0 0.0
        %1830 = vmatpush1.msra.mxu0 0.0
        %1831 = vmatprep.subr.mxu0 0.0
        %1832 = vmatpush1.msra.mxu0 0.0
        %1833 = vmatprep.subr.mxu0 0.0
        %1834 = vmatpush1.msra.mxu0 0.0
        %1835 = vmatprep.subr.mxu0 0.0
        %1836 = vmatpush1.msra.mxu0 0.0
        %1837 = vmatprep.subr.mxu0 0.0
        %1838 = vmatpush1.msra.mxu0 0.0
        %1839 = vmatprep.subr.mxu0 0.0
        %1840 = vmatpush1.msra.mxu0 0.0
        %1841 = vmatprep.subr.mxu0 0.0
        %1842 = vmatpush1.msra.mxu0 0.0
        %1843 = vmatprep.subr.mxu0 0.0
        %1844 = vmatpush1.msra.mxu0 0.0
        %1845 = vmatprep.subr.mxu0 0.0
        %1846 = vmatpush1.msra.mxu0 0.0
        %1847 = vmatprep.subr.mxu0 0.0
        %1848 = vmatpush1.msra.mxu0 0.0
        %1849 = vmatprep.subr.mxu0 0.0
        %1850 = vmatpush1.msra.mxu0 0.0
        %1851 = vmatprep.subr.mxu0 0.0
        %1852 = vmatpush1.msra.mxu0 0.0
        %1853 = vmatprep.subr.mxu0 0.0
        %1854 = vmatpush1.msra.mxu0 0.0
        %1855 = vmatprep.subr.mxu0 0.0
        %1856 = vmatpush1.msra.mxu0 0.0
        %1857 = vmatprep.subr.mxu0 0.0
        %1858 = vmatpush1.msra.mxu0 0.0
        %1859 = vmatprep.subr.mxu0 0.0
        %1860 = vmatpush1.msra.mxu0 0.0
        %1861 = vmatprep.subr.mxu0 0.0
        %1862 = vmatpush1.msra.mxu0 0.0
        %1863 = vmatprep.subr.mxu0 0.0
        %1864 = vmatpush1.msra.mxu0 0.0
        %1865 = vmatprep.subr.mxu0 0.0
        %1866 = vmatpush1.msra.mxu0 0.0
        %1867 = vmatprep.subr.mxu0 0.0
        %1868 = vmatpush1.msra.mxu0 0.0
        %1869 = vmatprep.subr.mxu0 0.0
        %1870 = vmatpush1.msra.mxu0 0.0
        %1871 = vmatprep.subr.mxu0 0.0
        %1872 = vmatpush1.msra.mxu0 0.0
        %1873 = vmatprep.subr.mxu0 0.0
        %1874 = vmatpush1.msra.mxu0 0.0
        %1875 = vmatprep.subr.mxu0 0.0
        %1876 = vmatpush1.msra.mxu0 0.0
        %1877 = vmatprep.mubr.f32.mxu0 0.0
        %v1878 = vand.u32 %v1224, 4294901760
        %1879 = vmatmul.mubr.f32.gmra.mrb[0].mxu0 %v1878
        %v1880 = vpop.f32.mrb[0].mxu0
        %v1881 = vadd.f32 %v1740, %v1880
        %v1882 = vpop.f32.mrb[0].mxu0
        %1883 = vmatprep.mubr.f32.mxu0 0.0
        %v1884 = vand.u32 %v1227, 4294901760
        %1885 = vmatmul.mubr.f32.gmra.mrb[0].mxu0 %v1884
        %v1886 = vpop.f32.mrb[0].mxu0
        %v1887 = vadd.f32 %v1748, %v1886
        %v1888 = vpop.f32.mrb[0].mxu0
        %1889 = vmatprep.mubr.f32.mxu0 0.0
        %v1890 = vand.u32 %v1230, 4294901760
        %1891 = vmatmul.mubr.f32.gmra.mrb[0].mxu0 %v1890
        %v1892 = vpop.f32.mrb[0].mxu0
        %v1893 = vadd.f32 %v1756, %v1892
        %v1894 = vpop.f32.mrb[0].mxu0
        %1895 = vmatprep.mubr.f32.mxu0 0.0
        %v1896 = vand.u32 %v1233, 4294901760
        %1897 = vmatmul.mubr.f32.gmra.mrb[0].mxu0 %v1896
        %v1898 = vpop.f32.mrb[0].mxu0
        %v1899 = vadd.f32 %v1764, %v1898
        %v1900 = vpop.f32.mrb[0].mxu0
        %1901 = vmatprep.mubr.f32.mxu0 0.0
        %v1902 = vand.u32 %v1236, 4294901760
        %1903 = vmatmul.mubr.f32.gmra.mrb[0].mxu0 %v1902
        %v1904 = vpop.f32.mrb[0].mxu0
        %v1905 = vadd.f32 %v1772, %v1904
        %v1906 = vpop.f32.mrb[0].mxu0
        %1907 = vmatprep.mubr.f32.mxu0 0.0
        %v1908 = vand.u32 %v1239, 4294901760
        %1909 = vmatmul.mubr.f32.gmra.mrb[0].mxu0 %v1908
        %v1910 = vpop.f32.mrb[0].mxu0
        %v1911 = vadd.f32 %v1780, %v1910
        %v1912 = vpop.f32.mrb[0].mxu0
        %1913 = vmatprep.mubr.f32.mxu0 0.0
        %v1914 = vand.u32 %v1242, 4294901760
        %1915 = vmatmul.mubr.f32.gmra.mrb[0].mxu0 %v1914
        %v1916 = vpop.f32.mrb[0].mxu0
        %v1917 = vadd.f32 %v1788, %v1916
        %v1918 = vpop.f32.mrb[0].mxu0
        %1919 = vmatprep.mubr.f32.mxu0 0.0
        %v1920 = vand.u32 %v1245, 4294901760
        %1921 = vmatmul.mubr.f32.gmra.mrb[0].mxu0 %v1920
        %v1922 = vpop.f32.mrb[0].mxu0
        %v1923 = vadd.f32 %v1796, %v1922
        %v1924 = vpop.f32.mrb[0].mxu0
        %1925 = vmatprep.mubr.f32.mxu0 0.0
        %v1926 = vand.u32 %v1248, 4294901760
        %1927 = vmatmul.mubr.f32.gmra.mrb[0].mxu0 %v1926
        %v1928 = vpop.f32.mrb[0].mxu0
        %v1929 = vadd.f32 %v1804, %v1928
        %v1930 = vpop.f32.mrb[0].mxu0
        %1931 = vdwg.mxu0
        %1932 = vmatprep.subr.mxu0 0.0
        %v1933 = vand.u32 %v1221, 4294901760
        %1934 = vmatpush1.msra.mxu0 %v1933
        %1935 = vmatprep.subr.mxu0 0.0
        %v1936 = vand.u32 %v1222, 4294901760
        %1937 = vmatpush1.msra.mxu0 %v1936
        %1938 = vmatprep.subr.mxu0 0.0
        %1939 = vmatpush1.msra.mxu0 0.0
        %1940 = vmatprep.subr.mxu0 0.0
        %1941 = vmatpush1.msra.mxu0 0.0
        %1942 = vmatprep.subr.mxu0 0.0
        %1943 = vmatpush1.msra.mxu0 0.0
        %1944 = vmatprep.subr.mxu0 0.0
        %1945 = vmatpush1.msra.mxu0 0.0
        %1946 = vmatprep.subr.mxu0 0.0
        %1947 = vmatpush1.msra.mxu0 0.0
        %1948 = vmatprep.subr.mxu0 0.0
        %1949 = vmatpush1.msra.mxu0 0.0
        %1950 = vmatprep.subr.mxu0 0.0
        %1951 = vmatpush1.msra.mxu0 0.0
        %1952 = vmatprep.subr.mxu0 0.0
        %1953 = vmatpush1.msra.mxu0 0.0
        %1954 = vmatprep.subr.mxu0 0.0
        %1955 = vmatpush1.msra.mxu0 0.0
        %1956 = vmatprep.subr.mxu0 0.0
        %1957 = vmatpush1.msra.mxu0 0.0
        %1958 = vmatprep.subr.mxu0 0.0
        %1959 = vmatpush1.msra.mxu0 0.0
        %1960 = vmatprep.subr.mxu0 0.0
        %1961 = vmatpush1.msra.mxu0 0.0
        %1962 = vmatprep.subr.mxu0 0.0
        %1963 = vmatpush1.msra.mxu0 0.0
        %1964 = vmatprep.subr.mxu0 0.0
        %1965 = vmatpush1.msra.mxu0 0.0
        %1966 = vmatprep.subr.mxu0 0.0
        %1967 = vmatpush1.msra.mxu0 0.0
        %1968 = vmatprep.subr.mxu0 0.0
        %1969 = vmatpush1.msra.mxu0 0.0
        %1970 = vmatprep.subr.mxu0 0.0
        %1971 = vmatpush1.msra.mxu0 0.0
        %1972 = vmatprep.subr.mxu0 0.0
        %1973 = vmatpush1.msra.mxu0 0.0
        %1974 = vmatprep.subr.mxu0 0.0
        %1975 = vmatpush1.msra.mxu0 0.0
        %1976 = vmatprep.subr.mxu0 0.0
        %1977 = vmatpush1.msra.mxu0 0.0
        %1978 = vmatprep.subr.mxu0 0.0
        %1979 = vmatpush1.msra.mxu0 0.0
        %1980 = vmatprep.subr.mxu0 0.0
        %1981 = vmatpush1.msra.mxu0 0.0
        %1982 = vmatprep.subr.mxu0 0.0
        %1983 = vmatpush1.msra.mxu0 0.0
        %1984 = vmatprep.subr.mxu0 0.0
        %1985 = vmatpush1.msra.mxu0 0.0
        %1986 = vmatprep.subr.mxu0 0.0
        %1987 = vmatpush1.msra.mxu0 0.0
        %1988 = vmatprep.subr.mxu0 0.0
        %1989 = vmatpush1.msra.mxu0 0.0
        %1990 = vmatprep.subr.mxu0 0.0
        %1991 = vmatpush1.msra.mxu0 0.0
        %1992 = vmatprep.subr.mxu0 0.0
        %1993 = vmatpush1.msra.mxu0 0.0
        %1994 = vmatprep.subr.mxu0 0.0
        %1995 = vmatpush1.msra.mxu0 0.0
        %1996 = vmatprep.subr.mxu0 0.0
        %1997 = vmatpush1.msra.mxu0 0.0
        %1998 = vmatprep.mubr.f32.mxu0 0.0
        %v1999 = vand.u32 %v1224, 4294901760
        %2000 = vmatmul.mubr.f32.gmra.mrb[0].mxu0 %v1999
        %v2001 = vpop.f32.mrb[0].mxu0
        %v2002 = vadd.f32 %v1881, %v2001
        %v2003 = vpop.f32.mrb[0].mxu0
        %2004 = vmatprep.mubr.f32.mxu0 0.0
        %v2005 = vand.u32 %v1227, 4294901760
        %2006 = vmatmul.mubr.f32.gmra.mrb[0].mxu0 %v2005
        %v2007 = vpop.f32.mrb[0].mxu0
        %v2008 = vadd.f32 %v1887, %v2007
        %v2009 = vpop.f32.mrb[0].mxu0
        %2010 = vmatprep.mubr.f32.mxu0 0.0
        %v2011 = vand.u32 %v1230, 4294901760
        %2012 = vmatmul.mubr.f32.gmra.mrb[0].mxu0 %v2011
        %v2013 = vpop.f32.mrb[0].mxu0
        %v2014 = vadd.f32 %v1893, %v2013
        %v2015 = vpop.f32.mrb[0].mxu0
        %2016 = vmatprep.mubr.f32.mxu0 0.0
        %v2017 = vand.u32 %v1233, 4294901760
        %2018 = vmatmul.mubr.f32.gmra.mrb[0].mxu0 %v2017
        %v2019 = vpop.f32.mrb[0].mxu0
        %v2020 = vadd.f32 %v1899, %v2019
        %v2021 = vpop.f32.mrb[0].mxu0
        %2022 = vmatprep.mubr.f32.mxu0 0.0
        %v2023 = vand.u32 %v1236, 4294901760
        %2024 = vmatmul.mubr.f32.gmra.mrb[0].mxu0 %v2023
        %v2025 = vpop.f32.mrb[0].mxu0
        %v2026 = vadd.f32 %v1905, %v2025
        %v2027 = vpop.f32.mrb[0].mxu0
        %2028 = vmatprep.mubr.f32.mxu0 0.0
        %v2029 = vand.u32 %v1239, 4294901760
        %2030 = vmatmul.mubr.f32.gmra.mrb[0].mxu0 %v2029
        %v2031 = vpop.f32.mrb[0].mxu0
        %v2032 = vadd.f32 %v1911, %v2031
        %v2033 = vpop.f32.mrb[0].mxu0
        %2034 = vmatprep.mubr.f32.mxu0 0.0
        %v2035 = vand.u32 %v1242, 4294901760
        %2036 = vmatmul.mubr.f32.gmra.mrb[0].mxu0 %v2035
        %v2037 = vpop.f32.mrb[0].mxu0
        %v2038 = vadd.f32 %v1917, %v2037
        %v2039 = vpop.f32.mrb[0].mxu0
        %2040 = vmatprep.mubr.f32.mxu0 0.0
        %v2041 = vand.u32 %v1245, 4294901760
        %2042 = vmatmul.mubr.f32.gmra.mrb[0].mxu0 %v2041
        %v2043 = vpop.f32.mrb[0].mxu0
        %v2044 = vadd.f32 %v1923, %v2043
        %v2045 = vpop.f32.mrb[0].mxu0
        %2046 = vmatprep.mubr.f32.mxu0 0.0
        %v2047 = vand.u32 %v1248, 4294901760
        %2048 = vmatmul.mubr.f32.gmra.mrb[0].mxu0 %v2047
        %v2049 = vpop.f32.mrb[0].mxu0
        %v2050 = vadd.f32 %v1929, %v2049
        %v2051 = vpop.f32.mrb[0].mxu0
        %2052 = vdwg.mxu0
        %s2053 = scalar_lea.vmem [#allocation4], 72
        %2054 = vst.msk [vmem:[%s2053] sm:$0xff] %vm1191, %v2002
        %2055 = vst.msk [vmem:[%s2053 + $0x8] sm:$0xff] %vm1191, %v2008
        %2056 = vst.msk [vmem:[%s2053 + $0x10] sm:$0xff] %vm1191, %v2014
        %2057 = vst.msk [vmem:[%s2053 + $0x18] sm:$0xff] %vm1191, %v2020
        %2058 = vst.msk [vmem:[%s2053 + $0x20] sm:$0xff] %vm1191, %v2026
        %2059 = vst.msk [vmem:[%s2053 + $0x28] sm:$0xff] %vm1191, %v2032
        %2060 = vst.msk [vmem:[%s2053 + $0x30] sm:$0xff] %vm1191, %v2038
        %2061 = vst.msk [vmem:[%s2053 + $0x38] sm:$0xff] %vm1191, %v2044
        %2062 = vst.msk [vmem:[%s2053 + $0x40] sm:$0x1f] %vm1200, %v2050
        %s2063 = scalar_lea.vmem [#allocation2], 72
        %2064 = vst.msk [vmem:[%s2063] sm:$0xff] %vm1191, %v2002
        %2065 = vst.msk [vmem:[%s2063 + $0x8] sm:$0xff] %vm1191, %v2008
        %2066 = vst.msk [vmem:[%s2063 + $0x10] sm:$0xff] %vm1191, %v2014
        %2067 = vst.msk [vmem:[%s2063 + $0x18] sm:$0xff] %vm1191, %v2020
        %2068 = vst.msk [vmem:[%s2063 + $0x20] sm:$0xff] %vm1191, %v2026
        %2069 = vst.msk [vmem:[%s2063 + $0x28] sm:$0xff] %vm1191, %v2032
        %2070 = vst.msk [vmem:[%s2063 + $0x30] sm:$0xff] %vm1191, %v2038
        %2071 = vst.msk [vmem:[%s2063 + $0x38] sm:$0xff] %vm1191, %v2044
        %2072 = vst.msk [vmem:[%s2063 + $0x40] sm:$0x1f] %vm1200, %v2050
        %2073 = vst.msk [vmem:[#allocation3] sm:$0xff] %vm1191, 0.0
        %2074 = vst.msk [vmem:[#allocation3 + $0x8] sm:$0xff] %vm1191, 0.0
        %2075 = vst.msk [vmem:[#allocation3 + $0x10] sm:$0xff] %vm1191, 0.0
        %2076 = vst.msk [vmem:[#allocation3 + $0x18] sm:$0xff] %vm1191, 0.0
        %2077 = vst.msk [vmem:[#allocation3 + $0x20] sm:$0xff] %vm1191, 0.0
        %2078 = vst.msk [vmem:[#allocation3 + $0x28] sm:$0xff] %vm1191, 0.0
        %2079 = vst.msk [vmem:[#allocation3 + $0x30] sm:$0xff] %vm1191, 0.0
        %2080 = vst.msk [vmem:[#allocation3 + $0x38] sm:$0xff] %vm1191, 0.0
        %2081 = vst.msk [vmem:[#allocation3 + $0x40] sm:$0x1f] %vm1200, 0.0
        %2082 = vst.msk [vmem:[#allocation3 + $0x48] sm:$0xff] %vm1191, 0.0
        %2083 = vst.msk [vmem:[#allocation3 + $0x50] sm:$0xff] %vm1191, 0.0
        %2084 = vst.msk [vmem:[#allocation3 + $0x58] sm:$0xff] %vm1191, 0.0
        %2085 = vst.msk [vmem:[#allocation3 + $0x60] sm:$0xff] %vm1191, 0.0
        %2086 = vst.msk [vmem:[#allocation3 + $0x68] sm:$0xff] %vm1191, 0.0
        %2087 = vst.msk [vmem:[#allocation3 + $0x70] sm:$0xff] %vm1191, 0.0
        %2088 = vst.msk [vmem:[#allocation3 + $0x78] sm:$0xff] %vm1191, 0.0
        %2089 = vst.msk [vmem:[#allocation3 + $0x80] sm:$0xff] %vm1191, 0.0
        %2090 = vst.msk [vmem:[#allocation3 + $0x88] sm:$0x1f] %vm1200, 0.0
      $region52: #{gcn_forward.1} parent=47 // pred_fallthru
        _
      // Predicated region
      $region53: #{gcn_forward.1} parent=47 // pred_check
        _
      $region54: #{gcn_forward.1} parent=47 // pred_check_branch
        %2092 = sbr.rel (%p339) target = $region56
      $region55: #{gcn_forward.1} parent=47 // pred_region
        %v2093 = vld [vmem:[#allocation2] sm:$0xff]
        %v2094 = vld [vmem:[#allocation2 + $0x8] sm:$0xff]
        %v2095 = vld [vmem:[#allocation2 + $0x10] sm:$0xff]
        %v2096 = vld [vmem:[#allocation2 + $0x18] sm:$0xff]
        %v2097 = vld [vmem:[#allocation2 + $0x20] sm:$0xff]
        %v2098 = vld [vmem:[#allocation2 + $0x28] sm:$0xff]
        %v2099 = vld [vmem:[#allocation2 + $0x30] sm:$0xff]
        %v2100 = vld [vmem:[#allocation2 + $0x38] sm:$0xff]
        %v2101 = vld [vmem:[#allocation2 + $0x40] sm:$0x1f]
        %v2102 = vld [vmem:[#allocation2 + $0x48] sm:$0xff]
        %v2103 = vld [vmem:[#allocation2 + $0x50] sm:$0xff]
        %v2104 = vld [vmem:[#allocation2 + $0x58] sm:$0xff]
        %v2105 = vld [vmem:[#allocation2 + $0x60] sm:$0xff]
        %v2106 = vld [vmem:[#allocation2 + $0x68] sm:$0xff]
        %v2107 = vld [vmem:[#allocation2 + $0x70] sm:$0xff]
        %v2108 = vld [vmem:[#allocation2 + $0x78] sm:$0xff]
        %v2109 = vld [vmem:[#allocation2 + $0x80] sm:$0xff]
        %v2110 = vld [vmem:[#allocation2 + $0x88] sm:$0x1f]
        %vm2111 = vcmask 261120
        %2112 = vst.msk [vmem:[#allocation3] sm:$0xff] %vm2111, %v2093
        %2113 = vst.msk [vmem:[#allocation3 + $0x8] sm:$0xff] %vm2111, %v2094
        %2114 = vst.msk [vmem:[#allocation3 + $0x10] sm:$0xff] %vm2111, %v2095
        %2115 = vst.msk [vmem:[#allocation3 + $0x18] sm:$0xff] %vm2111, %v2096
        %2116 = vst.msk [vmem:[#allocation3 + $0x20] sm:$0xff] %vm2111, %v2097
        %2117 = vst.msk [vmem:[#allocation3 + $0x28] sm:$0xff] %vm2111, %v2098
        %2118 = vst.msk [vmem:[#allocation3 + $0x30] sm:$0xff] %vm2111, %v2099
        %2119 = vst.msk [vmem:[#allocation3 + $0x38] sm:$0xff] %vm2111, %v2100
        %vm2120 = vcmask 258048
        %2121 = vst.msk [vmem:[#allocation3 + $0x40] sm:$0x1f] %vm2120, %v2101
        %2122 = vst.msk [vmem:[#allocation3 + $0x48] sm:$0xff] %vm2111, %v2102
        %2123 = vst.msk [vmem:[#allocation3 + $0x50] sm:$0xff] %vm2111, %v2103
        %2124 = vst.msk [vmem:[#allocation3 + $0x58] sm:$0xff] %vm2111, %v2104
        %2125 = vst.msk [vmem:[#allocation3 + $0x60] sm:$0xff] %vm2111, %v2105
        %2126 = vst.msk [vmem:[#allocation3 + $0x68] sm:$0xff] %vm2111, %v2106
        %2127 = vst.msk [vmem:[#allocation3 + $0x70] sm:$0xff] %vm2111, %v2107
        %2128 = vst.msk [vmem:[#allocation3 + $0x78] sm:$0xff] %vm2111, %v2108
        %2129 = vst.msk [vmem:[#allocation3 + $0x80] sm:$0xff] %vm2111, %v2109
        %2130 = vst.msk [vmem:[#allocation3 + $0x88] sm:$0x1f] %vm2120, %v2110
      $region56: #{gcn_forward.1} parent=47 // pred_fallthru
        _
      %v2131 = vld [vmem:[%s308] sm:$0xff]
      %v2132 = vld [vmem:[%s308 + $0x8] sm:$0xff]
      %v2133 = vld [vmem:[%s308 + $0x10] sm:$0xff]
      %v2134 = vld [vmem:[%s308 + $0x18] sm:$0xff]
      %v2135 = vld [vmem:[%s308 + $0x20] sm:$0xff]
      %v2136 = vld [vmem:[%s308 + $0x28] sm:$0xff]
      %v2137 = vld [vmem:[%s308 + $0x30] sm:$0xff]
      %v2138 = vld [vmem:[%s308 + $0x38] sm:$0xff]
      %v2139 = vld [vmem:[%s308 + $0x40] sm:$0x1f]
      %v2140 = vld [vmem:[%s313] sm:$0xff]
      %v2141 = vld [vmem:[%s313 + $0x8] sm:$0xff]
      %v2142 = vld [vmem:[%s313 + $0x10] sm:$0xff]
      %v2143 = vld [vmem:[%s313 + $0x18] sm:$0xff]
      %v2144 = vld [vmem:[%s318] sm:$0xff]
      %v2145 = vld [vmem:[%s318 + $0x8] sm:$0xff]
      %v2146 = vld [vmem:[%s318 + $0x10] sm:$0xff]
      %v2147 = vld [vmem:[%s318 + $0x18] sm:$0xff]
      %v2148 = vld [vmem:[%s318 + $0x20] sm:$0xff]
      %v2149 = vld [vmem:[%s318 + $0x28] sm:$0xff]
      %v2150 = vld [vmem:[%s318 + $0x30] sm:$0xff]
      %v2151 = vld [vmem:[%s318 + $0x38] sm:$0xff]
      %v2152 = vld [vmem:[%s318 + $0x40] sm:$0x1f]
      %v2153 = vld [vmem:[%s323] sm:$0xff]
      %v2154 = vld [vmem:[%s323 + $0x8] sm:$0xff]
      %v2155 = vld [vmem:[%s323 + $0x10] sm:$0xff]
      %v2156 = vld [vmem:[%s323 + $0x18] sm:$0xff]
      %v2157 = vld [vmem:[%s323 + $0x20] sm:$0xff]
      %v2158 = vld [vmem:[%s323 + $0x28] sm:$0xff]
      %v2159 = vld [vmem:[%s323 + $0x30] sm:$0xff]
      %v2160 = vld [vmem:[%s323 + $0x38] sm:$0xff]
      %v2161 = vld [vmem:[%s323 + $0x40] sm:$0x1f]
      %v2162 = vld [vmem:[#allocation2] sm:$0xff]
      %v2163 = vld [vmem:[#allocation2 + $0x8] sm:$0xff]
      %v2164 = vld [vmem:[#allocation2 + $0x10] sm:$0xff]
      %v2165 = vld [vmem:[#allocation2 + $0x18] sm:$0xff]
      %v2166 = vld [vmem:[#allocation2 + $0x20] sm:$0xff]
      %v2167 = vld [vmem:[#allocation2 + $0x28] sm:$0xff]
      %v2168 = vld [vmem:[#allocation2 + $0x30] sm:$0xff]
      %v2169 = vld [vmem:[#allocation2 + $0x38] sm:$0xff]
      %v2170 = vld [vmem:[#allocation2 + $0x40] sm:$0x1f]
      %vm2171 = vcmask 261120
      %v2173 = vsel %vm2171, %v2162, 0
      %v2176 = vsel %vm2171, %v2163, 0
      %v2179 = vsel %vm2171, %v2164, 0
      %v2182 = vsel %vm2171, %v2165, 0
      %v2185 = vsel %vm2171, %v2166, 0
      %v2188 = vsel %vm2171, %v2167, 0
      %v2191 = vsel %vm2171, %v2168, 0
      %v2194 = vsel %vm2171, %v2169, 0
      %v2197 = vsel %vm2171, %v2170, 0
      %2199 = vmatprep.subr.mxu0 0.0
      %2200 = vmatpush1.msra.mxu0 %v2140
      %2201 = vmatprep.subr.mxu0 0.0
      %2202 = vmatpush1.msra.mxu0 %v2141
      %2203 = vmatprep.subr.mxu0 0.0
      %2204 = vmatpush1.msra.mxu0 %v2142
      %2205 = vmatprep.subr.mxu0 0.0
      %2206 = vmatpush1.msra.mxu0 %v2143
      %2207 = vmatprep.subr.mxu0 0.0
      %2208 = vmatpush1.msra.mxu0 0.0
      %2209 = vmatprep.subr.mxu0 0.0
      %2210 = vmatpush1.msra.mxu0 0.0
      %2211 = vmatprep.subr.mxu0 0.0
      %2212 = vmatpush1.msra.mxu0 0.0
      %2213 = vmatprep.subr.mxu0 0.0
      %2214 = vmatpush1.msra.mxu0 0.0
      %2215 = vmatprep.subr.mxu0 0.0
      %2216 = vmatpush1.msra.mxu0 0.0
      %2217 = vmatprep.subr.mxu0 0.0
      %2218 = vmatpush1.msra.mxu0 0.0
      %2219 = vmatprep.subr.mxu0 0.0
      %2220 = vmatpush1.msra.mxu0 0.0
      %2221 = vmatprep.subr.mxu0 0.0
      %2222 = vmatpush1.msra.mxu0 0.0
      %2223 = vmatprep.subr.mxu0 0.0
      %2224 = vmatpush1.msra.mxu0 0.0
      %2225 = vmatprep.subr.mxu0 0.0
      %2226 = vmatpush1.msra.mxu0 0.0
      %2227 = vmatprep.subr.mxu0 0.0
      %2228 = vmatpush1.msra.mxu0 0.0
      %2229 = vmatprep.subr.mxu0 0.0
      %2230 = vmatpush1.msra.mxu0 0.0
      %2231 = vmatprep.subr.mxu0 0.0
      %2232 = vmatpush1.msra.mxu0 0.0
      %2233 = vmatprep.subr.mxu0 0.0
      %2234 = vmatpush1.msra.mxu0 0.0
      %2235 = vmatprep.subr.mxu0 0.0
      %2236 = vmatpush1.msra.mxu0 0.0
      %2237 = vmatprep.subr.mxu0 0.0
      %2238 = vmatpush1.msra.mxu0 0.0
      %2239 = vmatprep.subr.mxu0 0.0
      %2240 = vmatpush1.msra.mxu0 0.0
      %2241 = vmatprep.subr.mxu0 0.0
      %2242 = vmatpush1.msra.mxu0 0.0
      %2243 = vmatprep.subr.mxu0 0.0
      %2244 = vmatpush1.msra.mxu0 0.0
      %2245 = vmatprep.subr.mxu0 0.0
      %2246 = vmatpush1.msra.mxu0 0.0
      %2247 = vmatprep.subr.mxu0 0.0
      %2248 = vmatpush1.msra.mxu0 0.0
      %2249 = vmatprep.subr.mxu0 0.0
      %2250 = vmatpush1.msra.mxu0 0.0
      %2251 = vmatprep.subr.mxu0 0.0
      %2252 = vmatpush1.msra.mxu0 0.0
      %2253 = vmatprep.subr.mxu0 0.0
      %2254 = vmatpush1.msra.mxu0 0.0
      %2255 = vmatprep.subr.mxu0 0.0
      %2256 = vmatpush1.msra.mxu0 0.0
      %2257 = vmatprep.subr.mxu0 0.0
      %2258 = vmatpush1.msra.mxu0 0.0
      %2259 = vmatprep.subr.mxu0 0.0
      %2260 = vmatpush1.msra.mxu0 0.0
      %2261 = vmatprep.subr.mxu0 0.0
      %2262 = vmatpush1.msra.mxu0 0.0
      %2263 = vmatprep.mubr.f32.mxu0 0.0
      %2264 = vmatmul.mubr.f32.gmra.mrb[0].mxu0 %v2173
      %v2265 = vpop.f32.mrb[0].mxu0
      %v2266 = vadd.f32 0.0, %v2265
      %v2267 = vpop.f32.mrb[0].mxu0
      %2268 = vmatprep.mubr.f32.mxu0 0.0
      %2269 = vmatmul.mubr.f32.gmra.mrb[0].mxu0 %v2176
      %v2270 = vpop.f32.mrb[0].mxu0
      %v2271 = vadd.f32 0.0, %v2270
      %v2272 = vpop.f32.mrb[0].mxu0
      %2273 = vmatprep.mubr.f32.mxu0 0.0
      %2274 = vmatmul.mubr.f32.gmra.mrb[0].mxu0 %v2179
      %v2275 = vpop.f32.mrb[0].mxu0
      %v2276 = vadd.f32 0.0, %v2275
      %v2277 = vpop.f32.mrb[0].mxu0
      %2278 = vmatprep.mubr.f32.mxu0 0.0
      %2279 = vmatmul.mubr.f32.gmra.mrb[0].mxu0 %v2182
      %v2280 = vpop.f32.mrb[0].mxu0
      %v2281 = vadd.f32 0.0, %v2280
      %v2282 = vpop.f32.mrb[0].mxu0
      %2283 = vmatprep.mubr.f32.mxu0 0.0
      %2284 = vmatmul.mubr.f32.gmra.mrb[0].mxu0 %v2185
      %v2285 = vpop.f32.mrb[0].mxu0
      %v2286 = vadd.f32 0.0, %v2285
      %v2287 = vpop.f32.mrb[0].mxu0
      %2288 = vmatprep.mubr.f32.mxu0 0.0
      %2289 = vmatmul.mubr.f32.gmra.mrb[0].mxu0 %v2188
      %v2290 = vpop.f32.mrb[0].mxu0
      %v2291 = vadd.f32 0.0, %v2290
      %v2292 = vpop.f32.mrb[0].mxu0
      %2293 = vmatprep.mubr.f32.mxu0 0.0
      %2294 = vmatmul.mubr.f32.gmra.mrb[0].mxu0 %v2191
      %v2295 = vpop.f32.mrb[0].mxu0
      %v2296 = vadd.f32 0.0, %v2295
      %v2297 = vpop.f32.mrb[0].mxu0
      %2298 = vmatprep.mubr.f32.mxu0 0.0
      %2299 = vmatmul.mubr.f32.gmra.mrb[0].mxu0 %v2194
      %v2300 = vpop.f32.mrb[0].mxu0
      %v2301 = vadd.f32 0.0, %v2300
      %v2302 = vpop.f32.mrb[0].mxu0
      %2303 = vmatprep.mubr.f32.mxu0 0.0
      %2304 = vmatmul.mubr.f32.gmra.mrb[0].mxu0 %v2197
      %v2305 = vpop.f32.mrb[0].mxu0
      %v2306 = vadd.f32 0.0, %v2305
      %v2307 = vpop.f32.mrb[0].mxu0
      %2308 = vdwg.mxu0
      %vm2309 = vcmask 564224
      %v2311 = vsel %vm2309, %v2131, 0
      %v2314 = vsel %vm2309, %v2132, 0
      %v2317 = vsel %vm2309, %v2133, 0
      %v2320 = vsel %vm2309, %v2134, 0
      %v2323 = vsel %vm2309, %v2135, 0
      %v2326 = vsel %vm2309, %v2136, 0
      %v2329 = vsel %vm2309, %v2137, 0
      %v2332 = vsel %vm2309, %v2138, 0
      %v2335 = vsel %vm2309, %v2139, 0
      %vm2337 = vcmask 1044480
      %v2339 = vsel %vm2337, %v2306, 0
      %2341 = vmatprep.subr.mxu0 0.0
      %2342 = vmatpush1.msra.mxu0 %v2266
      %2343 = vmatprep.subr.mxu0 0.0
      %2344 = vmatpush1.msra.mxu0 %v2271
      %2345 = vmatprep.subr.mxu0 0.0
      %2346 = vmatpush1.msra.mxu0 %v2276
      %2347 = vmatprep.subr.mxu0 0.0
      %2348 = vmatpush1.msra.mxu0 %v2281
      %2349 = vmatprep.subr.mxu0 0.0
      %2350 = vmatpush1.msra.mxu0 %v2286
      %2351 = vmatprep.subr.mxu0 0.0
      %2352 = vmatpush1.msra.mxu0 %v2291
      %2353 = vmatprep.subr.mxu0 0.0
      %2354 = vmatpush1.msra.mxu0 %v2296
      %2355 = vmatprep.subr.mxu0 0.0
      %2356 = vmatpush1.msra.mxu0 %v2301
      %2357 = vmatprep.subr.mxu0 0.0
      %2358 = vmatpush1.msra.mxu0 %v2339
      %2359 = vmatprep.subr.mxu0 0.0
      %2360 = vmatpush1.msra.mxu0 0.0
      %2361 = vmatprep.subr.mxu0 0.0
      %2362 = vmatpush1.msra.mxu0 0.0
      %2363 = vmatprep.subr.mxu0 0.0
      %2364 = vmatpush1.msra.mxu0 0.0
      %2365 = vmatprep.subr.mxu0 0.0
      %2366 = vmatpush1.msra.mxu0 0.0
      %2367 = vmatprep.subr.mxu0 0.0
      %2368 = vmatpush1.msra.mxu0 0.0
      %2369 = vmatprep.subr.mxu0 0.0
      %2370 = vmatpush1.msra.mxu0 0.0
      %2371 = vmatprep.subr.mxu0 0.0
      %2372 = vmatpush1.msra.mxu0 0.0
      %2373 = vmatprep.subr.mxu0 0.0
      %2374 = vmatpush1.msra.mxu0 0.0
      %2375 = vmatprep.subr.mxu0 0.0
      %2376 = vmatpush1.msra.mxu0 0.0
      %2377 = vmatprep.subr.mxu0 0.0
      %2378 = vmatpush1.msra.mxu0 0.0
      %2379 = vmatprep.subr.mxu0 0.0
      %2380 = vmatpush1.msra.mxu0 0.0
      %2381 = vmatprep.subr.mxu0 0.0
      %2382 = vmatpush1.msra.mxu0 0.0
      %2383 = vmatprep.subr.mxu0 0.0
      %2384 = vmatpush1.msra.mxu0 0.0
      %2385 = vmatprep.subr.mxu0 0.0
      %2386 = vmatpush1.msra.mxu0 0.0
      %2387 = vmatprep.subr.mxu0 0.0
      %2388 = vmatpush1.msra.mxu0 0.0
      %2389 = vmatprep.subr.mxu0 0.0
      %2390 = vmatpush1.msra.mxu0 0.0
      %2391 = vmatprep.subr.mxu0 0.0
      %2392 = vmatpush1.msra.mxu0 0.0
      %2393 = vmatprep.subr.mxu0 0.0
      %2394 = vmatpush1.msra.mxu0 0.0
      %2395 = vmatprep.subr.mxu0 0.0
      %2396 = vmatpush1.msra.mxu0 0.0
      %2397 = vmatprep.subr.mxu0 0.0
      %2398 = vmatpush1.msra.mxu0 0.0
      %2399 = vmatprep.subr.mxu0 0.0
      %2400 = vmatpush1.msra.mxu0 0.0
      %2401 = vmatprep.subr.mxu0 0.0
      %2402 = vmatpush1.msra.mxu0 0.0
      %2403 = vmatprep.subr.mxu0 0.0
      %2404 = vmatpush1.msra.mxu0 0.0
      %2405 = vmatprep.mubr.f32.mxu0 0.0
      %2406 = vmatmul.mubr.f32.gmra.mrb[0].mxu0 %v2311
      %v2407 = vpop.f32.mrb[0].mxu0
      %v2408 = vadd.f32 0.0, %v2407
      %v2409 = vpop.f32.mrb[0].mxu0
      %2410 = vmatprep.mubr.f32.mxu0 0.0
      %2411 = vmatmul.mubr.f32.gmra.mrb[0].mxu0 %v2314
      %v2412 = vpop.f32.mrb[0].mxu0
      %v2413 = vadd.f32 0.0, %v2412
      %v2414 = vpop.f32.mrb[0].mxu0
      %2415 = vmatprep.mubr.f32.mxu0 0.0
      %2416 = vmatmul.mubr.f32.gmra.mrb[0].mxu0 %v2317
      %v2417 = vpop.f32.mrb[0].mxu0
      %v2418 = vadd.f32 0.0, %v2417
      %v2419 = vpop.f32.mrb[0].mxu0
      %2420 = vmatprep.mubr.f32.mxu0 0.0
      %2421 = vmatmul.mubr.f32.gmra.mrb[0].mxu0 %v2320
      %v2422 = vpop.f32.mrb[0].mxu0
      %v2423 = vadd.f32 0.0, %v2422
      %v2424 = vpop.f32.mrb[0].mxu0
      %2425 = vmatprep.mubr.f32.mxu0 0.0
      %2426 = vmatmul.mubr.f32.gmra.mrb[0].mxu0 %v2323
      %v2427 = vpop.f32.mrb[0].mxu0
      %v2428 = vadd.f32 0.0, %v2427
      %v2429 = vpop.f32.mrb[0].mxu0
      %2430 = vmatprep.mubr.f32.mxu0 0.0
      %2431 = vmatmul.mubr.f32.gmra.mrb[0].mxu0 %v2326
      %v2432 = vpop.f32.mrb[0].mxu0
      %v2433 = vadd.f32 0.0, %v2432
      %v2434 = vpop.f32.mrb[0].mxu0
      %2435 = vmatprep.mubr.f32.mxu0 0.0
      %2436 = vmatmul.mubr.f32.gmra.mrb[0].mxu0 %v2329
      %v2437 = vpop.f32.mrb[0].mxu0
      %v2438 = vadd.f32 0.0, %v2437
      %v2439 = vpop.f32.mrb[0].mxu0
      %2440 = vmatprep.mubr.f32.mxu0 0.0
      %2441 = vmatmul.mubr.f32.gmra.mrb[0].mxu0 %v2332
      %v2442 = vpop.f32.mrb[0].mxu0
      %v2443 = vadd.f32 0.0, %v2442
      %v2444 = vpop.f32.mrb[0].mxu0
      %2445 = vmatprep.mubr.f32.mxu0 0.0
      %2446 = vmatmul.mubr.f32.gmra.mrb[0].mxu0 %v2335
      %v2447 = vpop.f32.mrb[0].mxu0
      %v2448 = vadd.f32 0.0, %v2447
      %v2449 = vpop.f32.mrb[0].mxu0
      %2450 = vdwg.mxu0
      %v2451 = vmul.f32 %v2408, %v2144
      %v2452 = vmul.f32 %v2413, %v2145
      %v2453 = vmul.f32 %v2418, %v2146
      %v2454 = vmul.f32 %v2423, %v2147
      %v2455 = vmul.f32 %v2428, %v2148
      %v2456 = vmul.f32 %v2433, %v2149
      %v2457 = vmul.f32 %v2438, %v2150
      %v2458 = vmul.f32 %v2443, %v2151
      %v2459 = vmul.f32 %v2448, %v2152
      %v2460 = vadd.f32 %v2451, %v2153
      %v2461 = vadd.f32 %v2452, %v2154
      %v2462 = vadd.f32 %v2453, %v2155
      %v2463 = vadd.f32 %v2454, %v2156
      %v2464 = vadd.f32 %v2455, %v2157
      %v2465 = vadd.f32 %v2456, %v2158
      %v2466 = vadd.f32 %v2457, %v2159
      %v2467 = vadd.f32 %v2458, %v2160
      %v2468 = vadd.f32 %v2459, %v2161
      %s2469 = scalar_lea.vmem [#allocation2], 72
      %v2470 = vld [vmem:[%s2469] sm:$0xff]
      %v2471 = vld [vmem:[%s2469 + $0x8] sm:$0xff]
      %v2472 = vld [vmem:[%s2469 + $0x10] sm:$0xff]
      %v2473 = vld [vmem:[%s2469 + $0x18] sm:$0xff]
      %v2474 = vld [vmem:[%s2469 + $0x20] sm:$0xff]
      %v2475 = vld [vmem:[%s2469 + $0x28] sm:$0xff]
      %v2476 = vld [vmem:[%s2469 + $0x30] sm:$0xff]
      %v2477 = vld [vmem:[%s2469 + $0x38] sm:$0xff]
      %v2478 = vld [vmem:[%s2469 + $0x40] sm:$0x1f]
      %v2480 = vsel %vm2171, %v2470, 0
      %v2483 = vsel %vm2171, %v2471, 0
      %v2486 = vsel %vm2171, %v2472, 0
      %v2489 = vsel %vm2171, %v2473, 0
      %v2492 = vsel %vm2171, %v2474, 0
      %v2495 = vsel %vm2171, %v2475, 0
      %v2498 = vsel %vm2171, %v2476, 0
      %v2501 = vsel %vm2171, %v2477, 0
      %v2504 = vsel %vm2171, %v2478, 0
      %2506 = vmatprep.subr.mxu0 0.0
      %2507 = vmatpush1.msra.mxu0 %v2140
      %2508 = vmatprep.subr.mxu0 0.0
      %2509 = vmatpush1.msra.mxu0 %v2141
      %2510 = vmatprep.subr.mxu0 0.0
      %2511 = vmatpush1.msra.mxu0 %v2142
      %2512 = vmatprep.subr.mxu0 0.0
      %2513 = vmatpush1.msra.mxu0 %v2143
      %2514 = vmatprep.subr.mxu0 0.0
      %2515 = vmatpush1.msra.mxu0 0.0
      %2516 = vmatprep.subr.mxu0 0.0
      %2517 = vmatpush1.msra.mxu0 0.0
      %2518 = vmatprep.subr.mxu0 0.0
      %2519 = vmatpush1.msra.mxu0 0.0
      %2520 = vmatprep.subr.mxu0 0.0
      %2521 = vmatpush1.msra.mxu0 0.0
      %2522 = vmatprep.subr.mxu0 0.0
      %2523 = vmatpush1.msra.mxu0 0.0
      %2524 = vmatprep.subr.mxu0 0.0
      %2525 = vmatpush1.msra.mxu0 0.0
      %2526 = vmatprep.subr.mxu0 0.0
      %2527 = vmatpush1.msra.mxu0 0.0
      %2528 = vmatprep.subr.mxu0 0.0
      %2529 = vmatpush1.msra.mxu0 0.0
      %2530 = vmatprep.subr.mxu0 0.0
      %2531 = vmatpush1.msra.mxu0 0.0
      %2532 = vmatprep.subr.mxu0 0.0
      %2533 = vmatpush1.msra.mxu0 0.0
      %2534 = vmatprep.subr.mxu0 0.0
      %2535 = vmatpush1.msra.mxu0 0.0
      %2536 = vmatprep.subr.mxu0 0.0
      %2537 = vmatpush1.msra.mxu0 0.0
      %2538 = vmatprep.subr.mxu0 0.0
      %2539 = vmatpush1.msra.mxu0 0.0
      %2540 = vmatprep.subr.mxu0 0.0
      %2541 = vmatpush1.msra.mxu0 0.0
      %2542 = vmatprep.subr.mxu0 0.0
      %2543 = vmatpush1.msra.mxu0 0.0
      %2544 = vmatprep.subr.mxu0 0.0
      %2545 = vmatpush1.msra.mxu0 0.0
      %2546 = vmatprep.subr.mxu0 0.0
      %2547 = vmatpush1.msra.mxu0 0.0
      %2548 = vmatprep.subr.mxu0 0.0
      %2549 = vmatpush1.msra.mxu0 0.0
      %2550 = vmatprep.subr.mxu0 0.0
      %2551 = vmatpush1.msra.mxu0 0.0
      %2552 = vmatprep.subr.mxu0 0.0
      %2553 = vmatpush1.msra.mxu0 0.0
      %2554 = vmatprep.subr.mxu0 0.0
      %2555 = vmatpush1.msra.mxu0 0.0
      %2556 = vmatprep.subr.mxu0 0.0
      %2557 = vmatpush1.msra.mxu0 0.0
      %2558 = vmatprep.subr.mxu0 0.0
      %2559 = vmatpush1.msra.mxu0 0.0
      %2560 = vmatprep.subr.mxu0 0.0
      %2561 = vmatpush1.msra.mxu0 0.0
      %2562 = vmatprep.subr.mxu0 0.0
      %2563 = vmatpush1.msra.mxu0 0.0
      %2564 = vmatprep.subr.mxu0 0.0
      %2565 = vmatpush1.msra.mxu0 0.0
      %2566 = vmatprep.subr.mxu0 0.0
      %2567 = vmatpush1.msra.mxu0 0.0
      %2568 = vmatprep.subr.mxu0 0.0
      %2569 = vmatpush1.msra.mxu0 0.0
      %2570 = vmatprep.mubr.f32.mxu0 0.0
      %2571 = vmatmul.mubr.f32.gmra.mrb[0].mxu0 %v2480
      %v2572 = vpop.f32.mrb[0].mxu0
      %v2573 = vadd.f32 0.0, %v2572
      %v2574 = vpop.f32.mrb[0].mxu0
      %2575 = vmatprep.mubr.f32.mxu0 0.0
      %2576 = vmatmul.mubr.f32.gmra.mrb[0].mxu0 %v2483
      %v2577 = vpop.f32.mrb[0].mxu0
      %v2578 = vadd.f32 0.0, %v2577
      %v2579 = vpop.f32.mrb[0].mxu0
      %2580 = vmatprep.mubr.f32.mxu0 0.0
      %2581 = vmatmul.mubr.f32.gmra.mrb[0].mxu0 %v2486
      %v2582 = vpop.f32.mrb[0].mxu0
      %v2583 = vadd.f32 0.0, %v2582
      %v2584 = vpop.f32.mrb[0].mxu0
      %2585 = vmatprep.mubr.f32.mxu0 0.0
      %2586 = vmatmul.mubr.f32.gmra.mrb[0].mxu0 %v2489
      %v2587 = vpop.f32.mrb[0].mxu0
      %v2588 = vadd.f32 0.0, %v2587
      %v2589 = vpop.f32.mrb[0].mxu0
      %2590 = vmatprep.mubr.f32.mxu0 0.0
      %2591 = vmatmul.mubr.f32.gmra.mrb[0].mxu0 %v2492
      %v2592 = vpop.f32.mrb[0].mxu0
      %v2593 = vadd.f32 0.0, %v2592
      %v2594 = vpop.f32.mrb[0].mxu0
      %2595 = vmatprep.mubr.f32.mxu0 0.0
      %2596 = vmatmul.mubr.f32.gmra.mrb[0].mxu0 %v2495
      %v2597 = vpop.f32.mrb[0].mxu0
      %v2598 = vadd.f32 0.0, %v2597
      %v2599 = vpop.f32.mrb[0].mxu0
      %2600 = vmatprep.mubr.f32.mxu0 0.0
      %2601 = vmatmul.mubr.f32.gmra.mrb[0].mxu0 %v2498
      %v2602 = vpop.f32.mrb[0].mxu0
      %v2603 = vadd.f32 0.0, %v2602
      %v2604 = vpop.f32.mrb[0].mxu0
      %2605 = vmatprep.mubr.f32.mxu0 0.0
      %2606 = vmatmul.mubr.f32.gmra.mrb[0].mxu0 %v2501
      %v2607 = vpop.f32.mrb[0].mxu0
      %v2608 = vadd.f32 0.0, %v2607
      %v2609 = vpop.f32.mrb[0].mxu0
      %2610 = vmatprep.mubr.f32.mxu0 0.0
      %2611 = vmatmul.mubr.f32.gmra.mrb[0].mxu0 %v2504
      %v2612 = vpop.f32.mrb[0].mxu0
      %v2613 = vadd.f32 0.0, %v2612
      %v2614 = vpop.f32.mrb[0].mxu0
      %2615 = vdwg.mxu0
      %v2617 = vsel %vm2337, %v2613, 0
      %2619 = vmatprep.subr.mxu0 0.0
      %2620 = vmatpush1.msra.mxu0 %v2573
      %2621 = vmatprep.subr.mxu0 0.0
      %2622 = vmatpush1.msra.mxu0 %v2578
      %2623 = vmatprep.subr.mxu0 0.0
      %2624 = vmatpush1.msra.mxu0 %v2583
      %2625 = vmatprep.subr.mxu0 0.0
      %2626 = vmatpush1.msra.mxu0 %v2588
      %2627 = vmatprep.subr.mxu0 0.0
      %2628 = vmatpush1.msra.mxu0 %v2593
      %2629 = vmatprep.subr.mxu0 0.0
      %2630 = vmatpush1.msra.mxu0 %v2598
      %2631 = vmatprep.subr.mxu0 0.0
      %2632 = vmatpush1.msra.mxu0 %v2603
      %2633 = vmatprep.subr.mxu0 0.0
      %2634 = vmatpush1.msra.mxu0 %v2608
      %2635 = vmatprep.subr.mxu0 0.0
      %2636 = vmatpush1.msra.mxu0 %v2617
      %2637 = vmatprep.subr.mxu0 0.0
      %2638 = vmatpush1.msra.mxu0 0.0
      %2639 = vmatprep.subr.mxu0 0.0
      %2640 = vmatpush1.msra.mxu0 0.0
      %2641 = vmatprep.subr.mxu0 0.0
      %2642 = vmatpush1.msra.mxu0 0.0
      %2643 = vmatprep.subr.mxu0 0.0
      %2644 = vmatpush1.msra.mxu0 0.0
      %2645 = vmatprep.subr.mxu0 0.0
      %2646 = vmatpush1.msra.mxu0 0.0
      %2647 = vmatprep.subr.mxu0 0.0
      %2648 = vmatpush1.msra.mxu0 0.0
      %2649 = vmatprep.subr.mxu0 0.0
      %2650 = vmatpush1.msra.mxu0 0.0
      %2651 = vmatprep.subr.mxu0 0.0
      %2652 = vmatpush1.msra.mxu0 0.0
      %2653 = vmatprep.subr.mxu0 0.0
      %2654 = vmatpush1.msra.mxu0 0.0
      %2655 = vmatprep.subr.mxu0 0.0
      %2656 = vmatpush1.msra.mxu0 0.0
      %2657 = vmatprep.subr.mxu0 0.0
      %2658 = vmatpush1.msra.mxu0 0.0
      %2659 = vmatprep.subr.mxu0 0.0
      %2660 = vmatpush1.msra.mxu0 0.0
      %2661 = vmatprep.subr.mxu0 0.0
      %2662 = vmatpush1.msra.mxu0 0.0
      %2663 = vmatprep.subr.mxu0 0.0
      %2664 = vmatpush1.msra.mxu0 0.0
      %2665 = vmatprep.subr.mxu0 0.0
      %2666 = vmatpush1.msra.mxu0 0.0
      %2667 = vmatprep.subr.mxu0 0.0
      %2668 = vmatpush1.msra.mxu0 0.0
      %2669 = vmatprep.subr.mxu0 0.0
      %2670 = vmatpush1.msra.mxu0 0.0
      %2671 = vmatprep.subr.mxu0 0.0
      %2672 = vmatpush1.msra.mxu0 0.0
      %2673 = vmatprep.subr.mxu0 0.0
      %2674 = vmatpush1.msra.mxu0 0.0
      %2675 = vmatprep.subr.mxu0 0.0
      %2676 = vmatpush1.msra.mxu0 0.0
      %2677 = vmatprep.subr.mxu0 0.0
      %2678 = vmatpush1.msra.mxu0 0.0
      %2679 = vmatprep.subr.mxu0 0.0
      %2680 = vmatpush1.msra.mxu0 0.0
      %2681 = vmatprep.subr.mxu0 0.0
      %2682 = vmatpush1.msra.mxu0 0.0
      %2683 = vmatprep.mubr.f32.mxu0 0.0
      %2684 = vmatmul.mubr.f32.gmra.mrb[0].mxu0 %v2311
      %v2685 = vpop.f32.mrb[0].mxu0
      %v2686 = vadd.f32 0.0, %v2685
      %v2687 = vpop.f32.mrb[0].mxu0
      %2688 = vmatprep.mubr.f32.mxu0 0.0
      %2689 = vmatmul.mubr.f32.gmra.mrb[0].mxu0 %v2314
      %v2690 = vpop.f32.mrb[0].mxu0
      %v2691 = vadd.f32 0.0, %v2690
      %v2692 = vpop.f32.mrb[0].mxu0
      %2693 = vmatprep.mubr.f32.mxu0 0.0
      %2694 = vmatmul.mubr.f32.gmra.mrb[0].mxu0 %v2317
      %v2695 = vpop.f32.mrb[0].mxu0
      %v2696 = vadd.f32 0.0, %v2695
      %v2697 = vpop.f32.mrb[0].mxu0
      %2698 = vmatprep.mubr.f32.mxu0 0.0
      %2699 = vmatmul.mubr.f32.gmra.mrb[0].mxu0 %v2320
      %v2700 = vpop.f32.mrb[0].mxu0
      %v2701 = vadd.f32 0.0, %v2700
      %v2702 = vpop.f32.mrb[0].mxu0
      %2703 = vmatprep.mubr.f32.mxu0 0.0
      %2704 = vmatmul.mubr.f32.gmra.mrb[0].mxu0 %v2323
      %v2705 = vpop.f32.mrb[0].mxu0
      %v2706 = vadd.f32 0.0, %v2705
      %v2707 = vpop.f32.mrb[0].mxu0
      %2708 = vmatprep.mubr.f32.mxu0 0.0
      %2709 = vmatmul.mubr.f32.gmra.mrb[0].mxu0 %v2326
      %v2710 = vpop.f32.mrb[0].mxu0
      %v2711 = vadd.f32 0.0, %v2710
      %v2712 = vpop.f32.mrb[0].mxu0
      %2713 = vmatprep.mubr.f32.mxu0 0.0
      %2714 = vmatmul.mubr.f32.gmra.mrb[0].mxu0 %v2329
      %v2715 = vpop.f32.mrb[0].mxu0
      %v2716 = vadd.f32 0.0, %v2715
      %v2717 = vpop.f32.mrb[0].mxu0
      %2718 = vmatprep.mubr.f32.mxu0 0.0
      %2719 = vmatmul.mubr.f32.gmra.mrb[0].mxu0 %v2332
      %v2720 = vpop.f32.mrb[0].mxu0
      %v2721 = vadd.f32 0.0, %v2720
      %v2722 = vpop.f32.mrb[0].mxu0
      %2723 = vmatprep.mubr.f32.mxu0 0.0
      %2724 = vmatmul.mubr.f32.gmra.mrb[0].mxu0 %v2335
      %v2725 = vpop.f32.mrb[0].mxu0
      %v2726 = vadd.f32 0.0, %v2725
      %v2727 = vpop.f32.mrb[0].mxu0
      %2728 = vdwg.mxu0
      %v2729 = vmul.f32 %v2686, %v2144
      %v2730 = vmul.f32 %v2691, %v2145
      %v2731 = vmul.f32 %v2696, %v2146
      %v2732 = vmul.f32 %v2701, %v2147
      %v2733 = vmul.f32 %v2706, %v2148
      %v2734 = vmul.f32 %v2711, %v2149
      %v2735 = vmul.f32 %v2716, %v2150
      %v2736 = vmul.f32 %v2721, %v2151
      %v2737 = vmul.f32 %v2726, %v2152
      %v2738 = vadd.f32 %v2729, %v2153
      %v2739 = vadd.f32 %v2730, %v2154
      %v2740 = vadd.f32 %v2731, %v2155
      %v2741 = vadd.f32 %v2732, %v2156
      %v2742 = vadd.f32 %v2733, %v2157
      %v2743 = vadd.f32 %v2734, %v2158
      %v2744 = vadd.f32 %v2735, %v2159
      %v2745 = vadd.f32 %v2736, %v2160
      %v2746 = vadd.f32 %v2737, %v2161
      %p2747 = pneg %p344
      %p2748 = pnand %p338, %p2747
      %p2749 = pneg %p2748
      // Predicated region
      $region57: #{gcn_forward.1} parent=47 // pred_check
        _
      $region58: #{gcn_forward.1} parent=47 // pred_check_branch
        %2751 = sbr.rel (%p2748) target = $region60
      $region59: #{gcn_forward.1} parent=47 // pred_region
        %v2752 = vtanh.pop %v2460
        %v2753 = vtanh.pop %v2461
        %v2754 = vtanh.pop %v2462
        %v2755 = vtanh.pop %v2463
        %v2756 = vtanh.pop %v2464
        %v2757 = vtanh.pop %v2465
        %v2758 = vtanh.pop %v2466
        %v2759 = vtanh.pop %v2467
        %v2760 = vtanh.pop %v2468
        %2761 = vst.msk [vmem:[#allocation2] sm:$0xff] %vm2171, %v2752
        %2762 = vst.msk [vmem:[#allocation2 + $0x8] sm:$0xff] %vm2171, %v2753
        %2763 = vst.msk [vmem:[#allocation2 + $0x10] sm:$0xff] %vm2171, %v2754
        %2764 = vst.msk [vmem:[#allocation2 + $0x18] sm:$0xff] %vm2171, %v2755
        %2765 = vst.msk [vmem:[#allocation2 + $0x20] sm:$0xff] %vm2171, %v2756
        %2766 = vst.msk [vmem:[#allocation2 + $0x28] sm:$0xff] %vm2171, %v2757
        %2767 = vst.msk [vmem:[#allocation2 + $0x30] sm:$0xff] %vm2171, %v2758
        %2768 = vst.msk [vmem:[#allocation2 + $0x38] sm:$0xff] %vm2171, %v2759
        %vm2769 = vcmask 258048
        %2770 = vst.msk [vmem:[#allocation2 + $0x40] sm:$0x1f] %vm2769, %v2760
        %v2771 = vtanh.pop %v2738
        %v2772 = vtanh.pop %v2739
        %v2773 = vtanh.pop %v2740
        %v2774 = vtanh.pop %v2741
        %v2775 = vtanh.pop %v2742
        %v2776 = vtanh.pop %v2743
        %v2777 = vtanh.pop %v2744
        %v2778 = vtanh.pop %v2745
        %v2779 = vtanh.pop %v2746
        %2780 = vst.msk [vmem:[%s2469] sm:$0xff] %vm2171, %v2771
        %2781 = vst.msk [vmem:[%s2469 + $0x8] sm:$0xff] %vm2171, %v2772
        %2782 = vst.msk [vmem:[%s2469 + $0x10] sm:$0xff] %vm2171, %v2773
        %2783 = vst.msk [vmem:[%s2469 + $0x18] sm:$0xff] %vm2171, %v2774
        %2784 = vst.msk [vmem:[%s2469 + $0x20] sm:$0xff] %vm2171, %v2775
        %2785 = vst.msk [vmem:[%s2469 + $0x28] sm:$0xff] %vm2171, %v2776
        %2786 = vst.msk [vmem:[%s2469 + $0x30] sm:$0xff] %vm2171, %v2777
        %2787 = vst.msk [vmem:[%s2469 + $0x38] sm:$0xff] %vm2171, %v2778
        %2788 = vst.msk [vmem:[%s2469 + $0x40] sm:$0x1f] %vm2769, %v2779
      $region60: #{gcn_forward.1} parent=47 // pred_fallthru
        _
      // Predicated region
      $region61: #{gcn_forward.1} parent=47 // pred_check
        _
      $region62: #{gcn_forward.1} parent=47 // pred_check_branch
        %2790 = sbr.rel (%p343) target = $region64
      $region63: #{gcn_forward.1} parent=47 // pred_region
        %v2791 = vtanh.pop %v2460
        %v2792 = vtanh.pop %v2461
        %v2793 = vtanh.pop %v2462
        %v2794 = vtanh.pop %v2463
        %v2795 = vtanh.pop %v2464
        %v2796 = vtanh.pop %v2465
        %v2797 = vtanh.pop %v2466
        %v2798 = vtanh.pop %v2467
        %v2799 = vtanh.pop %v2468
        %v2800 = vld [vmem:[#allocation3] sm:$0xff]
        %v2801 = vld [vmem:[#allocation3 + $0x8] sm:$0xff]
        %v2802 = vld [vmem:[#allocation3 + $0x10] sm:$0xff]
        %v2803 = vld [vmem:[#allocation3 + $0x18] sm:$0xff]
        %v2804 = vld [vmem:[#allocation3 + $0x20] sm:$0xff]
        %v2805 = vld [vmem:[#allocation3 + $0x28] sm:$0xff]
        %v2806 = vld [vmem:[#allocation3 + $0x30] sm:$0xff]
        %v2807 = vld [vmem:[#allocation3 + $0x38] sm:$0xff]
        %v2808 = vld [vmem:[#allocation3 + $0x40] sm:$0x1f]
        %v2809 = vadd.f32 %v2791, %v2800
        %v2810 = vadd.f32 %v2792, %v2801
        %v2811 = vadd.f32 %v2793, %v2802
        %v2812 = vadd.f32 %v2794, %v2803
        %v2813 = vadd.f32 %v2795, %v2804
        %v2814 = vadd.f32 %v2796, %v2805
        %v2815 = vadd.f32 %v2797, %v2806
        %v2816 = vadd.f32 %v2798, %v2807
        %v2817 = vadd.f32 %v2799, %v2808
        %2818 = vst.msk [vmem:[#allocation2] sm:$0xff] %vm2171, %v2809
        %2819 = vst.msk [vmem:[#allocation2 + $0x8] sm:$0xff] %vm2171, %v2810
        %2820 = vst.msk [vmem:[#allocation2 + $0x10] sm:$0xff] %vm2171, %v2811
        %2821 = vst.msk [vmem:[#allocation2 + $0x18] sm:$0xff] %vm2171, %v2812
        %2822 = vst.msk [vmem:[#allocation2 + $0x20] sm:$0xff] %vm2171, %v2813
        %2823 = vst.msk [vmem:[#allocation2 + $0x28] sm:$0xff] %vm2171, %v2814
        %2824 = vst.msk [vmem:[#allocation2 + $0x30] sm:$0xff] %vm2171, %v2815
        %2825 = vst.msk [vmem:[#allocation2 + $0x38] sm:$0xff] %vm2171, %v2816
        %vm2826 = vcmask 258048
        %2827 = vst.msk [vmem:[#allocation2 + $0x40] sm:$0x1f] %vm2826, %v2817
        %v2828 = vtanh.pop %v2738
        %v2829 = vtanh.pop %v2739
        %v2830 = vtanh.pop %v2740
        %v2831 = vtanh.pop %v2741
        %v2832 = vtanh.pop %v2742
        %v2833 = vtanh.pop %v2743
        %v2834 = vtanh.pop %v2744
        %v2835 = vtanh.pop %v2745
        %v2836 = vtanh.pop %v2746
        %s2837 = scalar_lea.vmem [#allocation3], 72
        %v2838 = vld [vmem:[%s2837] sm:$0xff]
        %v2839 = vld [vmem:[%s2837 + $0x8] sm:$0xff]
        %v2840 = vld [vmem:[%s2837 + $0x10] sm:$0xff]
        %v2841 = vld [vmem:[%s2837 + $0x18] sm:$0xff]
        %v2842 = vld [vmem:[%s2837 + $0x20] sm:$0xff]
        %v2843 = vld [vmem:[%s2837 + $0x28] sm:$0xff]
        %v2844 = vld [vmem:[%s2837 + $0x30] sm:$0xff]
        %v2845 = vld [vmem:[%s2837 + $0x38] sm:$0xff]
        %v2846 = vld [vmem:[%s2837 + $0x40] sm:$0x1f]
        %v2847 = vadd.f32 %v2828, %v2838
        %v2848 = vadd.f32 %v2829, %v2839
        %v2849 = vadd.f32 %v2830, %v2840
        %v2850 = vadd.f32 %v2831, %v2841
        %v2851 = vadd.f32 %v2832, %v2842
        %v2852 = vadd.f32 %v2833, %v2843
        %v2853 = vadd.f32 %v2834, %v2844
        %v2854 = vadd.f32 %v2835, %v2845
        %v2855 = vadd.f32 %v2836, %v2846
        %2856 = vst.msk [vmem:[%s2469] sm:$0xff] %vm2171, %v2847
        %2857 = vst.msk [vmem:[%s2469 + $0x8] sm:$0xff] %vm2171, %v2848
        %2858 = vst.msk [vmem:[%s2469 + $0x10] sm:$0xff] %vm2171, %v2849
        %2859 = vst.msk [vmem:[%s2469 + $0x18] sm:$0xff] %vm2171, %v2850
        %2860 = vst.msk [vmem:[%s2469 + $0x20] sm:$0xff] %vm2171, %v2851
        %2861 = vst.msk [vmem:[%s2469 + $0x28] sm:$0xff] %vm2171, %v2852
        %2862 = vst.msk [vmem:[%s2469 + $0x30] sm:$0xff] %vm2171, %v2853
        %2863 = vst.msk [vmem:[%s2469 + $0x38] sm:$0xff] %vm2171, %v2854
        %2864 = vst.msk [vmem:[%s2469 + $0x40] sm:$0x1f] %vm2826, %v2855
      $region64: #{gcn_forward.1} parent=47 // pred_fallthru
        _
      // Predicated region
      $region65: #{gcn_forward.1} parent=47 // pred_check
        %p2865 = pneg %p324
      $region66: #{gcn_forward.1} parent=47 // pred_check_branch
        %2867 = sbr.rel (%p2865) target = $region68
      $region67: #{gcn_forward.1} parent=47 // pred_region
        %v2868 = vld [vmem:[#allocation4] sm:$0xff]
        %v2869 = vld [vmem:[#allocation4 + $0x8] sm:$0xff]
        %v2870 = vld [vmem:[#allocation4 + $0x10] sm:$0xff]
        %v2871 = vld [vmem:[#allocation4 + $0x18] sm:$0xff]
        %v2872 = vld [vmem:[#allocation4 + $0x20] sm:$0xff]
        %v2873 = vld [vmem:[#allocation4 + $0x28] sm:$0xff]
        %v2874 = vld [vmem:[#allocation4 + $0x30] sm:$0xff]
        %v2875 = vld [vmem:[#allocation4 + $0x38] sm:$0xff]
        %v2876 = vld [vmem:[#allocation4 + $0x40] sm:$0x1f]
        %v2877 = vadd.f32 %v2460, %v2868
        %v2878 = vadd.f32 %v2461, %v2869
        %v2879 = vadd.f32 %v2462, %v2870
        %v2880 = vadd.f32 %v2463, %v2871
        %v2881 = vadd.f32 %v2464, %v2872
        %v2882 = vadd.f32 %v2465, %v2873
        %v2883 = vadd.f32 %v2466, %v2874
        %v2884 = vadd.f32 %v2467, %v2875
        %v2885 = vadd.f32 %v2468, %v2876
        %v2886 = vld [vmem:[%s2] sm:$0xff]
        %v2887 = vld [vmem:[%s2 + $0x8] sm:$0xff]
        %v2888 = vld [vmem:[%s2 + $0x10] sm:$0xff]
        %v2889 = vld [vmem:[%s2 + $0x18] sm:$0xff]
        %v2891 = vsel %vm2171, %v2877, 0
        %v2894 = vsel %vm2171, %v2878, 0
        %v2897 = vsel %vm2171, %v2879, 0
        %v2900 = vsel %vm2171, %v2880, 0
        %v2903 = vsel %vm2171, %v2881, 0
        %v2906 = vsel %vm2171, %v2882, 0
        %v2909 = vsel %vm2171, %v2883, 0
        %v2912 = vsel %vm2171, %v2884, 0
        %v2915 = vsel %vm2171, %v2885, 0
        %2917 = vmatprep.subr.mxu0 0.0
        %v2918 = vand.u32 %v2886, 4294901760
        %2919 = vmatpush1.msra.mxu0 %v2918
        %2920 = vmatprep.subr.mxu0 0.0
        %v2921 = vand.u32 %v2887, 4294901760
        %2922 = vmatpush1.msra.mxu0 %v2921
        %2923 = vmatprep.subr.mxu0 0.0
        %v2924 = vand.u32 %v2888, 4294901760
        %2925 = vmatpush1.msra.mxu0 %v2924
        %2926 = vmatprep.subr.mxu0 0.0
        %v2927 = vand.u32 %v2889, 4294901760
        %2928 = vmatpush1.msra.mxu0 %v2927
        %2929 = vmatprep.subr.mxu0 0.0
        %2930 = vmatpush1.msra.mxu0 0.0
        %2931 = vmatprep.subr.mxu0 0.0
        %2932 = vmatpush1.msra.mxu0 0.0
        %2933 = vmatprep.subr.mxu0 0.0
        %2934 = vmatpush1.msra.mxu0 0.0
        %2935 = vmatprep.subr.mxu0 0.0
        %2936 = vmatpush1.msra.mxu0 0.0
        %2937 = vmatprep.subr.mxu0 0.0
        %2938 = vmatpush1.msra.mxu0 0.0
        %2939 = vmatprep.subr.mxu0 0.0
        %2940 = vmatpush1.msra.mxu0 0.0
        %2941 = vmatprep.subr.mxu0 0.0
        %2942 = vmatpush1.msra.mxu0 0.0
        %2943 = vmatprep.subr.mxu0 0.0
        %2944 = vmatpush1.msra.mxu0 0.0
        %2945 = vmatprep.subr.mxu0 0.0
        %2946 = vmatpush1.msra.mxu0 0.0
        %2947 = vmatprep.subr.mxu0 0.0
        %2948 = vmatpush1.msra.mxu0 0.0
        %2949 = vmatprep.subr.mxu0 0.0
        %2950 = vmatpush1.msra.mxu0 0.0
        %2951 = vmatprep.subr.mxu0 0.0
        %2952 = vmatpush1.msra.mxu0 0.0
        %2953 = vmatprep.subr.mxu0 0.0
        %2954 = vmatpush1.msra.mxu0 0.0
        %2955 = vmatprep.subr.mxu0 0.0
        %2956 = vmatpush1.msra.mxu0 0.0
        %2957 = vmatprep.subr.mxu0 0.0
        %2958 = vmatpush1.msra.mxu0 0.0
        %2959 = vmatprep.subr.mxu0 0.0
        %2960 = vmatpush1.msra.mxu0 0.0
        %2961 = vmatprep.subr.mxu0 0.0
        %2962 = vmatpush1.msra.mxu0 0.0
        %2963 = vmatprep.subr.mxu0 0.0
        %2964 = vmatpush1.msra.mxu0 0.0
        %2965 = vmatprep.subr.mxu0 0.0
        %2966 = vmatpush1.msra.mxu0 0.0
        %2967 = vmatprep.subr.mxu0 0.0
        %2968 = vmatpush1.msra.mxu0 0.0
        %2969 = vmatprep.subr.mxu0 0.0
        %2970 = vmatpush1.msra.mxu0 0.0
        %2971 = vmatprep.subr.mxu0 0.0
        %2972 = vmatpush1.msra.mxu0 0.0
        %2973 = vmatprep.subr.mxu0 0.0
        %2974 = vmatpush1.msra.mxu0 0.0
        %2975 = vmatprep.subr.mxu0 0.0
        %2976 = vmatpush1.msra.mxu0 0.0
        %2977 = vmatprep.subr.mxu0 0.0
        %2978 = vmatpush1.msra.mxu0 0.0
        %2979 = vmatprep.subr.mxu0 0.0
        %2980 = vmatpush1.msra.mxu0 0.0
        %2981 = vmatprep.subr.mxu0 0.0
        %2982 = vmatpush1.msra.mxu0 0.0
        %2983 = vmatprep.subr.mxu0 0.0
        %2984 = vmatpush1.msra.mxu0 0.0
        %2985 = vmatprep.mubr.f32.mxu0 0.0
        %v2986 = vand.u32 %v2891, 4294901760
        %v2987 = vsub.f32 %v2891, %v2986
        %v2988 = vand.u32 %v2987, 4294901760
        %v2989 = vsub.f32 %v2987, %v2988
        %v2990 = vand.u32 %v2989, 4294901760
        %2991 = vmatmul.mubr.f32.gmra.mrb[0].mxu0 %v2990
        %v2992 = vpop.f32.mrb[0].mxu0
        %v2993 = vadd.f32 0.0, %v2992
        %v2994 = vpop.f32.mrb[0].mxu0
        %2995 = vmatprep.mubr.f32.mxu0 0.0
        %v2996 = vand.u32 %v2894, 4294901760
        %v2997 = vsub.f32 %v2894, %v2996
        %v2998 = vand.u32 %v2997, 4294901760
        %v2999 = vsub.f32 %v2997, %v2998
        %v3000 = vand.u32 %v2999, 4294901760
        %3001 = vmatmul.mubr.f32.gmra.mrb[0].mxu0 %v3000
        %v3002 = vpop.f32.mrb[0].mxu0
        %v3003 = vadd.f32 0.0, %v3002
        %v3004 = vpop.f32.mrb[0].mxu0
        %3005 = vmatprep.mubr.f32.mxu0 0.0
        %v3006 = vand.u32 %v2897, 4294901760
        %v3007 = vsub.f32 %v2897, %v3006
        %v3008 = vand.u32 %v3007, 4294901760
        %v3009 = vsub.f32 %v3007, %v3008
        %v3010 = vand.u32 %v3009, 4294901760
        %3011 = vmatmul.mubr.f32.gmra.mrb[0].mxu0 %v3010
        %v3012 = vpop.f32.mrb[0].mxu0
        %v3013 = vadd.f32 0.0, %v3012
        %v3014 = vpop.f32.mrb[0].mxu0
        %3015 = vmatprep.mubr.f32.mxu0 0.0
        %v3016 = vand.u32 %v2900, 4294901760
        %v3017 = vsub.f32 %v2900, %v3016
        %v3018 = vand.u32 %v3017, 4294901760
        %v3019 = vsub.f32 %v3017, %v3018
        %v3020 = vand.u32 %v3019, 4294901760
        %3021 = vmatmul.mubr.f32.gmra.mrb[0].mxu0 %v3020
        %v3022 = vpop.f32.mrb[0].mxu0
        %v3023 = vadd.f32 0.0, %v3022
        %v3024 = vpop.f32.mrb[0].mxu0
        %3025 = vmatprep.mubr.f32.mxu0 0.0
        %v3026 = vand.u32 %v2903, 4294901760
        %v3027 = vsub.f32 %v2903, %v3026
        %v3028 = vand.u32 %v3027, 4294901760
        %v3029 = vsub.f32 %v3027, %v3028
        %v3030 = vand.u32 %v3029, 4294901760
        %3031 = vmatmul.mubr.f32.gmra.mrb[0].mxu0 %v3030
        %v3032 = vpop.f32.mrb[0].mxu0
        %v3033 = vadd.f32 0.0, %v3032
        %v3034 = vpop.f32.mrb[0].mxu0
        %3035 = vmatprep.mubr.f32.mxu0 0.0
        %v3036 = vand.u32 %v2906, 4294901760
        %v3037 = vsub.f32 %v2906, %v3036
        %v3038 = vand.u32 %v3037, 4294901760
        %v3039 = vsub.f32 %v3037, %v3038
        %v3040 = vand.u32 %v3039, 4294901760
        %3041 = vmatmul.mubr.f32.gmra.mrb[0].mxu0 %v3040
        %v3042 = vpop.f32.mrb[0].mxu0
        %v3043 = vadd.f32 0.0, %v3042
        %v3044 = vpop.f32.mrb[0].mxu0
        %3045 = vmatprep.mubr.f32.mxu0 0.0
        %v3046 = vand.u32 %v2909, 4294901760
        %v3047 = vsub.f32 %v2909, %v3046
        %v3048 = vand.u32 %v3047, 4294901760
        %v3049 = vsub.f32 %v3047, %v3048
        %v3050 = vand.u32 %v3049, 4294901760
        %3051 = vmatmul.mubr.f32.gmra.mrb[0].mxu0 %v3050
        %v3052 = vpop.f32.mrb[0].mxu0
        %v3053 = vadd.f32 0.0, %v3052
        %v3054 = vpop.f32.mrb[0].mxu0
        %3055 = vmatprep.mubr.f32.mxu0 0.0
        %v3056 = vand.u32 %v2912, 4294901760
        %v3057 = vsub.f32 %v2912, %v3056
        %v3058 = vand.u32 %v3057, 4294901760
        %v3059 = vsub.f32 %v3057, %v3058
        %v3060 = vand.u32 %v3059, 4294901760
        %3061 = vmatmul.mubr.f32.gmra.mrb[0].mxu0 %v3060
        %v3062 = vpop.f32.mrb[0].mxu0
        %v3063 = vadd.f32 0.0, %v3062
        %v3064 = vpop.f32.mrb[0].mxu0
        %3065 = vmatprep.mubr.f32.mxu0 0.0
        %v3066 = vand.u32 %v2915, 4294901760
        %v3067 = vsub.f32 %v2915, %v3066
        %v3068 = vand.u32 %v3067, 4294901760
        %v3069 = vsub.f32 %v3067, %v3068
        %v3070 = vand.u32 %v3069, 4294901760
        %3071 = vmatmul.mubr.f32.gmra.mrb[0].mxu0 %v3070
        %v3072 = vpop.f32.mrb[0].mxu0
        %v3073 = vadd.f32 0.0, %v3072
        %v3074 = vpop.f32.mrb[0].mxu0
        %3075 = vdwg.mxu0
        %3076 = vmatprep.subr.mxu0 0.0
        %v3077 = vand.u32 %v2886, 4294901760
        %v3078 = vsub.f32 %v2886, %v3077
        %v3079 = vand.u32 %v3078, 4294901760
        %v3080 = vsub.f32 %v3078, %v3079
        %v3081 = vand.u32 %v3080, 4294901760
        %3082 = vmatpush1.msra.mxu0 %v3081
        %3083 = vmatprep.subr.mxu0 0.0
        %v3084 = vand.u32 %v2887, 4294901760
        %v3085 = vsub.f32 %v2887, %v3084
        %v3086 = vand.u32 %v3085, 4294901760
        %v3087 = vsub.f32 %v3085, %v3086
        %v3088 = vand.u32 %v3087, 4294901760
        %3089 = vmatpush1.msra.mxu0 %v3088
        %3090 = vmatprep.subr.mxu0 0.0
        %v3091 = vand.u32 %v2888, 4294901760
        %v3092 = vsub.f32 %v2888, %v3091
        %v3093 = vand.u32 %v3092, 4294901760
        %v3094 = vsub.f32 %v3092, %v3093
        %v3095 = vand.u32 %v3094, 4294901760
        %3096 = vmatpush1.msra.mxu0 %v3095
        %3097 = vmatprep.subr.mxu0 0.0
        %v3098 = vand.u32 %v2889, 4294901760
        %v3099 = vsub.f32 %v2889, %v3098
        %v3100 = vand.u32 %v3099, 4294901760
        %v3101 = vsub.f32 %v3099, %v3100
        %v3102 = vand.u32 %v3101, 4294901760
        %3103 = vmatpush1.msra.mxu0 %v3102
        %3104 = vmatprep.subr.mxu0 0.0
        %3105 = vmatpush1.msra.mxu0 0.0
        %3106 = vmatprep.subr.mxu0 0.0
        %3107 = vmatpush1.msra.mxu0 0.0
        %3108 = vmatprep.subr.mxu0 0.0
        %3109 = vmatpush1.msra.mxu0 0.0
        %3110 = vmatprep.subr.mxu0 0.0
        %3111 = vmatpush1.msra.mxu0 0.0
        %3112 = vmatprep.subr.mxu0 0.0
        %3113 = vmatpush1.msra.mxu0 0.0
        %3114 = vmatprep.subr.mxu0 0.0
        %3115 = vmatpush1.msra.mxu0 0.0
        %3116 = vmatprep.subr.mxu0 0.0
        %3117 = vmatpush1.msra.mxu0 0.0
        %3118 = vmatprep.subr.mxu0 0.0
        %3119 = vmatpush1.msra.mxu0 0.0
        %3120 = vmatprep.subr.mxu0 0.0
        %3121 = vmatpush1.msra.mxu0 0.0
        %3122 = vmatprep.subr.mxu0 0.0
        %3123 = vmatpush1.msra.mxu0 0.0
        %3124 = vmatprep.subr.mxu0 0.0
        %3125 = vmatpush1.msra.mxu0 0.0
        %3126 = vmatprep.subr.mxu0 0.0
        %3127 = vmatpush1.msra.mxu0 0.0
        %3128 = vmatprep.subr.mxu0 0.0
        %3129 = vmatpush1.msra.mxu0 0.0
        %3130 = vmatprep.subr.mxu0 0.0
        %3131 = vmatpush1.msra.mxu0 0.0
        %3132 = vmatprep.subr.mxu0 0.0
        %3133 = vmatpush1.msra.mxu0 0.0
        %3134 = vmatprep.subr.mxu0 0.0
        %3135 = vmatpush1.msra.mxu0 0.0
        %3136 = vmatprep.subr.mxu0 0.0
        %3137 = vmatpush1.msra.mxu0 0.0
        %3138 = vmatprep.subr.mxu0 0.0
        %3139 = vmatpush1.msra.mxu0 0.0
        %3140 = vmatprep.subr.mxu0 0.0
        %3141 = vmatpush1.msra.mxu0 0.0
        %3142 = vmatprep.subr.mxu0 0.0
        %3143 = vmatpush1.msra.mxu0 0.0
        %3144 = vmatprep.subr.mxu0 0.0
        %3145 = vmatpush1.msra.mxu0 0.0
        %3146 = vmatprep.subr.mxu0 0.0
        %3147 = vmatpush1.msra.mxu0 0.0
        %3148 = vmatprep.subr.mxu0 0.0
        %3149 = vmatpush1.msra.mxu0 0.0
        %3150 = vmatprep.subr.mxu0 0.0
        %3151 = vmatpush1.msra.mxu0 0.0
        %3152 = vmatprep.subr.mxu0 0.0
        %3153 = vmatpush1.msra.mxu0 0.0
        %3154 = vmatprep.subr.mxu0 0.0
        %3155 = vmatpush1.msra.mxu0 0.0
        %3156 = vmatprep.subr.mxu0 0.0
        %3157 = vmatpush1.msra.mxu0 0.0
        %3158 = vmatprep.subr.mxu0 0.0
        %3159 = vmatpush1.msra.mxu0 0.0
        %3160 = vmatprep.mubr.f32.mxu0 0.0
        %v3161 = vand.u32 %v2891, 4294901760
        %3162 = vmatmul.mubr.f32.gmra.mrb[0].mxu0 %v3161
        %v3163 = vpop.f32.mrb[0].mxu0
        %v3164 = vadd.f32 %v2993, %v3163
        %v3165 = vpop.f32.mrb[0].mxu0
        %3166 = vmatprep.mubr.f32.mxu0 0.0
        %v3167 = vand.u32 %v2894, 4294901760
        %3168 = vmatmul.mubr.f32.gmra.mrb[0].mxu0 %v3167
        %v3169 = vpop.f32.mrb[0].mxu0
        %v3170 = vadd.f32 %v3003, %v3169
        %v3171 = vpop.f32.mrb[0].mxu0
        %3172 = vmatprep.mubr.f32.mxu0 0.0
        %v3173 = vand.u32 %v2897, 4294901760
        %3174 = vmatmul.mubr.f32.gmra.mrb[0].mxu0 %v3173
        %v3175 = vpop.f32.mrb[0].mxu0
        %v3176 = vadd.f32 %v3013, %v3175
        %v3177 = vpop.f32.mrb[0].mxu0
        %3178 = vmatprep.mubr.f32.mxu0 0.0
        %v3179 = vand.u32 %v2900, 4294901760
        %3180 = vmatmul.mubr.f32.gmra.mrb[0].mxu0 %v3179
        %v3181 = vpop.f32.mrb[0].mxu0
        %v3182 = vadd.f32 %v3023, %v3181
        %v3183 = vpop.f32.mrb[0].mxu0
        %3184 = vmatprep.mubr.f32.mxu0 0.0
        %v3185 = vand.u32 %v2903, 4294901760
        %3186 = vmatmul.mubr.f32.gmra.mrb[0].mxu0 %v3185
        %v3187 = vpop.f32.mrb[0].mxu0
        %v3188 = vadd.f32 %v3033, %v3187
        %v3189 = vpop.f32.mrb[0].mxu0
        %3190 = vmatprep.mubr.f32.mxu0 0.0
        %v3191 = vand.u32 %v2906, 4294901760
        %3192 = vmatmul.mubr.f32.gmra.mrb[0].mxu0 %v3191
        %v3193 = vpop.f32.mrb[0].mxu0
        %v3194 = vadd.f32 %v3043, %v3193
        %v3195 = vpop.f32.mrb[0].mxu0
        %3196 = vmatprep.mubr.f32.mxu0 0.0
        %v3197 = vand.u32 %v2909, 4294901760
        %3198 = vmatmul.mubr.f32.gmra.mrb[0].mxu0 %v3197
        %v3199 = vpop.f32.mrb[0].mxu0
        %v3200 = vadd.f32 %v3053, %v3199
        %v3201 = vpop.f32.mrb[0].mxu0
        %3202 = vmatprep.mubr.f32.mxu0 0.0
        %v3203 = vand.u32 %v2912, 4294901760
        %3204 = vmatmul.mubr.f32.gmra.mrb[0].mxu0 %v3203
        %v3205 = vpop.f32.mrb[0].mxu0
        %v3206 = vadd.f32 %v3063, %v3205
        %v3207 = vpop.f32.mrb[0].mxu0
        %3208 = vmatprep.mubr.f32.mxu0 0.0
        %v3209 = vand.u32 %v2915, 4294901760
        %3210 = vmatmul.mubr.f32.gmra.mrb[0].mxu0 %v3209
        %v3211 = vpop.f32.mrb[0].mxu0
        %v3212 = vadd.f32 %v3073, %v3211
        %v3213 = vpop.f32.mrb[0].mxu0
        %3214 = vdwg.mxu0
        %3215 = vmatprep.subr.mxu0 0.0
        %v3216 = vand.u32 %v2886, 4294901760
        %v3217 = vsub.f32 %v2886, %v3216
        %3218 = vmatpush1.msra.mxu0 %v3217
        %3219 = vmatprep.subr.mxu0 0.0
        %v3220 = vand.u32 %v2887, 4294901760
        %v3221 = vsub.f32 %v2887, %v3220
        %3222 = vmatpush1.msra.mxu0 %v3221
        %3223 = vmatprep.subr.mxu0 0.0
        %v3224 = vand.u32 %v2888, 4294901760
        %v3225 = vsub.f32 %v2888, %v3224
        %3226 = vmatpush1.msra.mxu0 %v3225
        %3227 = vmatprep.subr.mxu0 0.0
        %v3228 = vand.u32 %v2889, 4294901760
        %v3229 = vsub.f32 %v2889, %v3228
        %3230 = vmatpush1.msra.mxu0 %v3229
        %3231 = vmatprep.subr.mxu0 0.0
        %3232 = vmatpush1.msra.mxu0 0.0
        %3233 = vmatprep.subr.mxu0 0.0
        %3234 = vmatpush1.msra.mxu0 0.0
        %3235 = vmatprep.subr.mxu0 0.0
        %3236 = vmatpush1.msra.mxu0 0.0
        %3237 = vmatprep.subr.mxu0 0.0
        %3238 = vmatpush1.msra.mxu0 0.0
        %3239 = vmatprep.subr.mxu0 0.0
        %3240 = vmatpush1.msra.mxu0 0.0
        %3241 = vmatprep.subr.mxu0 0.0
        %3242 = vmatpush1.msra.mxu0 0.0
        %3243 = vmatprep.subr.mxu0 0.0
        %3244 = vmatpush1.msra.mxu0 0.0
        %3245 = vmatprep.subr.mxu0 0.0
        %3246 = vmatpush1.msra.mxu0 0.0
        %3247 = vmatprep.subr.mxu0 0.0
        %3248 = vmatpush1.msra.mxu0 0.0
        %3249 = vmatprep.subr.mxu0 0.0
        %3250 = vmatpush1.msra.mxu0 0.0
        %3251 = vmatprep.subr.mxu0 0.0
        %3252 = vmatpush1.msra.mxu0 0.0
        %3253 = vmatprep.subr.mxu0 0.0
        %3254 = vmatpush1.msra.mxu0 0.0
        %3255 = vmatprep.subr.mxu0 0.0
        %3256 = vmatpush1.msra.mxu0 0.0
        %3257 = vmatprep.subr.mxu0 0.0
        %3258 = vmatpush1.msra.mxu0 0.0
        %3259 = vmatprep.subr.mxu0 0.0
        %3260 = vmatpush1.msra.mxu0 0.0
        %3261 = vmatprep.subr.mxu0 0.0
        %3262 = vmatpush1.msra.mxu0 0.0
        %3263 = vmatprep.subr.mxu0 0.0
        %3264 = vmatpush1.msra.mxu0 0.0
        %3265 = vmatprep.subr.mxu0 0.0
        %3266 = vmatpush1.msra.mxu0 0.0
        %3267 = vmatprep.subr.mxu0 0.0
        %3268 = vmatpush1.msra.mxu0 0.0
        %3269 = vmatprep.subr.mxu0 0.0
        %3270 = vmatpush1.msra.mxu0 0.0
        %3271 = vmatprep.subr.mxu0 0.0
        %3272 = vmatpush1.msra.mxu0 0.0
        %3273 = vmatprep.subr.mxu0 0.0
        %3274 = vmatpush1.msra.mxu0 0.0
        %3275 = vmatprep.subr.mxu0 0.0
        %3276 = vmatpush1.msra.mxu0 0.0
        %3277 = vmatprep.subr.mxu0 0.0
        %3278 = vmatpush1.msra.mxu0 0.0
        %3279 = vmatprep.subr.mxu0 0.0
        %3280 = vmatpush1.msra.mxu0 0.0
        %3281 = vmatprep.subr.mxu0 0.0
        %3282 = vmatpush1.msra.mxu0 0.0
        %3283 = vmatprep.subr.mxu0 0.0
        %3284 = vmatpush1.msra.mxu0 0.0
        %3285 = vmatprep.subr.mxu0 0.0
        %3286 = vmatpush1.msra.mxu0 0.0
        %3287 = vmatprep.mubr.f32.mxu0 0.0
        %v3288 = vand.u32 %v2891, 4294901760
        %v3289 = vsub.f32 %v2891, %v3288
        %3290 = vmatmul.mubr.f32.gmra.mrb[0].mxu0 %v3289
        %v3291 = vpop.f32.mrb[0].mxu0
        %v3292 = vadd.f32 %v3164, %v3291
        %v3293 = vpop.f32.mrb[0].mxu0
        %3294 = vmatprep.mubr.f32.mxu0 0.0
        %v3295 = vand.u32 %v2894, 4294901760
        %v3296 = vsub.f32 %v2894, %v3295
        %3297 = vmatmul.mubr.f32.gmra.mrb[0].mxu0 %v3296
        %v3298 = vpop.f32.mrb[0].mxu0
        %v3299 = vadd.f32 %v3170, %v3298
        %v3300 = vpop.f32.mrb[0].mxu0
        %3301 = vmatprep.mubr.f32.mxu0 0.0
        %v3302 = vand.u32 %v2897, 4294901760
        %v3303 = vsub.f32 %v2897, %v3302
        %3304 = vmatmul.mubr.f32.gmra.mrb[0].mxu0 %v3303
        %v3305 = vpop.f32.mrb[0].mxu0
        %v3306 = vadd.f32 %v3176, %v3305
        %v3307 = vpop.f32.mrb[0].mxu0
        %3308 = vmatprep.mubr.f32.mxu0 0.0
        %v3309 = vand.u32 %v2900, 4294901760
        %v3310 = vsub.f32 %v2900, %v3309
        %3311 = vmatmul.mubr.f32.gmra.mrb[0].mxu0 %v3310
        %v3312 = vpop.f32.mrb[0].mxu0
        %v3313 = vadd.f32 %v3182, %v3312
        %v3314 = vpop.f32.mrb[0].mxu0
        %3315 = vmatprep.mubr.f32.mxu0 0.0
        %v3316 = vand.u32 %v2903, 4294901760
        %v3317 = vsub.f32 %v2903, %v3316
        %3318 = vmatmul.mubr.f32.gmra.mrb[0].mxu0 %v3317
        %v3319 = vpop.f32.mrb[0].mxu0
        %v3320 = vadd.f32 %v3188, %v3319
        %v3321 = vpop.f32.mrb[0].mxu0
        %3322 = vmatprep.mubr.f32.mxu0 0.0
        %v3323 = vand.u32 %v2906, 4294901760
        %v3324 = vsub.f32 %v2906, %v3323
        %3325 = vmatmul.mubr.f32.gmra.mrb[0].mxu0 %v3324
        %v3326 = vpop.f32.mrb[0].mxu0
        %v3327 = vadd.f32 %v3194, %v3326
        %v3328 = vpop.f32.mrb[0].mxu0
        %3329 = vmatprep.mubr.f32.mxu0 0.0
        %v3330 = vand.u32 %v2909, 4294901760
        %v3331 = vsub.f32 %v2909, %v3330
        %3332 = vmatmul.mubr.f32.gmra.mrb[0].mxu0 %v3331
        %v3333 = vpop.f32.mrb[0].mxu0
        %v3334 = vadd.f32 %v3200, %v3333
        %v3335 = vpop.f32.mrb[0].mxu0
        %3336 = vmatprep.mubr.f32.mxu0 0.0
        %v3337 = vand.u32 %v2912, 4294901760
        %v3338 = vsub.f32 %v2912, %v3337
        %3339 = vmatmul.mubr.f32.gmra.mrb[0].mxu0 %v3338
        %v3340 = vpop.f32.mrb[0].mxu0
        %v3341 = vadd.f32 %v3206, %v3340
        %v3342 = vpop.f32.mrb[0].mxu0
        %3343 = vmatprep.mubr.f32.mxu0 0.0
        %v3344 = vand.u32 %v2915, 4294901760
        %v3345 = vsub.f32 %v2915, %v3344
        %3346 = vmatmul.mubr.f32.gmra.mrb[0].mxu0 %v3345
        %v3347 = vpop.f32.mrb[0].mxu0
        %v3348 = vadd.f32 %v3212, %v3347
        %v3349 = vpop.f32.mrb[0].mxu0
        %3350 = vdwg.mxu0
        %3351 = vmatprep.subr.mxu0 0.0
        %v3352 = vand.u32 %v2886, 4294901760
        %3353 = vmatpush1.msra.mxu0 %v3352
        %3354 = vmatprep.subr.mxu0 0.0
        %v3355 = vand.u32 %v2887, 4294901760
        %3356 = vmatpush1.msra.mxu0 %v3355
        %3357 = vmatprep.subr.mxu0 0.0
        %v3358 = vand.u32 %v2888, 4294901760
        %3359 = vmatpush1.msra.mxu0 %v3358
        %3360 = vmatprep.subr.mxu0 0.0
        %v3361 = vand.u32 %v2889, 4294901760
        %3362 = vmatpush1.msra.mxu0 %v3361
        %3363 = vmatprep.subr.mxu0 0.0
        %3364 = vmatpush1.msra.mxu0 0.0
        %3365 = vmatprep.subr.mxu0 0.0
        %3366 = vmatpush1.msra.mxu0 0.0
        %3367 = vmatprep.subr.mxu0 0.0
        %3368 = vmatpush1.msra.mxu0 0.0
        %3369 = vmatprep.subr.mxu0 0.0
        %3370 = vmatpush1.msra.mxu0 0.0
        %3371 = vmatprep.subr.mxu0 0.0
        %3372 = vmatpush1.msra.mxu0 0.0
        %3373 = vmatprep.subr.mxu0 0.0
        %3374 = vmatpush1.msra.mxu0 0.0
        %3375 = vmatprep.subr.mxu0 0.0
        %3376 = vmatpush1.msra.mxu0 0.0
        %3377 = vmatprep.subr.mxu0 0.0
        %3378 = vmatpush1.msra.mxu0 0.0
        %3379 = vmatprep.subr.mxu0 0.0
        %3380 = vmatpush1.msra.mxu0 0.0
        %3381 = vmatprep.subr.mxu0 0.0
        %3382 = vmatpush1.msra.mxu0 0.0
        %3383 = vmatprep.subr.mxu0 0.0
        %3384 = vmatpush1.msra.mxu0 0.0
        %3385 = vmatprep.subr.mxu0 0.0
        %3386 = vmatpush1.msra.mxu0 0.0
        %3387 = vmatprep.subr.mxu0 0.0
        %3388 = vmatpush1.msra.mxu0 0.0
        %3389 = vmatprep.subr.mxu0 0.0
        %3390 = vmatpush1.msra.mxu0 0.0
        %3391 = vmatprep.subr.mxu0 0.0
        %3392 = vmatpush1.msra.mxu0 0.0
        %3393 = vmatprep.subr.mxu0 0.0
        %3394 = vmatpush1.msra.mxu0 0.0
        %3395 = vmatprep.subr.mxu0 0.0
        %3396 = vmatpush1.msra.mxu0 0.0
        %3397 = vmatprep.subr.mxu0 0.0
        %3398 = vmatpush1.msra.mxu0 0.0
        %3399 = vmatprep.subr.mxu0 0.0
        %3400 = vmatpush1.msra.mxu0 0.0
        %3401 = vmatprep.subr.mxu0 0.0
        %3402 = vmatpush1.msra.mxu0 0.0
        %3403 = vmatprep.subr.mxu0 0.0
        %3404 = vmatpush1.msra.mxu0 0.0
        %3405 = vmatprep.subr.mxu0 0.0
        %3406 = vmatpush1.msra.mxu0 0.0
        %3407 = vmatprep.subr.mxu0 0.0
        %3408 = vmatpush1.msra.mxu0 0.0
        %3409 = vmatprep.subr.mxu0 0.0
        %3410 = vmatpush1.msra.mxu0 0.0
        %3411 = vmatprep.subr.mxu0 0.0
        %3412 = vmatpush1.msra.mxu0 0.0
        %3413 = vmatprep.subr.mxu0 0.0
        %3414 = vmatpush1.msra.mxu0 0.0
        %3415 = vmatprep.subr.mxu0 0.0
        %3416 = vmatpush1.msra.mxu0 0.0
        %3417 = vmatprep.subr.mxu0 0.0
        %3418 = vmatpush1.msra.mxu0 0.0
        %3419 = vmatprep.mubr.f32.mxu0 0.0
        %v3420 = vand.u32 %v2891, 4294901760
        %v3421 = vsub.f32 %v2891, %v3420
        %v3422 = vand.u32 %v3421, 4294901760
        %3423 = vmatmul.mubr.f32.gmra.mrb[0].mxu0 %v3422
        %v3424 = vpop.f32.mrb[0].mxu0
        %v3425 = vadd.f32 %v3292, %v3424
        %v3426 = vpop.f32.mrb[0].mxu0
        %3427 = vmatprep.mubr.f32.mxu0 0.0
        %v3428 = vand.u32 %v2894, 4294901760
        %v3429 = vsub.f32 %v2894, %v3428
        %v3430 = vand.u32 %v3429, 4294901760
        %3431 = vmatmul.mubr.f32.gmra.mrb[0].mxu0 %v3430
        %v3432 = vpop.f32.mrb[0].mxu0
        %v3433 = vadd.f32 %v3299, %v3432
        %v3434 = vpop.f32.mrb[0].mxu0
        %3435 = vmatprep.mubr.f32.mxu0 0.0
        %v3436 = vand.u32 %v2897, 4294901760
        %v3437 = vsub.f32 %v2897, %v3436
        %v3438 = vand.u32 %v3437, 4294901760
        %3439 = vmatmul.mubr.f32.gmra.mrb[0].mxu0 %v3438
        %v3440 = vpop.f32.mrb[0].mxu0
        %v3441 = vadd.f32 %v3306, %v3440
        %v3442 = vpop.f32.mrb[0].mxu0
        %3443 = vmatprep.mubr.f32.mxu0 0.0
        %v3444 = vand.u32 %v2900, 4294901760
        %v3445 = vsub.f32 %v2900, %v3444
        %v3446 = vand.u32 %v3445, 4294901760
        %3447 = vmatmul.mubr.f32.gmra.mrb[0].mxu0 %v3446
        %v3448 = vpop.f32.mrb[0].mxu0
        %v3449 = vadd.f32 %v3313, %v3448
        %v3450 = vpop.f32.mrb[0].mxu0
        %3451 = vmatprep.mubr.f32.mxu0 0.0
        %v3452 = vand.u32 %v2903, 4294901760
        %v3453 = vsub.f32 %v2903, %v3452
        %v3454 = vand.u32 %v3453, 4294901760
        %3455 = vmatmul.mubr.f32.gmra.mrb[0].mxu0 %v3454
        %v3456 = vpop.f32.mrb[0].mxu0
        %v3457 = vadd.f32 %v3320, %v3456
        %v3458 = vpop.f32.mrb[0].mxu0
        %3459 = vmatprep.mubr.f32.mxu0 0.0
        %v3460 = vand.u32 %v2906, 4294901760
        %v3461 = vsub.f32 %v2906, %v3460
        %v3462 = vand.u32 %v3461, 4294901760
        %3463 = vmatmul.mubr.f32.gmra.mrb[0].mxu0 %v3462
        %v3464 = vpop.f32.mrb[0].mxu0
        %v3465 = vadd.f32 %v3327, %v3464
        %v3466 = vpop.f32.mrb[0].mxu0
        %3467 = vmatprep.mubr.f32.mxu0 0.0
        %v3468 = vand.u32 %v2909, 4294901760
        %v3469 = vsub.f32 %v2909, %v3468
        %v3470 = vand.u32 %v3469, 4294901760
        %3471 = vmatmul.mubr.f32.gmra.mrb[0].mxu0 %v3470
        %v3472 = vpop.f32.mrb[0].mxu0
        %v3473 = vadd.f32 %v3334, %v3472
        %v3474 = vpop.f32.mrb[0].mxu0
        %3475 = vmatprep.mubr.f32.mxu0 0.0
        %v3476 = vand.u32 %v2912, 4294901760
        %v3477 = vsub.f32 %v2912, %v3476
        %v3478 = vand.u32 %v3477, 4294901760
        %3479 = vmatmul.mubr.f32.gmra.mrb[0].mxu0 %v3478
        %v3480 = vpop.f32.mrb[0].mxu0
        %v3481 = vadd.f32 %v3341, %v3480
        %v3482 = vpop.f32.mrb[0].mxu0
        %3483 = vmatprep.mubr.f32.mxu0 0.0
        %v3484 = vand.u32 %v2915, 4294901760
        %v3485 = vsub.f32 %v2915, %v3484
        %v3486 = vand.u32 %v3485, 4294901760
        %3487 = vmatmul.mubr.f32.gmra.mrb[0].mxu0 %v3486
        %v3488 = vpop.f32.mrb[0].mxu0
        %v3489 = vadd.f32 %v3348, %v3488
        %v3490 = vpop.f32.mrb[0].mxu0
        %3491 = vdwg.mxu0
        %3492 = vmatprep.subr.mxu0 0.0
        %v3493 = vand.u32 %v2886, 4294901760
        %v3494 = vsub.f32 %v2886, %v3493
        %v3495 = vand.u32 %v3494, 4294901760
        %3496 = vmatpush1.msra.mxu0 %v3495
        %3497 = vmatprep.subr.mxu0 0.0
        %v3498 = vand.u32 %v2887, 4294901760
        %v3499 = vsub.f32 %v2887, %v3498
        %v3500 = vand.u32 %v3499, 4294901760
        %3501 = vmatpush1.msra.mxu0 %v3500
        %3502 = vmatprep.subr.mxu0 0.0
        %v3503 = vand.u32 %v2888, 4294901760
        %v3504 = vsub.f32 %v2888, %v3503
        %v3505 = vand.u32 %v3504, 4294901760
        %3506 = vmatpush1.msra.mxu0 %v3505
        %3507 = vmatprep.subr.mxu0 0.0
        %v3508 = vand.u32 %v2889, 4294901760
        %v3509 = vsub.f32 %v2889, %v3508
        %v3510 = vand.u32 %v3509, 4294901760
        %3511 = vmatpush1.msra.mxu0 %v3510
        %3512 = vmatprep.subr.mxu0 0.0
        %3513 = vmatpush1.msra.mxu0 0.0
        %3514 = vmatprep.subr.mxu0 0.0
        %3515 = vmatpush1.msra.mxu0 0.0
        %3516 = vmatprep.subr.mxu0 0.0
        %3517 = vmatpush1.msra.mxu0 0.0
        %3518 = vmatprep.subr.mxu0 0.0
        %3519 = vmatpush1.msra.mxu0 0.0
        %3520 = vmatprep.subr.mxu0 0.0
        %3521 = vmatpush1.msra.mxu0 0.0
        %3522 = vmatprep.subr.mxu0 0.0
        %3523 = vmatpush1.msra.mxu0 0.0
        %3524 = vmatprep.subr.mxu0 0.0
        %3525 = vmatpush1.msra.mxu0 0.0
        %3526 = vmatprep.subr.mxu0 0.0
        %3527 = vmatpush1.msra.mxu0 0.0
        %3528 = vmatprep.subr.mxu0 0.0
        %3529 = vmatpush1.msra.mxu0 0.0
        %3530 = vmatprep.subr.mxu0 0.0
        %3531 = vmatpush1.msra.mxu0 0.0
        %3532 = vmatprep.subr.mxu0 0.0
        %3533 = vmatpush1.msra.mxu0 0.0
        %3534 = vmatprep.subr.mxu0 0.0
        %3535 = vmatpush1.msra.mxu0 0.0
        %3536 = vmatprep.subr.mxu0 0.0
        %3537 = vmatpush1.msra.mxu0 0.0
        %3538 = vmatprep.subr.mxu0 0.0
        %3539 = vmatpush1.msra.mxu0 0.0
        %3540 = vmatprep.subr.mxu0 0.0
        %3541 = vmatpush1.msra.mxu0 0.0
        %3542 = vmatprep.subr.mxu0 0.0
        %3543 = vmatpush1.msra.mxu0 0.0
        %3544 = vmatprep.subr.mxu0 0.0
        %3545 = vmatpush1.msra.mxu0 0.0
        %3546 = vmatprep.subr.mxu0 0.0
        %3547 = vmatpush1.msra.mxu0 0.0
        %3548 = vmatprep.subr.mxu0 0.0
        %3549 = vmatpush1.msra.mxu0 0.0
        %3550 = vmatprep.subr.mxu0 0.0
        %3551 = vmatpush1.msra.mxu0 0.0
        %3552 = vmatprep.subr.mxu0 0.0
        %3553 = vmatpush1.msra.mxu0 0.0
        %3554 = vmatprep.subr.mxu0 0.0
        %3555 = vmatpush1.msra.mxu0 0.0
        %3556 = vmatprep.subr.mxu0 0.0
        %3557 = vmatpush1.msra.mxu0 0.0
        %3558 = vmatprep.subr.mxu0 0.0
        %3559 = vmatpush1.msra.mxu0 0.0
        %3560 = vmatprep.subr.mxu0 0.0
        %3561 = vmatpush1.msra.mxu0 0.0
        %3562 = vmatprep.subr.mxu0 0.0
        %3563 = vmatpush1.msra.mxu0 0.0
        %3564 = vmatprep.subr.mxu0 0.0
        %3565 = vmatpush1.msra.mxu0 0.0
        %3566 = vmatprep.subr.mxu0 0.0
        %3567 = vmatpush1.msra.mxu0 0.0
        %3568 = vmatprep.mubr.f32.mxu0 0.0
        %v3569 = vand.u32 %v2891, 4294901760
        %3570 = vmatmul.mubr.f32.gmra.mrb[0].mxu0 %v3569
        %v3571 = vpop.f32.mrb[0].mxu0
        %v3572 = vadd.f32 %v3425, %v3571
        %v3573 = vpop.f32.mrb[0].mxu0
        %3574 = vmatprep.mubr.f32.mxu0 0.0
        %v3575 = vand.u32 %v2894, 4294901760
        %3576 = vmatmul.mubr.f32.gmra.mrb[0].mxu0 %v3575
        %v3577 = vpop.f32.mrb[0].mxu0
        %v3578 = vadd.f32 %v3433, %v3577
        %v3579 = vpop.f32.mrb[0].mxu0
        %3580 = vmatprep.mubr.f32.mxu0 0.0
        %v3581 = vand.u32 %v2897, 4294901760
        %3582 = vmatmul.mubr.f32.gmra.mrb[0].mxu0 %v3581
        %v3583 = vpop.f32.mrb[0].mxu0
        %v3584 = vadd.f32 %v3441, %v3583
        %v3585 = vpop.f32.mrb[0].mxu0
        %3586 = vmatprep.mubr.f32.mxu0 0.0
        %v3587 = vand.u32 %v2900, 4294901760
        %3588 = vmatmul.mubr.f32.gmra.mrb[0].mxu0 %v3587
        %v3589 = vpop.f32.mrb[0].mxu0
        %v3590 = vadd.f32 %v3449, %v3589
        %v3591 = vpop.f32.mrb[0].mxu0
        %3592 = vmatprep.mubr.f32.mxu0 0.0
        %v3593 = vand.u32 %v2903, 4294901760
        %3594 = vmatmul.mubr.f32.gmra.mrb[0].mxu0 %v3593
        %v3595 = vpop.f32.mrb[0].mxu0
        %v3596 = vadd.f32 %v3457, %v3595
        %v3597 = vpop.f32.mrb[0].mxu0
        %3598 = vmatprep.mubr.f32.mxu0 0.0
        %v3599 = vand.u32 %v2906, 4294901760
        %3600 = vmatmul.mubr.f32.gmra.mrb[0].mxu0 %v3599
        %v3601 = vpop.f32.mrb[0].mxu0
        %v3602 = vadd.f32 %v3465, %v3601
        %v3603 = vpop.f32.mrb[0].mxu0
        %3604 = vmatprep.mubr.f32.mxu0 0.0
        %v3605 = vand.u32 %v2909, 4294901760
        %3606 = vmatmul.mubr.f32.gmra.mrb[0].mxu0 %v3605
        %v3607 = vpop.f32.mrb[0].mxu0
        %v3608 = vadd.f32 %v3473, %v3607
        %v3609 = vpop.f32.mrb[0].mxu0
        %3610 = vmatprep.mubr.f32.mxu0 0.0
        %v3611 = vand.u32 %v2912, 4294901760
        %3612 = vmatmul.mubr.f32.gmra.mrb[0].mxu0 %v3611
        %v3613 = vpop.f32.mrb[0].mxu0
        %v3614 = vadd.f32 %v3481, %v3613
        %v3615 = vpop.f32.mrb[0].mxu0
        %3616 = vmatprep.mubr.f32.mxu0 0.0
        %v3617 = vand.u32 %v2915, 4294901760
        %3618 = vmatmul.mubr.f32.gmra.mrb[0].mxu0 %v3617
        %v3619 = vpop.f32.mrb[0].mxu0
        %v3620 = vadd.f32 %v3489, %v3619
        %v3621 = vpop.f32.mrb[0].mxu0
        %3622 = vdwg.mxu0
        %3623 = vmatprep.subr.mxu0 0.0
        %v3624 = vand.u32 %v2886, 4294901760
        %3625 = vmatpush1.msra.mxu0 %v3624
        %3626 = vmatprep.subr.mxu0 0.0
        %v3627 = vand.u32 %v2887, 4294901760
        %3628 = vmatpush1.msra.mxu0 %v3627
        %3629 = vmatprep.subr.mxu0 0.0
        %v3630 = vand.u32 %v2888, 4294901760
        %3631 = vmatpush1.msra.mxu0 %v3630
        %3632 = vmatprep.subr.mxu0 0.0
        %v3633 = vand.u32 %v2889, 4294901760
        %3634 = vmatpush1.msra.mxu0 %v3633
        %3635 = vmatprep.subr.mxu0 0.0
        %3636 = vmatpush1.msra.mxu0 0.0
        %3637 = vmatprep.subr.mxu0 0.0
        %3638 = vmatpush1.msra.mxu0 0.0
        %3639 = vmatprep.subr.mxu0 0.0
        %3640 = vmatpush1.msra.mxu0 0.0
        %3641 = vmatprep.subr.mxu0 0.0
        %3642 = vmatpush1.msra.mxu0 0.0
        %3643 = vmatprep.subr.mxu0 0.0
        %3644 = vmatpush1.msra.mxu0 0.0
        %3645 = vmatprep.subr.mxu0 0.0
        %3646 = vmatpush1.msra.mxu0 0.0
        %3647 = vmatprep.subr.mxu0 0.0
        %3648 = vmatpush1.msra.mxu0 0.0
        %3649 = vmatprep.subr.mxu0 0.0
        %3650 = vmatpush1.msra.mxu0 0.0
        %3651 = vmatprep.subr.mxu0 0.0
        %3652 = vmatpush1.msra.mxu0 0.0
        %3653 = vmatprep.subr.mxu0 0.0
        %3654 = vmatpush1.msra.mxu0 0.0
        %3655 = vmatprep.subr.mxu0 0.0
        %3656 = vmatpush1.msra.mxu0 0.0
        %3657 = vmatprep.subr.mxu0 0.0
        %3658 = vmatpush1.msra.mxu0 0.0
        %3659 = vmatprep.subr.mxu0 0.0
        %3660 = vmatpush1.msra.mxu0 0.0
        %3661 = vmatprep.subr.mxu0 0.0
        %3662 = vmatpush1.msra.mxu0 0.0
        %3663 = vmatprep.subr.mxu0 0.0
        %3664 = vmatpush1.msra.mxu0 0.0
        %3665 = vmatprep.subr.mxu0 0.0
        %3666 = vmatpush1.msra.mxu0 0.0
        %3667 = vmatprep.subr.mxu0 0.0
        %3668 = vmatpush1.msra.mxu0 0.0
        %3669 = vmatprep.subr.mxu0 0.0
        %3670 = vmatpush1.msra.mxu0 0.0
        %3671 = vmatprep.subr.mxu0 0.0
        %3672 = vmatpush1.msra.mxu0 0.0
        %3673 = vmatprep.subr.mxu0 0.0
        %3674 = vmatpush1.msra.mxu0 0.0
        %3675 = vmatprep.subr.mxu0 0.0
        %3676 = vmatpush1.msra.mxu0 0.0
        %3677 = vmatprep.subr.mxu0 0.0
        %3678 = vmatpush1.msra.mxu0 0.0
        %3679 = vmatprep.subr.mxu0 0.0
        %3680 = vmatpush1.msra.mxu0 0.0
        %3681 = vmatprep.subr.mxu0 0.0
        %3682 = vmatpush1.msra.mxu0 0.0
        %3683 = vmatprep.subr.mxu0 0.0
        %3684 = vmatpush1.msra.mxu0 0.0
        %3685 = vmatprep.subr.mxu0 0.0
        %3686 = vmatpush1.msra.mxu0 0.0
        %3687 = vmatprep.subr.mxu0 0.0
        %3688 = vmatpush1.msra.mxu0 0.0
        %3689 = vmatprep.subr.mxu0 0.0
        %3690 = vmatpush1.msra.mxu0 0.0
        %3691 = vmatprep.mubr.f32.mxu0 0.0
        %v3692 = vand.u32 %v2891, 4294901760
        %3693 = vmatmul.mubr.f32.gmra.mrb[0].mxu0 %v3692
        %v3694 = vpop.f32.mrb[0].mxu0
        %v3695 = vadd.f32 %v3572, %v3694
        %v3696 = vpop.f32.mrb[0].mxu0
        %3697 = vmatprep.mubr.f32.mxu0 0.0
        %v3698 = vand.u32 %v2894, 4294901760
        %3699 = vmatmul.mubr.f32.gmra.mrb[0].mxu0 %v3698
        %v3700 = vpop.f32.mrb[0].mxu0
        %v3701 = vadd.f32 %v3578, %v3700
        %v3702 = vpop.f32.mrb[0].mxu0
        %3703 = vmatprep.mubr.f32.mxu0 0.0
        %v3704 = vand.u32 %v2897, 4294901760
        %3705 = vmatmul.mubr.f32.gmra.mrb[0].mxu0 %v3704
        %v3706 = vpop.f32.mrb[0].mxu0
        %v3707 = vadd.f32 %v3584, %v3706
        %v3708 = vpop.f32.mrb[0].mxu0
        %3709 = vmatprep.mubr.f32.mxu0 0.0
        %v3710 = vand.u32 %v2900, 4294901760
        %3711 = vmatmul.mubr.f32.gmra.mrb[0].mxu0 %v3710
        %v3712 = vpop.f32.mrb[0].mxu0
        %v3713 = vadd.f32 %v3590, %v3712
        %v3714 = vpop.f32.mrb[0].mxu0
        %3715 = vmatprep.mubr.f32.mxu0 0.0
        %v3716 = vand.u32 %v2903, 4294901760
        %3717 = vmatmul.mubr.f32.gmra.mrb[0].mxu0 %v3716
        %v3718 = vpop.f32.mrb[0].mxu0
        %v3719 = vadd.f32 %v3596, %v3718
        %v3720 = vpop.f32.mrb[0].mxu0
        %3721 = vmatprep.mubr.f32.mxu0 0.0
        %v3722 = vand.u32 %v2906, 4294901760
        %3723 = vmatmul.mubr.f32.gmra.mrb[0].mxu0 %v3722
        %v3724 = vpop.f32.mrb[0].mxu0
        %v3725 = vadd.f32 %v3602, %v3724
        %v3726 = vpop.f32.mrb[0].mxu0
        %3727 = vmatprep.mubr.f32.mxu0 0.0
        %v3728 = vand.u32 %v2909, 4294901760
        %3729 = vmatmul.mubr.f32.gmra.mrb[0].mxu0 %v3728
        %v3730 = vpop.f32.mrb[0].mxu0
        %v3731 = vadd.f32 %v3608, %v3730
        %v3732 = vpop.f32.mrb[0].mxu0
        %3733 = vmatprep.mubr.f32.mxu0 0.0
        %v3734 = vand.u32 %v2912, 4294901760
        %3735 = vmatmul.mubr.f32.gmra.mrb[0].mxu0 %v3734
        %v3736 = vpop.f32.mrb[0].mxu0
        %v3737 = vadd.f32 %v3614, %v3736
        %v3738 = vpop.f32.mrb[0].mxu0
        %3739 = vmatprep.mubr.f32.mxu0 0.0
        %v3740 = vand.u32 %v2915, 4294901760
        %3741 = vmatmul.mubr.f32.gmra.mrb[0].mxu0 %v3740
        %v3742 = vpop.f32.mrb[0].mxu0
        %v3743 = vadd.f32 %v3620, %v3742
        %v3744 = vpop.f32.mrb[0].mxu0
        %3745 = vdwg.mxu0
        %vm3746 = vcmask 130048
        %3747 = vst.msk [vmem:[%s7] sm:$0xff] %vm3746, %v3695
        %3748 = vst.msk [vmem:[%s7 + $0x8] sm:$0xff] %vm3746, %v3701
        %3749 = vst.msk [vmem:[%s7 + $0x10] sm:$0xff] %vm3746, %v3707
        %3750 = vst.msk [vmem:[%s7 + $0x18] sm:$0xff] %vm3746, %v3713
        %3751 = vst.msk [vmem:[%s7 + $0x20] sm:$0xff] %vm3746, %v3719
        %3752 = vst.msk [vmem:[%s7 + $0x28] sm:$0xff] %vm3746, %v3725
        %3753 = vst.msk [vmem:[%s7 + $0x30] sm:$0xff] %vm3746, %v3731
        %3754 = vst.msk [vmem:[%s7 + $0x38] sm:$0xff] %vm3746, %v3737
        %vm3755 = vcmask 126976
        %3756 = vst.msk [vmem:[%s7 + $0x40] sm:$0x1f] %vm3755, %v3743
        %s3757 = scalar_lea.vmem [#allocation4], 72
        %v3758 = vld [vmem:[%s3757] sm:$0xff]
        %v3759 = vld [vmem:[%s3757 + $0x8] sm:$0xff]
        %v3760 = vld [vmem:[%s3757 + $0x10] sm:$0xff]
        %v3761 = vld [vmem:[%s3757 + $0x18] sm:$0xff]
        %v3762 = vld [vmem:[%s3757 + $0x20] sm:$0xff]
        %v3763 = vld [vmem:[%s3757 + $0x28] sm:$0xff]
        %v3764 = vld [vmem:[%s3757 + $0x30] sm:$0xff]
        %v3765 = vld [vmem:[%s3757 + $0x38] sm:$0xff]
        %v3766 = vld [vmem:[%s3757 + $0x40] sm:$0x1f]
        %v3767 = vadd.f32 %v2738, %v3758
        %v3768 = vadd.f32 %v2739, %v3759
        %v3769 = vadd.f32 %v2740, %v3760
        %v3770 = vadd.f32 %v2741, %v3761
        %v3771 = vadd.f32 %v2742, %v3762
        %v3772 = vadd.f32 %v2743, %v3763
        %v3773 = vadd.f32 %v2744, %v3764
        %v3774 = vadd.f32 %v2745, %v3765
        %v3775 = vadd.f32 %v2746, %v3766
        %v3776 = vld [vmem:[%s2] sm:$0xff]
        %v3777 = vld [vmem:[%s2 + $0x8] sm:$0xff]
        %v3778 = vld [vmem:[%s2 + $0x10] sm:$0xff]
        %v3779 = vld [vmem:[%s2 + $0x18] sm:$0xff]
        %v3781 = vsel %vm2171, %v3767, 0
        %v3784 = vsel %vm2171, %v3768, 0
        %v3787 = vsel %vm2171, %v3769, 0
        %v3790 = vsel %vm2171, %v3770, 0
        %v3793 = vsel %vm2171, %v3771, 0
        %v3796 = vsel %vm2171, %v3772, 0
        %v3799 = vsel %vm2171, %v3773, 0
        %v3802 = vsel %vm2171, %v3774, 0
        %v3805 = vsel %vm2171, %v3775, 0
        %3807 = vmatprep.subr.mxu0 0.0
        %v3808 = vand.u32 %v3776, 4294901760
        %3809 = vmatpush1.msra.mxu0 %v3808
        %3810 = vmatprep.subr.mxu0 0.0
        %v3811 = vand.u32 %v3777, 4294901760
        %3812 = vmatpush1.msra.mxu0 %v3811
        %3813 = vmatprep.subr.mxu0 0.0
        %v3814 = vand.u32 %v3778, 4294901760
        %3815 = vmatpush1.msra.mxu0 %v3814
        %3816 = vmatprep.subr.mxu0 0.0
        %v3817 = vand.u32 %v3779, 4294901760
        %3818 = vmatpush1.msra.mxu0 %v3817
        %3819 = vmatprep.subr.mxu0 0.0
        %3820 = vmatpush1.msra.mxu0 0.0
        %3821 = vmatprep.subr.mxu0 0.0
        %3822 = vmatpush1.msra.mxu0 0.0
        %3823 = vmatprep.subr.mxu0 0.0
        %3824 = vmatpush1.msra.mxu0 0.0
        %3825 = vmatprep.subr.mxu0 0.0
        %3826 = vmatpush1.msra.mxu0 0.0
        %3827 = vmatprep.subr.mxu0 0.0
        %3828 = vmatpush1.msra.mxu0 0.0
        %3829 = vmatprep.subr.mxu0 0.0
        %3830 = vmatpush1.msra.mxu0 0.0
        %3831 = vmatprep.subr.mxu0 0.0
        %3832 = vmatpush1.msra.mxu0 0.0
        %3833 = vmatprep.subr.mxu0 0.0
        %3834 = vmatpush1.msra.mxu0 0.0
        %3835 = vmatprep.subr.mxu0 0.0
        %3836 = vmatpush1.msra.mxu0 0.0
        %3837 = vmatprep.subr.mxu0 0.0
        %3838 = vmatpush1.msra.mxu0 0.0
        %3839 = vmatprep.subr.mxu0 0.0
        %3840 = vmatpush1.msra.mxu0 0.0
        %3841 = vmatprep.subr.mxu0 0.0
        %3842 = vmatpush1.msra.mxu0 0.0
        %3843 = vmatprep.subr.mxu0 0.0
        %3844 = vmatpush1.msra.mxu0 0.0
        %3845 = vmatprep.subr.mxu0 0.0
        %3846 = vmatpush1.msra.mxu0 0.0
        %3847 = vmatprep.subr.mxu0 0.0
        %3848 = vmatpush1.msra.mxu0 0.0
        %3849 = vmatprep.subr.mxu0 0.0
        %3850 = vmatpush1.msra.mxu0 0.0
        %3851 = vmatprep.subr.mxu0 0.0
        %3852 = vmatpush1.msra.mxu0 0.0
        %3853 = vmatprep.subr.mxu0 0.0
        %3854 = vmatpush1.msra.mxu0 0.0
        %3855 = vmatprep.subr.mxu0 0.0
        %3856 = vmatpush1.msra.mxu0 0.0
        %3857 = vmatprep.subr.mxu0 0.0
        %3858 = vmatpush1.msra.mxu0 0.0
        %3859 = vmatprep.subr.mxu0 0.0
        %3860 = vmatpush1.msra.mxu0 0.0
        %3861 = vmatprep.subr.mxu0 0.0
        %3862 = vmatpush1.msra.mxu0 0.0
        %3863 = vmatprep.subr.mxu0 0.0
        %3864 = vmatpush1.msra.mxu0 0.0
        %3865 = vmatprep.subr.mxu0 0.0
        %3866 = vmatpush1.msra.mxu0 0.0
        %3867 = vmatprep.subr.mxu0 0.0
        %3868 = vmatpush1.msra.mxu0 0.0
        %3869 = vmatprep.subr.mxu0 0.0
        %3870 = vmatpush1.msra.mxu0 0.0
        %3871 = vmatprep.subr.mxu0 0.0
        %3872 = vmatpush1.msra.mxu0 0.0
        %3873 = vmatprep.subr.mxu0 0.0
        %3874 = vmatpush1.msra.mxu0 0.0
        %3875 = vmatprep.mubr.f32.mxu0 0.0
        %v3876 = vand.u32 %v3781, 4294901760
        %v3877 = vsub.f32 %v3781, %v3876
        %v3878 = vand.u32 %v3877, 4294901760
        %v3879 = vsub.f32 %v3877, %v3878
        %v3880 = vand.u32 %v3879, 4294901760
        %3881 = vmatmul.mubr.f32.gmra.mrb[0].mxu0 %v3880
        %v3882 = vpop.f32.mrb[0].mxu0
        %v3883 = vadd.f32 0.0, %v3882
        %v3884 = vpop.f32.mrb[0].mxu0
        %3885 = vmatprep.mubr.f32.mxu0 0.0
        %v3886 = vand.u32 %v3784, 4294901760
        %v3887 = vsub.f32 %v3784, %v3886
        %v3888 = vand.u32 %v3887, 4294901760
        %v3889 = vsub.f32 %v3887, %v3888
        %v3890 = vand.u32 %v3889, 4294901760
        %3891 = vmatmul.mubr.f32.gmra.mrb[0].mxu0 %v3890
        %v3892 = vpop.f32.mrb[0].mxu0
        %v3893 = vadd.f32 0.0, %v3892
        %v3894 = vpop.f32.mrb[0].mxu0
        %3895 = vmatprep.mubr.f32.mxu0 0.0
        %v3896 = vand.u32 %v3787, 4294901760
        %v3897 = vsub.f32 %v3787, %v3896
        %v3898 = vand.u32 %v3897, 4294901760
        %v3899 = vsub.f32 %v3897, %v3898
        %v3900 = vand.u32 %v3899, 4294901760
        %3901 = vmatmul.mubr.f32.gmra.mrb[0].mxu0 %v3900
        %v3902 = vpop.f32.mrb[0].mxu0
        %v3903 = vadd.f32 0.0, %v3902
        %v3904 = vpop.f32.mrb[0].mxu0
        %3905 = vmatprep.mubr.f32.mxu0 0.0
        %v3906 = vand.u32 %v3790, 4294901760
        %v3907 = vsub.f32 %v3790, %v3906
        %v3908 = vand.u32 %v3907, 4294901760
        %v3909 = vsub.f32 %v3907, %v3908
        %v3910 = vand.u32 %v3909, 4294901760
        %3911 = vmatmul.mubr.f32.gmra.mrb[0].mxu0 %v3910
        %v3912 = vpop.f32.mrb[0].mxu0
        %v3913 = vadd.f32 0.0, %v3912
        %v3914 = vpop.f32.mrb[0].mxu0
        %3915 = vmatprep.mubr.f32.mxu0 0.0
        %v3916 = vand.u32 %v3793, 4294901760
        %v3917 = vsub.f32 %v3793, %v3916
        %v3918 = vand.u32 %v3917, 4294901760
        %v3919 = vsub.f32 %v3917, %v3918
        %v3920 = vand.u32 %v3919, 4294901760
        %3921 = vmatmul.mubr.f32.gmra.mrb[0].mxu0 %v3920
        %v3922 = vpop.f32.mrb[0].mxu0
        %v3923 = vadd.f32 0.0, %v3922
        %v3924 = vpop.f32.mrb[0].mxu0
        %3925 = vmatprep.mubr.f32.mxu0 0.0
        %v3926 = vand.u32 %v3796, 4294901760
        %v3927 = vsub.f32 %v3796, %v3926
        %v3928 = vand.u32 %v3927, 4294901760
        %v3929 = vsub.f32 %v3927, %v3928
        %v3930 = vand.u32 %v3929, 4294901760
        %3931 = vmatmul.mubr.f32.gmra.mrb[0].mxu0 %v3930
        %v3932 = vpop.f32.mrb[0].mxu0
        %v3933 = vadd.f32 0.0, %v3932
        %v3934 = vpop.f32.mrb[0].mxu0
        %3935 = vmatprep.mubr.f32.mxu0 0.0
        %v3936 = vand.u32 %v3799, 4294901760
        %v3937 = vsub.f32 %v3799, %v3936
        %v3938 = vand.u32 %v3937, 4294901760
        %v3939 = vsub.f32 %v3937, %v3938
        %v3940 = vand.u32 %v3939, 4294901760
        %3941 = vmatmul.mubr.f32.gmra.mrb[0].mxu0 %v3940
        %v3942 = vpop.f32.mrb[0].mxu0
        %v3943 = vadd.f32 0.0, %v3942
        %v3944 = vpop.f32.mrb[0].mxu0
        %3945 = vmatprep.mubr.f32.mxu0 0.0
        %v3946 = vand.u32 %v3802, 4294901760
        %v3947 = vsub.f32 %v3802, %v3946
        %v3948 = vand.u32 %v3947, 4294901760
        %v3949 = vsub.f32 %v3947, %v3948
        %v3950 = vand.u32 %v3949, 4294901760
        %3951 = vmatmul.mubr.f32.gmra.mrb[0].mxu0 %v3950
        %v3952 = vpop.f32.mrb[0].mxu0
        %v3953 = vadd.f32 0.0, %v3952
        %v3954 = vpop.f32.mrb[0].mxu0
        %3955 = vmatprep.mubr.f32.mxu0 0.0
        %v3956 = vand.u32 %v3805, 4294901760
        %v3957 = vsub.f32 %v3805, %v3956
        %v3958 = vand.u32 %v3957, 4294901760
        %v3959 = vsub.f32 %v3957, %v3958
        %v3960 = vand.u32 %v3959, 4294901760
        %3961 = vmatmul.mubr.f32.gmra.mrb[0].mxu0 %v3960
        %v3962 = vpop.f32.mrb[0].mxu0
        %v3963 = vadd.f32 0.0, %v3962
        %v3964 = vpop.f32.mrb[0].mxu0
        %3965 = vdwg.mxu0
        %3966 = vmatprep.subr.mxu0 0.0
        %v3967 = vand.u32 %v3776, 4294901760
        %v3968 = vsub.f32 %v3776, %v3967
        %v3969 = vand.u32 %v3968, 4294901760
        %v3970 = vsub.f32 %v3968, %v3969
        %v3971 = vand.u32 %v3970, 4294901760
        %3972 = vmatpush1.msra.mxu0 %v3971
        %3973 = vmatprep.subr.mxu0 0.0
        %v3974 = vand.u32 %v3777, 4294901760
        %v3975 = vsub.f32 %v3777, %v3974
        %v3976 = vand.u32 %v3975, 4294901760
        %v3977 = vsub.f32 %v3975, %v3976
        %v3978 = vand.u32 %v3977, 4294901760
        %3979 = vmatpush1.msra.mxu0 %v3978
        %3980 = vmatprep.subr.mxu0 0.0
        %v3981 = vand.u32 %v3778, 4294901760
        %v3982 = vsub.f32 %v3778, %v3981
        %v3983 = vand.u32 %v3982, 4294901760
        %v3984 = vsub.f32 %v3982, %v3983
        %v3985 = vand.u32 %v3984, 4294901760
        %3986 = vmatpush1.msra.mxu0 %v3985
        %3987 = vmatprep.subr.mxu0 0.0
        %v3988 = vand.u32 %v3779, 4294901760
        %v3989 = vsub.f32 %v3779, %v3988
        %v3990 = vand.u32 %v3989, 4294901760
        %v3991 = vsub.f32 %v3989, %v3990
        %v3992 = vand.u32 %v3991, 4294901760
        %3993 = vmatpush1.msra.mxu0 %v3992
        %3994 = vmatprep.subr.mxu0 0.0
        %3995 = vmatpush1.msra.mxu0 0.0
        %3996 = vmatprep.subr.mxu0 0.0
        %3997 = vmatpush1.msra.mxu0 0.0
        %3998 = vmatprep.subr.mxu0 0.0
        %3999 = vmatpush1.msra.mxu0 0.0
        %4000 = vmatprep.subr.mxu0 0.0
        %4001 = vmatpush1.msra.mxu0 0.0
        %4002 = vmatprep.subr.mxu0 0.0
        %4003 = vmatpush1.msra.mxu0 0.0
        %4004 = vmatprep.subr.mxu0 0.0
        %4005 = vmatpush1.msra.mxu0 0.0
        %4006 = vmatprep.subr.mxu0 0.0
        %4007 = vmatpush1.msra.mxu0 0.0
        %4008 = vmatprep.subr.mxu0 0.0
        %4009 = vmatpush1.msra.mxu0 0.0
        %4010 = vmatprep.subr.mxu0 0.0
        %4011 = vmatpush1.msra.mxu0 0.0
        %4012 = vmatprep.subr.mxu0 0.0
        %4013 = vmatpush1.msra.mxu0 0.0
        %4014 = vmatprep.subr.mxu0 0.0
        %4015 = vmatpush1.msra.mxu0 0.0
        %4016 = vmatprep.subr.mxu0 0.0
        %4017 = vmatpush1.msra.mxu0 0.0
        %4018 = vmatprep.subr.mxu0 0.0
        %4019 = vmatpush1.msra.mxu0 0.0
        %4020 = vmatprep.subr.mxu0 0.0
        %4021 = vmatpush1.msra.mxu0 0.0
        %4022 = vmatprep.subr.mxu0 0.0
        %4023 = vmatpush1.msra.mxu0 0.0
        %4024 = vmatprep.subr.mxu0 0.0
        %4025 = vmatpush1.msra.mxu0 0.0
        %4026 = vmatprep.subr.mxu0 0.0
        %4027 = vmatpush1.msra.mxu0 0.0
        %4028 = vmatprep.subr.mxu0 0.0
        %4029 = vmatpush1.msra.mxu0 0.0
        %4030 = vmatprep.subr.mxu0 0.0
        %4031 = vmatpush1.msra.mxu0 0.0
        %4032 = vmatprep.subr.mxu0 0.0
        %4033 = vmatpush1.msra.mxu0 0.0
        %4034 = vmatprep.subr.mxu0 0.0
        %4035 = vmatpush1.msra.mxu0 0.0
        %4036 = vmatprep.subr.mxu0 0.0
        %4037 = vmatpush1.msra.mxu0 0.0
        %4038 = vmatprep.subr.mxu0 0.0
        %4039 = vmatpush1.msra.mxu0 0.0
        %4040 = vmatprep.subr.mxu0 0.0
        %4041 = vmatpush1.msra.mxu0 0.0
        %4042 = vmatprep.subr.mxu0 0.0
        %4043 = vmatpush1.msra.mxu0 0.0
        %4044 = vmatprep.subr.mxu0 0.0
        %4045 = vmatpush1.msra.mxu0 0.0
        %4046 = vmatprep.subr.mxu0 0.0
        %4047 = vmatpush1.msra.mxu0 0.0
        %4048 = vmatprep.subr.mxu0 0.0
        %4049 = vmatpush1.msra.mxu0 0.0
        %4050 = vmatprep.mubr.f32.mxu0 0.0
        %v4051 = vand.u32 %v3781, 4294901760
        %4052 = vmatmul.mubr.f32.gmra.mrb[0].mxu0 %v4051
        %v4053 = vpop.f32.mrb[0].mxu0
        %v4054 = vadd.f32 %v3883, %v4053
        %v4055 = vpop.f32.mrb[0].mxu0
        %4056 = vmatprep.mubr.f32.mxu0 0.0
        %v4057 = vand.u32 %v3784, 4294901760
        %4058 = vmatmul.mubr.f32.gmra.mrb[0].mxu0 %v4057
        %v4059 = vpop.f32.mrb[0].mxu0
        %v4060 = vadd.f32 %v3893, %v4059
        %v4061 = vpop.f32.mrb[0].mxu0
        %4062 = vmatprep.mubr.f32.mxu0 0.0
        %v4063 = vand.u32 %v3787, 4294901760
        %4064 = vmatmul.mubr.f32.gmra.mrb[0].mxu0 %v4063
        %v4065 = vpop.f32.mrb[0].mxu0
        %v4066 = vadd.f32 %v3903, %v4065
        %v4067 = vpop.f32.mrb[0].mxu0
        %4068 = vmatprep.mubr.f32.mxu0 0.0
        %v4069 = vand.u32 %v3790, 4294901760
        %4070 = vmatmul.mubr.f32.gmra.mrb[0].mxu0 %v4069
        %v4071 = vpop.f32.mrb[0].mxu0
        %v4072 = vadd.f32 %v3913, %v4071
        %v4073 = vpop.f32.mrb[0].mxu0
        %4074 = vmatprep.mubr.f32.mxu0 0.0
        %v4075 = vand.u32 %v3793, 4294901760
        %4076 = vmatmul.mubr.f32.gmra.mrb[0].mxu0 %v4075
        %v4077 = vpop.f32.mrb[0].mxu0
        %v4078 = vadd.f32 %v3923, %v4077
        %v4079 = vpop.f32.mrb[0].mxu0
        %4080 = vmatprep.mubr.f32.mxu0 0.0
        %v4081 = vand.u32 %v3796, 4294901760
        %4082 = vmatmul.mubr.f32.gmra.mrb[0].mxu0 %v4081
        %v4083 = vpop.f32.mrb[0].mxu0
        %v4084 = vadd.f32 %v3933, %v4083
        %v4085 = vpop.f32.mrb[0].mxu0
        %4086 = vmatprep.mubr.f32.mxu0 0.0
        %v4087 = vand.u32 %v3799, 4294901760
        %4088 = vmatmul.mubr.f32.gmra.mrb[0].mxu0 %v4087
        %v4089 = vpop.f32.mrb[0].mxu0
        %v4090 = vadd.f32 %v3943, %v4089
        %v4091 = vpop.f32.mrb[0].mxu0
        %4092 = vmatprep.mubr.f32.mxu0 0.0
        %v4093 = vand.u32 %v3802, 4294901760
        %4094 = vmatmul.mubr.f32.gmra.mrb[0].mxu0 %v4093
        %v4095 = vpop.f32.mrb[0].mxu0
        %v4096 = vadd.f32 %v3953, %v4095
        %v4097 = vpop.f32.mrb[0].mxu0
        %4098 = vmatprep.mubr.f32.mxu0 0.0
        %v4099 = vand.u32 %v3805, 4294901760
        %4100 = vmatmul.mubr.f32.gmra.mrb[0].mxu0 %v4099
        %v4101 = vpop.f32.mrb[0].mxu0
        %v4102 = vadd.f32 %v3963, %v4101
        %v4103 = vpop.f32.mrb[0].mxu0
        %4104 = vdwg.mxu0
        %4105 = vmatprep.subr.mxu0 0.0
        %v4106 = vand.u32 %v3776, 4294901760
        %v4107 = vsub.f32 %v3776, %v4106
        %4108 = vmatpush1.msra.mxu0 %v4107
        %4109 = vmatprep.subr.mxu0 0.0
        %v4110 = vand.u32 %v3777, 4294901760
        %v4111 = vsub.f32 %v3777, %v4110
        %4112 = vmatpush1.msra.mxu0 %v4111
        %4113 = vmatprep.subr.mxu0 0.0
        %v4114 = vand.u32 %v3778, 4294901760
        %v4115 = vsub.f32 %v3778, %v4114
        %4116 = vmatpush1.msra.mxu0 %v4115
        %4117 = vmatprep.subr.mxu0 0.0
        %v4118 = vand.u32 %v3779, 4294901760
        %v4119 = vsub.f32 %v3779, %v4118
        %4120 = vmatpush1.msra.mxu0 %v4119
        %4121 = vmatprep.subr.mxu0 0.0
        %4122 = vmatpush1.msra.mxu0 0.0
        %4123 = vmatprep.subr.mxu0 0.0
        %4124 = vmatpush1.msra.mxu0 0.0
        %4125 = vmatprep.subr.mxu0 0.0
        %4126 = vmatpush1.msra.mxu0 0.0
        %4127 = vmatprep.subr.mxu0 0.0
        %4128 = vmatpush1.msra.mxu0 0.0
        %4129 = vmatprep.subr.mxu0 0.0
        %4130 = vmatpush1.msra.mxu0 0.0
        %4131 = vmatprep.subr.mxu0 0.0
        %4132 = vmatpush1.msra.mxu0 0.0
        %4133 = vmatprep.subr.mxu0 0.0
        %4134 = vmatpush1.msra.mxu0 0.0
        %4135 = vmatprep.subr.mxu0 0.0
        %4136 = vmatpush1.msra.mxu0 0.0
        %4137 = vmatprep.subr.mxu0 0.0
        %4138 = vmatpush1.msra.mxu0 0.0
        %4139 = vmatprep.subr.mxu0 0.0
        %4140 = vmatpush1.msra.mxu0 0.0
        %4141 = vmatprep.subr.mxu0 0.0
        %4142 = vmatpush1.msra.mxu0 0.0
        %4143 = vmatprep.subr.mxu0 0.0
        %4144 = vmatpush1.msra.mxu0 0.0
        %4145 = vmatprep.subr.mxu0 0.0
        %4146 = vmatpush1.msra.mxu0 0.0
        %4147 = vmatprep.subr.mxu0 0.0
        %4148 = vmatpush1.msra.mxu0 0.0
        %4149 = vmatprep.subr.mxu0 0.0
        %4150 = vmatpush1.msra.mxu0 0.0
        %4151 = vmatprep.subr.mxu0 0.0
        %4152 = vmatpush1.msra.mxu0 0.0
        %4153 = vmatprep.subr.mxu0 0.0
        %4154 = vmatpush1.msra.mxu0 0.0
        %4155 = vmatprep.subr.mxu0 0.0
        %4156 = vmatpush1.msra.mxu0 0.0
        %4157 = vmatprep.subr.mxu0 0.0
        %4158 = vmatpush1.msra.mxu0 0.0
        %4159 = vmatprep.subr.mxu0 0.0
        %4160 = vmatpush1.msra.mxu0 0.0
        %4161 = vmatprep.subr.mxu0 0.0
        %4162 = vmatpush1.msra.mxu0 0.0
        %4163 = vmatprep.subr.mxu0 0.0
        %4164 = vmatpush1.msra.mxu0 0.0
        %4165 = vmatprep.subr.mxu0 0.0
        %4166 = vmatpush1.msra.mxu0 0.0
        %4167 = vmatprep.subr.mxu0 0.0
        %4168 = vmatpush1.msra.mxu0 0.0
        %4169 = vmatprep.subr.mxu0 0.0
        %4170 = vmatpush1.msra.mxu0 0.0
        %4171 = vmatprep.subr.mxu0 0.0
        %4172 = vmatpush1.msra.mxu0 0.0
        %4173 = vmatprep.subr.mxu0 0.0
        %4174 = vmatpush1.msra.mxu0 0.0
        %4175 = vmatprep.subr.mxu0 0.0
        %4176 = vmatpush1.msra.mxu0 0.0
        %4177 = vmatprep.mubr.f32.mxu0 0.0
        %v4178 = vand.u32 %v3781, 4294901760
        %v4179 = vsub.f32 %v3781, %v4178
        %4180 = vmatmul.mubr.f32.gmra.mrb[0].mxu0 %v4179
        %v4181 = vpop.f32.mrb[0].mxu0
        %v4182 = vadd.f32 %v4054, %v4181
        %v4183 = vpop.f32.mrb[0].mxu0
        %4184 = vmatprep.mubr.f32.mxu0 0.0
        %v4185 = vand.u32 %v3784, 4294901760
        %v4186 = vsub.f32 %v3784, %v4185
        %4187 = vmatmul.mubr.f32.gmra.mrb[0].mxu0 %v4186
        %v4188 = vpop.f32.mrb[0].mxu0
        %v4189 = vadd.f32 %v4060, %v4188
        %v4190 = vpop.f32.mrb[0].mxu0
        %4191 = vmatprep.mubr.f32.mxu0 0.0
        %v4192 = vand.u32 %v3787, 4294901760
        %v4193 = vsub.f32 %v3787, %v4192
        %4194 = vmatmul.mubr.f32.gmra.mrb[0].mxu0 %v4193
        %v4195 = vpop.f32.mrb[0].mxu0
        %v4196 = vadd.f32 %v4066, %v4195
        %v4197 = vpop.f32.mrb[0].mxu0
        %4198 = vmatprep.mubr.f32.mxu0 0.0
        %v4199 = vand.u32 %v3790, 4294901760
        %v4200 = vsub.f32 %v3790, %v4199
        %4201 = vmatmul.mubr.f32.gmra.mrb[0].mxu0 %v4200
        %v4202 = vpop.f32.mrb[0].mxu0
        %v4203 = vadd.f32 %v4072, %v4202
        %v4204 = vpop.f32.mrb[0].mxu0
        %4205 = vmatprep.mubr.f32.mxu0 0.0
        %v4206 = vand.u32 %v3793, 4294901760
        %v4207 = vsub.f32 %v3793, %v4206
        %4208 = vmatmul.mubr.f32.gmra.mrb[0].mxu0 %v4207
        %v4209 = vpop.f32.mrb[0].mxu0
        %v4210 = vadd.f32 %v4078, %v4209
        %v4211 = vpop.f32.mrb[0].mxu0
        %4212 = vmatprep.mubr.f32.mxu0 0.0
        %v4213 = vand.u32 %v3796, 4294901760
        %v4214 = vsub.f32 %v3796, %v4213
        %4215 = vmatmul.mubr.f32.gmra.mrb[0].mxu0 %v4214
        %v4216 = vpop.f32.mrb[0].mxu0
        %v4217 = vadd.f32 %v4084, %v4216
        %v4218 = vpop.f32.mrb[0].mxu0
        %4219 = vmatprep.mubr.f32.mxu0 0.0
        %v4220 = vand.u32 %v3799, 4294901760
        %v4221 = vsub.f32 %v3799, %v4220
        %4222 = vmatmul.mubr.f32.gmra.mrb[0].mxu0 %v4221
        %v4223 = vpop.f32.mrb[0].mxu0
        %v4224 = vadd.f32 %v4090, %v4223
        %v4225 = vpop.f32.mrb[0].mxu0
        %4226 = vmatprep.mubr.f32.mxu0 0.0
        %v4227 = vand.u32 %v3802, 4294901760
        %v4228 = vsub.f32 %v3802, %v4227
        %4229 = vmatmul.mubr.f32.gmra.mrb[0].mxu0 %v4228
        %v4230 = vpop.f32.mrb[0].mxu0
        %v4231 = vadd.f32 %v4096, %v4230
        %v4232 = vpop.f32.mrb[0].mxu0
        %4233 = vmatprep.mubr.f32.mxu0 0.0
        %v4234 = vand.u32 %v3805, 4294901760
        %v4235 = vsub.f32 %v3805, %v4234
        %4236 = vmatmul.mubr.f32.gmra.mrb[0].mxu0 %v4235
        %v4237 = vpop.f32.mrb[0].mxu0
        %v4238 = vadd.f32 %v4102, %v4237
        %v4239 = vpop.f32.mrb[0].mxu0
        %4240 = vdwg.mxu0
        %4241 = vmatprep.subr.mxu0 0.0
        %v4242 = vand.u32 %v3776, 4294901760
        %4243 = vmatpush1.msra.mxu0 %v4242
        %4244 = vmatprep.subr.mxu0 0.0
        %v4245 = vand.u32 %v3777, 4294901760
        %4246 = vmatpush1.msra.mxu0 %v4245
        %4247 = vmatprep.subr.mxu0 0.0
        %v4248 = vand.u32 %v3778, 4294901760
        %4249 = vmatpush1.msra.mxu0 %v4248
        %4250 = vmatprep.subr.mxu0 0.0
        %v4251 = vand.u32 %v3779, 4294901760
        %4252 = vmatpush1.msra.mxu0 %v4251
        %4253 = vmatprep.subr.mxu0 0.0
        %4254 = vmatpush1.msra.mxu0 0.0
        %4255 = vmatprep.subr.mxu0 0.0
        %4256 = vmatpush1.msra.mxu0 0.0
        %4257 = vmatprep.subr.mxu0 0.0
        %4258 = vmatpush1.msra.mxu0 0.0
        %4259 = vmatprep.subr.mxu0 0.0
        %4260 = vmatpush1.msra.mxu0 0.0
        %4261 = vmatprep.subr.mxu0 0.0
        %4262 = vmatpush1.msra.mxu0 0.0
        %4263 = vmatprep.subr.mxu0 0.0
        %4264 = vmatpush1.msra.mxu0 0.0
        %4265 = vmatprep.subr.mxu0 0.0
        %4266 = vmatpush1.msra.mxu0 0.0
        %4267 = vmatprep.subr.mxu0 0.0
        %4268 = vmatpush1.msra.mxu0 0.0
        %4269 = vmatprep.subr.mxu0 0.0
        %4270 = vmatpush1.msra.mxu0 0.0
        %4271 = vmatprep.subr.mxu0 0.0
        %4272 = vmatpush1.msra.mxu0 0.0
        %4273 = vmatprep.subr.mxu0 0.0
        %4274 = vmatpush1.msra.mxu0 0.0
        %4275 = vmatprep.subr.mxu0 0.0
        %4276 = vmatpush1.msra.mxu0 0.0
        %4277 = vmatprep.subr.mxu0 0.0
        %4278 = vmatpush1.msra.mxu0 0.0
        %4279 = vmatprep.subr.mxu0 0.0
        %4280 = vmatpush1.msra.mxu0 0.0
        %4281 = vmatprep.subr.mxu0 0.0
        %4282 = vmatpush1.msra.mxu0 0.0
        %4283 = vmatprep.subr.mxu0 0.0
        %4284 = vmatpush1.msra.mxu0 0.0
        %4285 = vmatprep.subr.mxu0 0.0
        %4286 = vmatpush1.msra.mxu0 0.0
        %4287 = vmatprep.subr.mxu0 0.0
        %4288 = vmatpush1.msra.mxu0 0.0
        %4289 = vmatprep.subr.mxu0 0.0
        %4290 = vmatpush1.msra.mxu0 0.0
        %4291 = vmatprep.subr.mxu0 0.0
        %4292 = vmatpush1.msra.mxu0 0.0
        %4293 = vmatprep.subr.mxu0 0.0
        %4294 = vmatpush1.msra.mxu0 0.0
        %4295 = vmatprep.subr.mxu0 0.0
        %4296 = vmatpush1.msra.mxu0 0.0
        %4297 = vmatprep.subr.mxu0 0.0
        %4298 = vmatpush1.msra.mxu0 0.0
        %4299 = vmatprep.subr.mxu0 0.0
        %4300 = vmatpush1.msra.mxu0 0.0
        %4301 = vmatprep.subr.mxu0 0.0
        %4302 = vmatpush1.msra.mxu0 0.0
        %4303 = vmatprep.subr.mxu0 0.0
        %4304 = vmatpush1.msra.mxu0 0.0
        %4305 = vmatprep.subr.mxu0 0.0
        %4306 = vmatpush1.msra.mxu0 0.0
        %4307 = vmatprep.subr.mxu0 0.0
        %4308 = vmatpush1.msra.mxu0 0.0
        %4309 = vmatprep.mubr.f32.mxu0 0.0
        %v4310 = vand.u32 %v3781, 4294901760
        %v4311 = vsub.f32 %v3781, %v4310
        %v4312 = vand.u32 %v4311, 4294901760
        %4313 = vmatmul.mubr.f32.gmra.mrb[0].mxu0 %v4312
        %v4314 = vpop.f32.mrb[0].mxu0
        %v4315 = vadd.f32 %v4182, %v4314
        %v4316 = vpop.f32.mrb[0].mxu0
        %4317 = vmatprep.mubr.f32.mxu0 0.0
        %v4318 = vand.u32 %v3784, 4294901760
        %v4319 = vsub.f32 %v3784, %v4318
        %v4320 = vand.u32 %v4319, 4294901760
        %4321 = vmatmul.mubr.f32.gmra.mrb[0].mxu0 %v4320
        %v4322 = vpop.f32.mrb[0].mxu0
        %v4323 = vadd.f32 %v4189, %v4322
        %v4324 = vpop.f32.mrb[0].mxu0
        %4325 = vmatprep.mubr.f32.mxu0 0.0
        %v4326 = vand.u32 %v3787, 4294901760
        %v4327 = vsub.f32 %v3787, %v4326
        %v4328 = vand.u32 %v4327, 4294901760
        %4329 = vmatmul.mubr.f32.gmra.mrb[0].mxu0 %v4328
        %v4330 = vpop.f32.mrb[0].mxu0
        %v4331 = vadd.f32 %v4196, %v4330
        %v4332 = vpop.f32.mrb[0].mxu0
        %4333 = vmatprep.mubr.f32.mxu0 0.0
        %v4334 = vand.u32 %v3790, 4294901760
        %v4335 = vsub.f32 %v3790, %v4334
        %v4336 = vand.u32 %v4335, 4294901760
        %4337 = vmatmul.mubr.f32.gmra.mrb[0].mxu0 %v4336
        %v4338 = vpop.f32.mrb[0].mxu0
        %v4339 = vadd.f32 %v4203, %v4338
        %v4340 = vpop.f32.mrb[0].mxu0
        %4341 = vmatprep.mubr.f32.mxu0 0.0
        %v4342 = vand.u32 %v3793, 4294901760
        %v4343 = vsub.f32 %v3793, %v4342
        %v4344 = vand.u32 %v4343, 4294901760
        %4345 = vmatmul.mubr.f32.gmra.mrb[0].mxu0 %v4344
        %v4346 = vpop.f32.mrb[0].mxu0
        %v4347 = vadd.f32 %v4210, %v4346
        %v4348 = vpop.f32.mrb[0].mxu0
        %4349 = vmatprep.mubr.f32.mxu0 0.0
        %v4350 = vand.u32 %v3796, 4294901760
        %v4351 = vsub.f32 %v3796, %v4350
        %v4352 = vand.u32 %v4351, 4294901760
        %4353 = vmatmul.mubr.f32.gmra.mrb[0].mxu0 %v4352
        %v4354 = vpop.f32.mrb[0].mxu0
        %v4355 = vadd.f32 %v4217, %v4354
        %v4356 = vpop.f32.mrb[0].mxu0
        %4357 = vmatprep.mubr.f32.mxu0 0.0
        %v4358 = vand.u32 %v3799, 4294901760
        %v4359 = vsub.f32 %v3799, %v4358
        %v4360 = vand.u32 %v4359, 4294901760
        %4361 = vmatmul.mubr.f32.gmra.mrb[0].mxu0 %v4360
        %v4362 = vpop.f32.mrb[0].mxu0
        %v4363 = vadd.f32 %v4224, %v4362
        %v4364 = vpop.f32.mrb[0].mxu0
        %4365 = vmatprep.mubr.f32.mxu0 0.0
        %v4366 = vand.u32 %v3802, 4294901760
        %v4367 = vsub.f32 %v3802, %v4366
        %v4368 = vand.u32 %v4367, 4294901760
        %4369 = vmatmul.mubr.f32.gmra.mrb[0].mxu0 %v4368
        %v4370 = vpop.f32.mrb[0].mxu0
        %v4371 = vadd.f32 %v4231, %v4370
        %v4372 = vpop.f32.mrb[0].mxu0
        %4373 = vmatprep.mubr.f32.mxu0 0.0
        %v4374 = vand.u32 %v3805, 4294901760
        %v4375 = vsub.f32 %v3805, %v4374
        %v4376 = vand.u32 %v4375, 4294901760
        %4377 = vmatmul.mubr.f32.gmra.mrb[0].mxu0 %v4376
        %v4378 = vpop.f32.mrb[0].mxu0
        %v4379 = vadd.f32 %v4238, %v4378
        %v4380 = vpop.f32.mrb[0].mxu0
        %4381 = vdwg.mxu0
        %4382 = vmatprep.subr.mxu0 0.0
        %v4383 = vand.u32 %v3776, 4294901760
        %v4384 = vsub.f32 %v3776, %v4383
        %v4385 = vand.u32 %v4384, 4294901760
        %4386 = vmatpush1.msra.mxu0 %v4385
        %4387 = vmatprep.subr.mxu0 0.0
        %v4388 = vand.u32 %v3777, 4294901760
        %v4389 = vsub.f32 %v3777, %v4388
        %v4390 = vand.u32 %v4389, 4294901760
        %4391 = vmatpush1.msra.mxu0 %v4390
        %4392 = vmatprep.subr.mxu0 0.0
        %v4393 = vand.u32 %v3778, 4294901760
        %v4394 = vsub.f32 %v3778, %v4393
        %v4395 = vand.u32 %v4394, 4294901760
        %4396 = vmatpush1.msra.mxu0 %v4395
        %4397 = vmatprep.subr.mxu0 0.0
        %v4398 = vand.u32 %v3779, 4294901760
        %v4399 = vsub.f32 %v3779, %v4398
        %v4400 = vand.u32 %v4399, 4294901760
        %4401 = vmatpush1.msra.mxu0 %v4400
        %4402 = vmatprep.subr.mxu0 0.0
        %4403 = vmatpush1.msra.mxu0 0.0
        %4404 = vmatprep.subr.mxu0 0.0
        %4405 = vmatpush1.msra.mxu0 0.0
        %4406 = vmatprep.subr.mxu0 0.0
        %4407 = vmatpush1.msra.mxu0 0.0
        %4408 = vmatprep.subr.mxu0 0.0
        %4409 = vmatpush1.msra.mxu0 0.0
        %4410 = vmatprep.subr.mxu0 0.0
        %4411 = vmatpush1.msra.mxu0 0.0
        %4412 = vmatprep.subr.mxu0 0.0
        %4413 = vmatpush1.msra.mxu0 0.0
        %4414 = vmatprep.subr.mxu0 0.0
        %4415 = vmatpush1.msra.mxu0 0.0
        %4416 = vmatprep.subr.mxu0 0.0
        %4417 = vmatpush1.msra.mxu0 0.0
        %4418 = vmatprep.subr.mxu0 0.0
        %4419 = vmatpush1.msra.mxu0 0.0
        %4420 = vmatprep.subr.mxu0 0.0
        %4421 = vmatpush1.msra.mxu0 0.0
        %4422 = vmatprep.subr.mxu0 0.0
        %4423 = vmatpush1.msra.mxu0 0.0
        %4424 = vmatprep.subr.mxu0 0.0
        %4425 = vmatpush1.msra.mxu0 0.0
        %4426 = vmatprep.subr.mxu0 0.0
        %4427 = vmatpush1.msra.mxu0 0.0
        %4428 = vmatprep.subr.mxu0 0.0
        %4429 = vmatpush1.msra.mxu0 0.0
        %4430 = vmatprep.subr.mxu0 0.0
        %4431 = vmatpush1.msra.mxu0 0.0
        %4432 = vmatprep.subr.mxu0 0.0
        %4433 = vmatpush1.msra.mxu0 0.0
        %4434 = vmatprep.subr.mxu0 0.0
        %4435 = vmatpush1.msra.mxu0 0.0
        %4436 = vmatprep.subr.mxu0 0.0
        %4437 = vmatpush1.msra.mxu0 0.0
        %4438 = vmatprep.subr.mxu0 0.0
        %4439 = vmatpush1.msra.mxu0 0.0
        %4440 = vmatprep.subr.mxu0 0.0
        %4441 = vmatpush1.msra.mxu0 0.0
        %4442 = vmatprep.subr.mxu0 0.0
        %4443 = vmatpush1.msra.mxu0 0.0
        %4444 = vmatprep.subr.mxu0 0.0
        %4445 = vmatpush1.msra.mxu0 0.0
        %4446 = vmatprep.subr.mxu0 0.0
        %4447 = vmatpush1.msra.mxu0 0.0
        %4448 = vmatprep.subr.mxu0 0.0
        %4449 = vmatpush1.msra.mxu0 0.0
        %4450 = vmatprep.subr.mxu0 0.0
        %4451 = vmatpush1.msra.mxu0 0.0
        %4452 = vmatprep.subr.mxu0 0.0
        %4453 = vmatpush1.msra.mxu0 0.0
        %4454 = vmatprep.subr.mxu0 0.0
        %4455 = vmatpush1.msra.mxu0 0.0
        %4456 = vmatprep.subr.mxu0 0.0
        %4457 = vmatpush1.msra.mxu0 0.0
        %4458 = vmatprep.mubr.f32.mxu0 0.0
        %v4459 = vand.u32 %v3781, 4294901760
        %4460 = vmatmul.mubr.f32.gmra.mrb[0].mxu0 %v4459
        %v4461 = vpop.f32.mrb[0].mxu0
        %v4462 = vadd.f32 %v4315, %v4461
        %v4463 = vpop.f32.mrb[0].mxu0
        %4464 = vmatprep.mubr.f32.mxu0 0.0
        %v4465 = vand.u32 %v3784, 4294901760
        %4466 = vmatmul.mubr.f32.gmra.mrb[0].mxu0 %v4465
        %v4467 = vpop.f32.mrb[0].mxu0
        %v4468 = vadd.f32 %v4323, %v4467
        %v4469 = vpop.f32.mrb[0].mxu0
        %4470 = vmatprep.mubr.f32.mxu0 0.0
        %v4471 = vand.u32 %v3787, 4294901760
        %4472 = vmatmul.mubr.f32.gmra.mrb[0].mxu0 %v4471
        %v4473 = vpop.f32.mrb[0].mxu0
        %v4474 = vadd.f32 %v4331, %v4473
        %v4475 = vpop.f32.mrb[0].mxu0
        %4476 = vmatprep.mubr.f32.mxu0 0.0
        %v4477 = vand.u32 %v3790, 4294901760
        %4478 = vmatmul.mubr.f32.gmra.mrb[0].mxu0 %v4477
        %v4479 = vpop.f32.mrb[0].mxu0
        %v4480 = vadd.f32 %v4339, %v4479
        %v4481 = vpop.f32.mrb[0].mxu0
        %4482 = vmatprep.mubr.f32.mxu0 0.0
        %v4483 = vand.u32 %v3793, 4294901760
        %4484 = vmatmul.mubr.f32.gmra.mrb[0].mxu0 %v4483
        %v4485 = vpop.f32.mrb[0].mxu0
        %v4486 = vadd.f32 %v4347, %v4485
        %v4487 = vpop.f32.mrb[0].mxu0
        %4488 = vmatprep.mubr.f32.mxu0 0.0
        %v4489 = vand.u32 %v3796, 4294901760
        %4490 = vmatmul.mubr.f32.gmra.mrb[0].mxu0 %v4489
        %v4491 = vpop.f32.mrb[0].mxu0
        %v4492 = vadd.f32 %v4355, %v4491
        %v4493 = vpop.f32.mrb[0].mxu0
        %4494 = vmatprep.mubr.f32.mxu0 0.0
        %v4495 = vand.u32 %v3799, 4294901760
        %4496 = vmatmul.mubr.f32.gmra.mrb[0].mxu0 %v4495
        %v4497 = vpop.f32.mrb[0].mxu0
        %v4498 = vadd.f32 %v4363, %v4497
        %v4499 = vpop.f32.mrb[0].mxu0
        %4500 = vmatprep.mubr.f32.mxu0 0.0
        %v4501 = vand.u32 %v3802, 4294901760
        %4502 = vmatmul.mubr.f32.gmra.mrb[0].mxu0 %v4501
        %v4503 = vpop.f32.mrb[0].mxu0
        %v4504 = vadd.f32 %v4371, %v4503
        %v4505 = vpop.f32.mrb[0].mxu0
        %4506 = vmatprep.mubr.f32.mxu0 0.0
        %v4507 = vand.u32 %v3805, 4294901760
        %4508 = vmatmul.mubr.f32.gmra.mrb[0].mxu0 %v4507
        %v4509 = vpop.f32.mrb[0].mxu0
        %v4510 = vadd.f32 %v4379, %v4509
        %v4511 = vpop.f32.mrb[0].mxu0
        %4512 = vdwg.mxu0
        %4513 = vmatprep.subr.mxu0 0.0
        %v4514 = vand.u32 %v3776, 4294901760
        %4515 = vmatpush1.msra.mxu0 %v4514
        %4516 = vmatprep.subr.mxu0 0.0
        %v4517 = vand.u32 %v3777, 4294901760
        %4518 = vmatpush1.msra.mxu0 %v4517
        %4519 = vmatprep.subr.mxu0 0.0
        %v4520 = vand.u32 %v3778, 4294901760
        %4521 = vmatpush1.msra.mxu0 %v4520
        %4522 = vmatprep.subr.mxu0 0.0
        %v4523 = vand.u32 %v3779, 4294901760
        %4524 = vmatpush1.msra.mxu0 %v4523
        %4525 = vmatprep.subr.mxu0 0.0
        %4526 = vmatpush1.msra.mxu0 0.0
        %4527 = vmatprep.subr.mxu0 0.0
        %4528 = vmatpush1.msra.mxu0 0.0
        %4529 = vmatprep.subr.mxu0 0.0
        %4530 = vmatpush1.msra.mxu0 0.0
        %4531 = vmatprep.subr.mxu0 0.0
        %4532 = vmatpush1.msra.mxu0 0.0
        %4533 = vmatprep.subr.mxu0 0.0
        %4534 = vmatpush1.msra.mxu0 0.0
        %4535 = vmatprep.subr.mxu0 0.0
        %4536 = vmatpush1.msra.mxu0 0.0
        %4537 = vmatprep.subr.mxu0 0.0
        %4538 = vmatpush1.msra.mxu0 0.0
        %4539 = vmatprep.subr.mxu0 0.0
        %4540 = vmatpush1.msra.mxu0 0.0
        %4541 = vmatprep.subr.mxu0 0.0
        %4542 = vmatpush1.msra.mxu0 0.0
        %4543 = vmatprep.subr.mxu0 0.0
        %4544 = vmatpush1.msra.mxu0 0.0
        %4545 = vmatprep.subr.mxu0 0.0
        %4546 = vmatpush1.msra.mxu0 0.0
        %4547 = vmatprep.subr.mxu0 0.0
        %4548 = vmatpush1.msra.mxu0 0.0
        %4549 = vmatprep.subr.mxu0 0.0
        %4550 = vmatpush1.msra.mxu0 0.0
        %4551 = vmatprep.subr.mxu0 0.0
        %4552 = vmatpush1.msra.mxu0 0.0
        %4553 = vmatprep.subr.mxu0 0.0
        %4554 = vmatpush1.msra.mxu0 0.0
        %4555 = vmatprep.subr.mxu0 0.0
        %4556 = vmatpush1.msra.mxu0 0.0
        %4557 = vmatprep.subr.mxu0 0.0
        %4558 = vmatpush1.msra.mxu0 0.0
        %4559 = vmatprep.subr.mxu0 0.0
        %4560 = vmatpush1.msra.mxu0 0.0
        %4561 = vmatprep.subr.mxu0 0.0
        %4562 = vmatpush1.msra.mxu0 0.0
        %4563 = vmatprep.subr.mxu0 0.0
        %4564 = vmatpush1.msra.mxu0 0.0
        %4565 = vmatprep.subr.mxu0 0.0
        %4566 = vmatpush1.msra.mxu0 0.0
        %4567 = vmatprep.subr.mxu0 0.0
        %4568 = vmatpush1.msra.mxu0 0.0
        %4569 = vmatprep.subr.mxu0 0.0
        %4570 = vmatpush1.msra.mxu0 0.0
        %4571 = vmatprep.subr.mxu0 0.0
        %4572 = vmatpush1.msra.mxu0 0.0
        %4573 = vmatprep.subr.mxu0 0.0
        %4574 = vmatpush1.msra.mxu0 0.0
        %4575 = vmatprep.subr.mxu0 0.0
        %4576 = vmatpush1.msra.mxu0 0.0
        %4577 = vmatprep.subr.mxu0 0.0
        %4578 = vmatpush1.msra.mxu0 0.0
        %4579 = vmatprep.subr.mxu0 0.0
        %4580 = vmatpush1.msra.mxu0 0.0
        %4581 = vmatprep.mubr.f32.mxu0 0.0
        %v4582 = vand.u32 %v3781, 4294901760
        %4583 = vmatmul.mubr.f32.gmra.mrb[0].mxu0 %v4582
        %v4584 = vpop.f32.mrb[0].mxu0
        %v4585 = vadd.f32 %v4462, %v4584
        %v4586 = vpop.f32.mrb[0].mxu0
        %4587 = vmatprep.mubr.f32.mxu0 0.0
        %v4588 = vand.u32 %v3784, 4294901760
        %4589 = vmatmul.mubr.f32.gmra.mrb[0].mxu0 %v4588
        %v4590 = vpop.f32.mrb[0].mxu0
        %v4591 = vadd.f32 %v4468, %v4590
        %v4592 = vpop.f32.mrb[0].mxu0
        %4593 = vmatprep.mubr.f32.mxu0 0.0
        %v4594 = vand.u32 %v3787, 4294901760
        %4595 = vmatmul.mubr.f32.gmra.mrb[0].mxu0 %v4594
        %v4596 = vpop.f32.mrb[0].mxu0
        %v4597 = vadd.f32 %v4474, %v4596
        %v4598 = vpop.f32.mrb[0].mxu0
        %4599 = vmatprep.mubr.f32.mxu0 0.0
        %v4600 = vand.u32 %v3790, 4294901760
        %4601 = vmatmul.mubr.f32.gmra.mrb[0].mxu0 %v4600
        %v4602 = vpop.f32.mrb[0].mxu0
        %v4603 = vadd.f32 %v4480, %v4602
        %v4604 = vpop.f32.mrb[0].mxu0
        %4605 = vmatprep.mubr.f32.mxu0 0.0
        %v4606 = vand.u32 %v3793, 4294901760
        %4607 = vmatmul.mubr.f32.gmra.mrb[0].mxu0 %v4606
        %v4608 = vpop.f32.mrb[0].mxu0
        %v4609 = vadd.f32 %v4486, %v4608
        %v4610 = vpop.f32.mrb[0].mxu0
        %4611 = vmatprep.mubr.f32.mxu0 0.0
        %v4612 = vand.u32 %v3796, 4294901760
        %4613 = vmatmul.mubr.f32.gmra.mrb[0].mxu0 %v4612
        %v4614 = vpop.f32.mrb[0].mxu0
        %v4615 = vadd.f32 %v4492, %v4614
        %v4616 = vpop.f32.mrb[0].mxu0
        %4617 = vmatprep.mubr.f32.mxu0 0.0
        %v4618 = vand.u32 %v3799, 4294901760
        %4619 = vmatmul.mubr.f32.gmra.mrb[0].mxu0 %v4618
        %v4620 = vpop.f32.mrb[0].mxu0
        %v4621 = vadd.f32 %v4498, %v4620
        %v4622 = vpop.f32.mrb[0].mxu0
        %4623 = vmatprep.mubr.f32.mxu0 0.0
        %v4624 = vand.u32 %v3802, 4294901760
        %4625 = vmatmul.mubr.f32.gmra.mrb[0].mxu0 %v4624
        %v4626 = vpop.f32.mrb[0].mxu0
        %v4627 = vadd.f32 %v4504, %v4626
        %v4628 = vpop.f32.mrb[0].mxu0
        %4629 = vmatprep.mubr.f32.mxu0 0.0
        %v4630 = vand.u32 %v3805, 4294901760
        %4631 = vmatmul.mubr.f32.gmra.mrb[0].mxu0 %v4630
        %v4632 = vpop.f32.mrb[0].mxu0
        %v4633 = vadd.f32 %v4510, %v4632
        %v4634 = vpop.f32.mrb[0].mxu0
        %4635 = vdwg.mxu0
        %s4636 = scalar_lea.vmem %s7, 72
        %4637 = vst.msk [vmem:[%s4636] sm:$0xff] %vm3746, %v4585
        %4638 = vst.msk [vmem:[%s4636 + $0x8] sm:$0xff] %vm3746, %v4591
        %4639 = vst.msk [vmem:[%s4636 + $0x10] sm:$0xff] %vm3746, %v4597
        %4640 = vst.msk [vmem:[%s4636 + $0x18] sm:$0xff] %vm3746, %v4603
        %4641 = vst.msk [vmem:[%s4636 + $0x20] sm:$0xff] %vm3746, %v4609
        %4642 = vst.msk [vmem:[%s4636 + $0x28] sm:$0xff] %vm3746, %v4615
        %4643 = vst.msk [vmem:[%s4636 + $0x30] sm:$0xff] %vm3746, %v4621
        %4644 = vst.msk [vmem:[%s4636 + $0x38] sm:$0xff] %vm3746, %v4627
        %4645 = vst.msk [vmem:[%s4636 + $0x40] sm:$0x1f] %vm3755, %v4633
      $region68: #{gcn_forward.1} parent=47 // pred_fallthru
        _
      // Predicated region
      $region69: #{gcn_forward.1} parent=47 // pred_check
        %p4646 = pneg %p198
      $region70: #{gcn_forward.1} parent=47 // pred_check_branch
        %4648 = sbr.rel (%p4646) target = $region72
      $region71: #{gcn_forward.1} parent=47 // pred_region
        _
      $region72: #{gcn_forward.1} parent=47 // pred_fallthru
        _
      // Predicated region
      $region73: #{gcn_forward.1} parent=47 // pred_check
        %p4649 = pneg %p198
      $region74: #{gcn_forward.1} parent=47 // pred_check_branch
        %4651 = sbr.rel (%p4649) target = $region76
      $region75: #{gcn_forward.1} parent=47 // pred_region
        _
      $region76: #{gcn_forward.1} parent=47 // pred_fallthru
        _
    $region48: #{gcn_forward.1} parent=5 // pred_fallthru
      _
    %p4652 = scmp.le.s32.totalorder 2, %s13
    // Predicated region
    $region77: #{gcn_forward.1} parent=5 // pred_check
      %p4653 = pneg %p4652
    $region78: #{gcn_forward.1} parent=5 // pred_check_branch
      %4655 = sbr.rel (%p4653) target = $region80
    $region79: #{gcn_forward.1} parent=5 // pred_region
      %s4656 = ssub.s32 %s13, 2
    $region80: #{gcn_forward.1} parent=5 // pred_fallthru
      _
  $region6: #{gcn_forward.1} parent=0 // loop_footer
    %s17 = sadd.s32 1, %s13
  $region7: #{gcn_forward.1} parent=0 // loop_footer_branch
    %12 = sbr.rel target = $region3
  $region8: #{gcn_forward.1} parent=0 // loop_exit
    _

</llo_original>
